<compile_context>
chip_gen: v6e
topology: v6e:2x2x1
jax: 0.10.0
libtpu: 0.0.40
codegen_flags: <defaults>
</compile_context>

<pallas_src>
import functools

import jax
import jax.numpy as jnp
from jax import lax
from jax.experimental import pallas as pl
from jax.experimental.pallas import tpu as pltpu


_VMEM_LIMIT_BYTES = 48 * 1024 * 1024   # explicit scoped-VMEM limit (safe on v5e/v6e/v7x)
_VMEM_BUDGET_BYTES = 40 * 1024 * 1024  # target working set (headroom under the limit)


def _round_up(x, m):
    return (x + m - 1) // m * m


def _vmem_bytes(tq, sk, c):
    """Rough per-core VMEM working-set estimate for a (tq, sk, c) config."""
    f32, bf16 = 4, 2
    kv_scratch = 2 * sk * c * bf16                   # cached kp / vp projections
    q_in = 2 * tq * c * f32                          # double-buffered q tile
    kv_in = 2 * 2 * sk * c * f32                     # double-buffered k, v slabs
    weights = 2 * (4 * c * c * bf16 + 7 * c * f32)   # double-buffered params
    attn_out = 2 * tq * sk * f32                     # double-buffered attn tile
    out_out = 2 * tq * c * f32                       # double-buffered out tile
    live = 2 * tq * sk * f32 + 4 * tq * c * f32 + 2 * sk * c * f32  # in-flight values
    return kv_scratch + q_in + kv_in + weights + attn_out + out_out + live


def _layernorm(x, gamma, beta, eps=1e-5):
    mu = jnp.mean(x, axis=-1, keepdims=True)
    xc = x - mu
    var = jnp.mean(xc * xc, axis=-1, keepdims=True)
    return xc * lax.rsqrt(var + eps) * gamma + beta


def _any_attention_kernel(scale,
                          q_ref, k_ref, v_ref,
                          gq_ref, bq_ref, gk_ref, bk_ref, gv_ref, bv_ref,
                          wq_ref, wk_ref, wv_ref, wp_ref, bp_ref,
                          attn_ref, out_ref,
                          kp_sc, vp_sc):
    qt = pl.program_id(1)

    # --- norm_k / norm_v / to_k / to_v: once per batch element ---------------
    # Cached in bf16 VMEM scratch and reused by every query tile of this batch
    # element (the q-tile grid axis is "arbitrary", so tile 0 runs first).
    @pl.when(qt == 0)
    def _():
        kn = _layernorm(k_ref[0], gk_ref[...], bk_ref[...])
        vn = _layernorm(v_ref[0], gv_ref[...], bv_ref[...])
        kp = jnp.dot(kn.astype(jnp.bfloat16), wk_ref[...],
                     preferred_element_type=jnp.float32)
        vp = jnp.dot(vn.astype(jnp.bfloat16), wv_ref[...],
                     preferred_element_type=jnp.float32)
        kp_sc[...] = kp.astype(jnp.bfloat16)
        vp_sc[...] = vp.astype(jnp.bfloat16)

    # --- norm_q / to_q for this query tile ------------------------------------
    qn = _layernorm(q_ref[0], gq_ref[...], bq_ref[...])
    qp = jnp.dot(qn.astype(jnp.bfloat16), wq_ref[...],
                 preferred_element_type=jnp.float32)               # (TQ, C)

    # --- attn = einsum('qc,kc->qk'); ReLU6; scale ------------------------------
    # dot_general contracting the last dims: no materialized kp.T transpose.
    s = lax.dot_general(qp.astype(jnp.bfloat16), kp_sc[...],
                        dimension_numbers=(((1,), (1,)), ((), ())),
                        preferred_element_type=jnp.float32)        # (TQ, Sk)
    s = jnp.clip(s, 0.0, 6.0) * scale
    attn_ref[0] = s.astype(attn_ref.dtype)

    # --- softmax over the key dim ----------------------------------------------
    # After ReLU6 + scale, s is bounded in [0, 6*scale]; exp cannot overflow,
    # so the max-subtraction (a cross-lane reduction) is dropped.  If the ReLU6
    # clamp is ever removed, the max-subtract must come back.
    p = jnp.exp(s)
    p = p * pl.reciprocal(jnp.sum(p, axis=-1, keepdims=True), approx=True)

    # --- out = softmax(attn) @ v; proj (Linear with bias) ----------------------
    o = jnp.dot(p.astype(jnp.bfloat16), vp_sc[...],
                preferred_element_type=jnp.float32)                # (TQ, C)
    o = jnp.dot(o.astype(jnp.bfloat16), wp_ref[...],
                preferred_element_type=jnp.float32) + bp_ref[...]
    out_ref[0] = o.astype(out_ref.dtype)


def any_attention(q, k, v, params, tq=256):
    """q: (B, Sq, C); k, v: (B, Sk, C) float32. Returns (attn, out) float32."""
    B, Sq, C = q.shape
    _, Sk, _ = k.shape
    scale = float(C) ** (-0.5)

    # Pick the largest query tile (multiple of 8) that fits the VMEM budget.
    TQ = min(_round_up(tq, 8), _round_up(Sq, 8))
    while TQ > 8 and _vmem_bytes(TQ, Sk, C) > _VMEM_BUDGET_BYTES:
        TQ = max(8, _round_up(TQ // 2, 8))
    Sq_pad = _round_up(Sq, TQ)
    if Sq_pad != Sq:
        # Query rows are independent end-to-end, so zero-padding is safe; the
        # padded rows are sliced off after the call.
        q = jnp.pad(q, ((0, 0), (0, Sq_pad - Sq), (0, 0)))
    n_qt = Sq_pad // TQ

    # MXU operands in bf16 (halves weight DMA + VMEM); LN/bias params stay f32.
    wq = params["wq"].astype(jnp.bfloat16)
    wk = params["wk"].astype(jnp.bfloat16)
    wv = params["wv"].astype(jnp.bfloat16)
    wp = params["wp"].astype(jnp.bfloat16)

    q_spec = pl.BlockSpec((1, TQ, C), lambda b, t: (b, t, 0))
    kv_spec = pl.BlockSpec((1, Sk, C), lambda b, t: (b, 0, 0))
    vec_spec = pl.BlockSpec((1, C), lambda b, t: (0, 0))
    mat_spec = pl.BlockSpec((C, C), lambda b, t: (0, 0))

    kernel = functools.partial(_any_attention_kernel, scale)

    attn, out = pl.pallas_call(
        kernel,
        out_shape=(
            # TODO(synk): attn kept f32 to match the PyTorch interface; emit bf16
            # here to halve the quadratic HBM writeback if callers allow.
            jax.ShapeDtypeStruct((B, Sq_pad, Sk), jnp.float32),
            jax.ShapeDtypeStruct((B, Sq_pad, C), jnp.float32),
        ),
        grid_spec=pltpu.PrefetchScalarGridSpec(
            num_scalar_prefetch=0,
            grid=(B, n_qt),
            in_specs=[
                q_spec, kv_spec, kv_spec,             # q, k, v
                vec_spec, vec_spec,                   # LN q gamma/beta
                vec_spec, vec_spec,                   # LN k gamma/beta
                vec_spec, vec_spec,                   # LN v gamma/beta
                mat_spec, mat_spec, mat_spec,         # Wq, Wk, Wv (bf16)
                mat_spec, vec_spec,                   # Wproj (bf16), bproj
            ],
            out_specs=[
                pl.BlockSpec((1, TQ, Sk), lambda b, t: (b, t, 0)),
                pl.BlockSpec((1, TQ, C), lambda b, t: (b, t, 0)),
            ],
            scratch_shapes=[
                pltpu.VMEM((Sk, C), jnp.bfloat16),    # cached k projection
                pltpu.VMEM((Sk, C), jnp.bfloat16),    # cached v projection
            ],
        ),
        compiler_params=pltpu.CompilerParams(
            # Batch shards across TensorCores (megacore); the q-tile axis stays
            # sequential ("arbitrary") so the pl.when(qt == 0) k/v projection
            # cache is valid for every tile of a batch element.
            dimension_semantics=("parallel", "arbitrary"),
            vmem_limit_bytes=_VMEM_LIMIT_BYTES,
        ),
    )(q, k, v,
      params["gq"], params["bq"], params["gk"], params["bk"],
      params["gv"], params["bv"],
      wq, wk, wv, wp, params["bp"])

    return attn[:, :Sq, :], out[:, :Sq, :]


def init_params(key, dim):
    ks = jax.random.split(key, 8)
    s = dim ** (-0.5)
    # LayerNorm params initialized away from identity so they matter.
    return {
        "gq": 1.0 + 0.05 * jax.random.normal(ks[0], (1, dim), jnp.float32),
        "bq": 0.05 * jax.random.normal(ks[1], (1, dim), jnp.float32),
        "gk": 1.0 + 0.05 * jax.random.normal(ks[2], (1, dim), jnp.float32),
        "bk": 0.05 * jax.random.normal(ks[3], (1, dim), jnp.float32),
        "gv": jnp.ones((1, dim), jnp.float32),
        "bv": jnp.zeros((1, dim), jnp.float32),
        # Weights stored as (C_in, C_out) == W.T of the PyTorch Linear.
        "wq": s * jax.random.normal(ks[4], (dim, dim), jnp.float32),
        "wk": s * jax.random.normal(ks[5], (dim, dim), jnp.float32),
        "wv": s * jax.random.normal(ks[6], (dim, dim), jnp.float32),
        "wp": s * jax.random.normal(ks[7], (dim, dim), jnp.float32),
        "bp": 0.01 * jnp.ones((1, dim), jnp.float32),
    }


def _reference(q, k, v, params):
    """Pure-JAX f32 reference mirroring the PyTorch forward."""
    def ln(x, g, b):
        mu = x.mean(-1, keepdims=True)
        var = ((x - mu) ** 2).mean(-1, keepdims=True)
        return (x - mu) / jnp.sqrt(var + 1e-5) * g + b
    C = q.shape[-1]
    qn = ln(q, params["gq"], params["bq"]) @ params["wq"]
    kn = ln(k, params["gk"], params["bk"]) @ params["wk"]
    vn = ln(v, params["gv"], params["bv"]) @ params["wv"]
    attn = jnp.einsum("bqc,bkc->bqk", qn, kn)
    attn = jnp.clip(attn, 0.0, 6.0) * (C ** -0.5)
    mask = jax.nn.softmax(attn, axis=-1)
    out = jnp.einsum("bqk,bkc->bqc", mask, vn) @ params["wp"] + params["bp"]
    return attn, out


if __name__ == "__main__":
    # Small but lane-dense shapes (C, Sk multiples of 128); Sq=200 exercises the
    # query-padding path; tq=128 gives 2 query tiles per batch element, which
    # exercises the k/v-projection caching across tiles.
    B, Sq, Sk, C = 2, 200, 256, 128
    key = jax.random.PRNGKey(0)
    kq, kk, kv, kp = jax.random.split(key, 4)
    q = jax.random.normal(kq, (B, Sq, C), jnp.float32)
    k = jax.random.normal(kk, (B, Sk, C), jnp.float32)
    v = jax.random.normal(kv, (B, Sk, C), jnp.float32)
    params = init_params(kp, C)

    attn, out = any_attention(q, k, v, params, tq=128)
    jax.block_until_ready((attn, out))

    attn_ref, out_ref = _reference(q, k, v, params)
    assert attn.shape == attn_ref.shape and out.shape == out_ref.shape
    # bf16 MXU operands + approximate reciprocal introduce ~1e-2-level relative
    # drift vs. the pure-f32 reference; tolerances sized accordingly.
    assert jnp.allclose(attn, attn_ref, atol=5e-2, rtol=5e-2)
    assert jnp.allclose(out, out_ref, atol=5e-2, rtol=5e-2)
    print("KERNEL_OK")
</pallas_src>

<mosaic_0001>
module attributes {stable_mosaic.version = 11 : i64} {
  func.func @_any_attention_kernel(%arg0: i32, %arg1: i32, %arg2: memref<1x128x128xf32, #tpu.memory_space<vmem>>, %arg3: memref<1x256x128xf32, #tpu.memory_space<vmem>>, %arg4: memref<1x256x128xf32, #tpu.memory_space<vmem>>, %arg5: memref<1x128xf32, #tpu.memory_space<vmem>>, %arg6: memref<1x128xf32, #tpu.memory_space<vmem>>, %arg7: memref<1x128xf32, #tpu.memory_space<vmem>>, %arg8: memref<1x128xf32, #tpu.memory_space<vmem>>, %arg9: memref<1x128xf32, #tpu.memory_space<vmem>>, %arg10: memref<1x128xf32, #tpu.memory_space<vmem>>, %arg11: memref<128x128xbf16, #tpu.memory_space<vmem>>, %arg12: memref<128x128xbf16, #tpu.memory_space<vmem>>, %arg13: memref<128x128xbf16, #tpu.memory_space<vmem>>, %arg14: memref<128x128xbf16, #tpu.memory_space<vmem>>, %arg15: memref<1x128xf32, #tpu.memory_space<vmem>>, %arg16: memref<1x128x256xf32, #tpu.memory_space<vmem>>, %arg17: memref<1x128x128xf32, #tpu.memory_space<vmem>>, %arg18: memref<256x128xbf16, #tpu.memory_space<vmem>>, %arg19: memref<256x128xbf16, #tpu.memory_space<vmem>>) attributes {dimension_semantics = [#tpu.dimension_semantics<parallel>, #tpu.dimension_semantics<arbitrary>], iteration_bounds = array<i64: 2, 2>, scalar_prefetch = 0 : i64, scratch_operands = 2 : i64, tpu.core_type = #tpu.core_type<tc>, window_params = [{transform_indices = @transform_0, window_bounds = array<i64: 1, 128, 128>}, {transform_indices = @transform_1, window_bounds = array<i64: 1, 256, 128>}, {transform_indices = @transform_2, window_bounds = array<i64: 1, 256, 128>}, {pipeline_mode = #tpu.pipeline_mode<synchronous>, transform_indices = @transform_3, window_bounds = array<i64: 1, 128>}, {pipeline_mode = #tpu.pipeline_mode<synchronous>, transform_indices = @transform_4, window_bounds = array<i64: 1, 128>}, {pipeline_mode = #tpu.pipeline_mode<synchronous>, transform_indices = @transform_5, window_bounds = array<i64: 1, 128>}, {pipeline_mode = #tpu.pipeline_mode<synchronous>, transform_indices = @transform_6, window_bounds = array<i64: 1, 128>}, {pipeline_mode = #tpu.pipeline_mode<synchronous>, transform_indices = @transform_7, window_bounds = array<i64: 1, 128>}, {pipeline_mode = #tpu.pipeline_mode<synchronous>, transform_indices = @transform_8, window_bounds = array<i64: 1, 128>}, {pipeline_mode = #tpu.pipeline_mode<synchronous>, transform_indices = @transform_9, window_bounds = array<i64: 128, 128>}, {pipeline_mode = #tpu.pipeline_mode<synchronous>, transform_indices = @transform_10, window_bounds = array<i64: 128, 128>}, {pipeline_mode = #tpu.pipeline_mode<synchronous>, transform_indices = @transform_11, window_bounds = array<i64: 128, 128>}, {pipeline_mode = #tpu.pipeline_mode<synchronous>, transform_indices = @transform_12, window_bounds = array<i64: 128, 128>}, {pipeline_mode = #tpu.pipeline_mode<synchronous>, transform_indices = @transform_13, window_bounds = array<i64: 1, 128>}, {transform_indices = @transform_14, window_bounds = array<i64: 1, 128, 256>}, {transform_indices = @transform_15, window_bounds = array<i64: 1, 128, 128>}]} {
    %c0_i32 = arith.constant 0 : i32
    %0 = arith.cmpi eq, %arg1, %c0_i32 : i32
    %1 = arith.extui %0 : i1 to i32
    %c0_i32_0 = arith.constant 0 : i32
    %2 = arith.cmpi ne, %1, %c0_i32_0 : i32
    scf.if %2 {
      %c0_35 = arith.constant 0 : index
      %c0_36 = arith.constant 0 : index
      %c0_37 = arith.constant 0 : index
      %60 = vector.load %arg3[%c0_35, %c0_36, %c0_37] : memref<1x256x128xf32, #tpu.memory_space<vmem>>, vector<1x256x128xf32>
      %61 = vector.shape_cast %60 : vector<1x256x128xf32> to vector<256x128xf32>
      %c0_38 = arith.constant 0 : index
      %c0_39 = arith.constant 0 : index
      %62 = vector.load %arg7[%c0_38, %c0_39] : memref<1x128xf32, #tpu.memory_space<vmem>>, vector<1x128xf32>
      %c0_40 = arith.constant 0 : index
      %c0_41 = arith.constant 0 : index
      %63 = vector.load %arg8[%c0_40, %c0_41] : memref<1x128xf32, #tpu.memory_space<vmem>>, vector<1x128xf32>
      %cst_42 = arith.constant dense<0.000000e+00> : vector<256xf32>
      %64 = vector.multi_reduction <add>, %61, %cst_42 [1] : vector<256x128xf32> to vector<256xf32>
      %65 = vector.shape_cast %64 : vector<256xf32> to vector<256x1xf32>
      %cst_43 = arith.constant 1.280000e+02 : f32
      %66 = vector.broadcast %cst_43 : f32 to vector<256x1xf32>
      %67 = arith.divf %65, %66 : vector<256x1xf32>
      %68 = vector.broadcast %67 : vector<256x1xf32> to vector<256x128xf32>
      %69 = arith.subf %61, %68 : vector<256x128xf32>
      %70 = arith.mulf %69, %69 : vector<256x128xf32>
      %cst_44 = arith.constant dense<0.000000e+00> : vector<256xf32>
      %71 = vector.multi_reduction <add>, %70, %cst_44 [1] : vector<256x128xf32> to vector<256xf32>
      %72 = vector.shape_cast %71 : vector<256xf32> to vector<256x1xf32>
      %cst_45 = arith.constant 1.280000e+02 : f32
      %73 = vector.broadcast %cst_45 : f32 to vector<256x1xf32>
      %74 = arith.divf %72, %73 : vector<256x1xf32>
      %cst_46 = arith.constant 9.99999974E-6 : f32
      %75 = vector.broadcast %cst_46 : f32 to vector<256x1xf32>
      %76 = arith.addf %74, %75 : vector<256x1xf32>
      %77 = math.rsqrt %76 : vector<256x1xf32>
      %78 = vector.broadcast %77 : vector<256x1xf32> to vector<256x128xf32>
      %79 = arith.mulf %69, %78 : vector<256x128xf32>
      %80 = vector.broadcast %62 : vector<1x128xf32> to vector<256x128xf32>
      %81 = arith.mulf %79, %80 : vector<256x128xf32>
      %82 = vector.broadcast %63 : vector<1x128xf32> to vector<256x128xf32>
      %83 = arith.addf %81, %82 : vector<256x128xf32>
      %c0_47 = arith.constant 0 : index
      %c0_48 = arith.constant 0 : index
      %c0_49 = arith.constant 0 : index
      %84 = vector.load %arg4[%c0_47, %c0_48, %c0_49] : memref<1x256x128xf32, #tpu.memory_space<vmem>>, vector<1x256x128xf32>
      %85 = vector.shape_cast %84 : vector<1x256x128xf32> to vector<256x128xf32>
      %c0_50 = arith.constant 0 : index
      %c0_51 = arith.constant 0 : index
      %86 = vector.load %arg9[%c0_50, %c0_51] : memref<1x128xf32, #tpu.memory_space<vmem>>, vector<1x128xf32>
      %c0_52 = arith.constant 0 : index
      %c0_53 = arith.constant 0 : index
      %87 = vector.load %arg10[%c0_52, %c0_53] : memref<1x128xf32, #tpu.memory_space<vmem>>, vector<1x128xf32>
      %cst_54 = arith.constant dense<0.000000e+00> : vector<256xf32>
      %88 = vector.multi_reduction <add>, %85, %cst_54 [1] : vector<256x128xf32> to vector<256xf32>
      %89 = vector.shape_cast %88 : vector<256xf32> to vector<256x1xf32>
      %cst_55 = arith.constant 1.280000e+02 : f32
      %90 = vector.broadcast %cst_55 : f32 to vector<256x1xf32>
      %91 = arith.divf %89, %90 : vector<256x1xf32>
      %92 = vector.broadcast %91 : vector<256x1xf32> to vector<256x128xf32>
      %93 = arith.subf %85, %92 : vector<256x128xf32>
      %94 = arith.mulf %93, %93 : vector<256x128xf32>
      %cst_56 = arith.constant dense<0.000000e+00> : vector<256xf32>
      %95 = vector.multi_reduction <add>, %94, %cst_56 [1] : vector<256x128xf32> to vector<256xf32>
      %96 = vector.shape_cast %95 : vector<256xf32> to vector<256x1xf32>
      %cst_57 = arith.constant 1.280000e+02 : f32
      %97 = vector.broadcast %cst_57 : f32 to vector<256x1xf32>
      %98 = arith.divf %96, %97 : vector<256x1xf32>
      %cst_58 = arith.constant 9.99999974E-6 : f32
      %99 = vector.broadcast %cst_58 : f32 to vector<256x1xf32>
      %100 = arith.addf %98, %99 : vector<256x1xf32>
      %101 = math.rsqrt %100 : vector<256x1xf32>
      %102 = vector.broadcast %101 : vector<256x1xf32> to vector<256x128xf32>
      %103 = arith.mulf %93, %102 : vector<256x128xf32>
      %104 = vector.broadcast %86 : vector<1x128xf32> to vector<256x128xf32>
      %105 = arith.mulf %103, %104 : vector<256x128xf32>
      %106 = vector.broadcast %87 : vector<1x128xf32> to vector<256x128xf32>
      %107 = arith.addf %105, %106 : vector<256x128xf32>
      %108 = arith.truncf %83 : vector<256x128xf32> to vector<256x128xbf16>
      %c0_59 = arith.constant 0 : index
      %c0_60 = arith.constant 0 : index
      %109 = vector.load %arg12[%c0_59, %c0_60] : memref<128x128xbf16, #tpu.memory_space<vmem>>, vector<128x128xbf16>
      %cst_61 = arith.constant dense<0.000000e+00> : vector<256x128xf32>
      %110 = tpu.matmul %108, %109, %cst_61 {dimension_numbers = #tpu.dot_dimension_numbers<[1], [0], [0], [1], [0, 0, 1, 1], [], []>} : vector<256x128xbf16>, vector<128x128xbf16>, vector<256x128xf32> -> vector<256x128xf32>
      %111 = arith.truncf %107 : vector<256x128xf32> to vector<256x128xbf16>
      %c0_62 = arith.constant 0 : index
      %c0_63 = arith.constant 0 : index
      %112 = vector.load %arg13[%c0_62, %c0_63] : memref<128x128xbf16, #tpu.memory_space<vmem>>, vector<128x128xbf16>
      %cst_64 = arith.constant dense<0.000000e+00> : vector<256x128xf32>
      %113 = tpu.matmul %111, %112, %cst_64 {dimension_numbers = #tpu.dot_dimension_numbers<[1], [0], [0], [1], [0, 0, 1, 1], [], []>} : vector<256x128xbf16>, vector<128x128xbf16>, vector<256x128xf32> -> vector<256x128xf32>
      %114 = arith.truncf %110 : vector<256x128xf32> to vector<256x128xbf16>
      %c0_65 = arith.constant 0 : index
      %c0_66 = arith.constant 0 : index
      %115 = vector.load %arg18[%c0_65, %c0_66] : memref<256x128xbf16, #tpu.memory_space<vmem>>, vector<256x128xbf16>
      tpu.vector_store %arg18[%c0_65, %c0_66], %114 {strides = array<i32>} : memref<256x128xbf16, #tpu.memory_space<vmem>>, vector<256x128xbf16>,
      %116 = arith.truncf %113 : vector<256x128xf32> to vector<256x128xbf16>
      %c0_67 = arith.constant 0 : index
      %c0_68 = arith.constant 0 : index
      %117 = vector.load %arg19[%c0_67, %c0_68] : memref<256x128xbf16, #tpu.memory_space<vmem>>, vector<256x128xbf16>
      tpu.vector_store %arg19[%c0_67, %c0_68], %116 {strides = array<i32>} : memref<256x128xbf16, #tpu.memory_space<vmem>>, vector<256x128xbf16>,
    } else {
    }
    %c0 = arith.constant 0 : index
    %c0_1 = arith.constant 0 : index
    %c0_2 = arith.constant 0 : index
    %3 = vector.load %arg2[%c0, %c0_1, %c0_2] : memref<1x128x128xf32, #tpu.memory_space<vmem>>, vector<1x128x128xf32>
    %4 = vector.shape_cast %3 : vector<1x128x128xf32> to vector<128x128xf32>
    %c0_3 = arith.constant 0 : index
    %c0_4 = arith.constant 0 : index
    %5 = vector.load %arg5[%c0_3, %c0_4] : memref<1x128xf32, #tpu.memory_space<vmem>>, vector<1x128xf32>
    %c0_5 = arith.constant 0 : index
    %c0_6 = arith.constant 0 : index
    %6 = vector.load %arg6[%c0_5, %c0_6] : memref<1x128xf32, #tpu.memory_space<vmem>>, vector<1x128xf32>
    %cst = arith.constant dense<0.000000e+00> : vector<128xf32>
    %7 = vector.multi_reduction <add>, %4, %cst [1] : vector<128x128xf32> to vector<128xf32>
    %8 = vector.shape_cast %7 : vector<128xf32> to vector<128x1xf32>
    %cst_7 = arith.constant 1.280000e+02 : f32
    %9 = vector.broadcast %cst_7 : f32 to vector<128x1xf32>
    %10 = arith.divf %8, %9 : vector<128x1xf32>
    %11 = vector.broadcast %10 : vector<128x1xf32> to vector<128x128xf32>
    %12 = arith.subf %4, %11 : vector<128x128xf32>
    %13 = arith.mulf %12, %12 : vector<128x128xf32>
    %cst_8 = arith.constant dense<0.000000e+00> : vector<128xf32>
    %14 = vector.multi_reduction <add>, %13, %cst_8 [1] : vector<128x128xf32> to vector<128xf32>
    %15 = vector.shape_cast %14 : vector<128xf32> to vector<128x1xf32>
    %cst_9 = arith.constant 1.280000e+02 : f32
    %16 = vector.broadcast %cst_9 : f32 to vector<128x1xf32>
    %17 = arith.divf %15, %16 : vector<128x1xf32>
    %cst_10 = arith.constant 9.99999974E-6 : f32
    %18 = vector.broadcast %cst_10 : f32 to vector<128x1xf32>
    %19 = arith.addf %17, %18 : vector<128x1xf32>
    %20 = math.rsqrt %19 : vector<128x1xf32>
    %21 = vector.broadcast %20 : vector<128x1xf32> to vector<128x128xf32>
    %22 = arith.mulf %12, %21 : vector<128x128xf32>
    %23 = vector.broadcast %5 : vector<1x128xf32> to vector<128x128xf32>
    %24 = arith.mulf %22, %23 : vector<128x128xf32>
    %25 = vector.broadcast %6 : vector<1x128xf32> to vector<128x128xf32>
    %26 = arith.addf %24, %25 : vector<128x128xf32>
    %27 = arith.truncf %26 : vector<128x128xf32> to vector<128x128xbf16>
    %c0_11 = arith.constant 0 : index
    %c0_12 = arith.constant 0 : index
    %28 = vector.load %arg11[%c0_11, %c0_12] : memref<128x128xbf16, #tpu.memory_space<vmem>>, vector<128x128xbf16>
    %cst_13 = arith.constant dense<0.000000e+00> : vector<128x128xf32>
    %29 = tpu.matmul %27, %28, %cst_13 {dimension_numbers = #tpu.dot_dimension_numbers<[1], [0], [0], [1], [0, 0, 1, 1], [], []>} : vector<128x128xbf16>, vector<128x128xbf16>, vector<128x128xf32> -> vector<128x128xf32>
    %30 = arith.truncf %29 : vector<128x128xf32> to vector<128x128xbf16>
    %c0_14 = arith.constant 0 : index
    %c0_15 = arith.constant 0 : index
    %31 = vector.load %arg18[%c0_14, %c0_15] : memref<256x128xbf16, #tpu.memory_space<vmem>>, vector<256x128xbf16>
    %cst_16 = arith.constant dense<0.000000e+00> : vector<128x256xf32>
    %32 = tpu.matmul %30, %31, %cst_16 {dimension_numbers = #tpu.dot_dimension_numbers<[1], [1], [0], [0], [0, 0, 1, 0], [], []>} : vector<128x128xbf16>, vector<256x128xbf16>, vector<128x256xf32> -> vector<128x256xf32>
    %cst_17 = arith.constant 0.000000e+00 : f32
    %cst_18 = arith.constant 6.000000e+00 : f32
    %33 = vector.broadcast %cst_17 : f32 to vector<128x256xf32>
    %34 = arith.maximumf %33, %32 : vector<128x256xf32>
    %35 = vector.broadcast %cst_18 : f32 to vector<128x256xf32>
    %36 = arith.minimumf %35, %34 : vector<128x256xf32>
    %cst_19 = arith.constant 0.0883883461 : f32
    %37 = vector.broadcast %cst_19 : f32 to vector<128x256xf32>
    %38 = arith.mulf %36, %37 : vector<128x256xf32>
    %c0_20 = arith.constant 0 : index
    %c0_21 = arith.constant 0 : index
    %c0_22 = arith.constant 0 : index
    %39 = vector.load %arg16[%c0_20, %c0_21, %c0_22] : memref<1x128x256xf32, #tpu.memory_space<vmem>>, vector<1x128x256xf32>
    %40 = vector.shape_cast %39 : vector<1x128x256xf32> to vector<128x256xf32>
    %41 = vector.shape_cast %38 : vector<128x256xf32> to vector<1x128x256xf32>
    tpu.vector_store %arg16[%c0_20, %c0_21, %c0_22], %41 {strides = array<i32>} : memref<1x128x256xf32, #tpu.memory_space<vmem>>, vector<1x128x256xf32>,
    %42 = math.exp %38 : vector<128x256xf32>
    %cst_23 = arith.constant dense<0.000000e+00> : vector<128xf32>
    %43 = vector.multi_reduction <add>, %42, %cst_23 [1] : vector<128x256xf32> to vector<128xf32>
    %44 = vector.shape_cast %43 : vector<128xf32> to vector<128x1xf32>
    %45 = tpu.reciprocal %44 {approx = true} : vector<128x1xf32> -> vector<128x1xf32>
    %46 = vector.broadcast %45 : vector<128x1xf32> to vector<128x256xf32>
    %47 = arith.mulf %42, %46 : vector<128x256xf32>
    %48 = arith.truncf %47 : vector<128x256xf32> to vector<128x256xbf16>
    %c0_24 = arith.constant 0 : index
    %c0_25 = arith.constant 0 : index
    %49 = vector.load %arg19[%c0_24, %c0_25] : memref<256x128xbf16, #tpu.memory_space<vmem>>, vector<256x128xbf16>
    %cst_26 = arith.constant dense<0.000000e+00> : vector<128x128xf32>
    %50 = tpu.matmul %48, %49, %cst_26 {dimension_numbers = #tpu.dot_dimension_numbers<[1], [0], [0], [1], [0, 0, 1, 1], [], []>} : vector<128x256xbf16>, vector<256x128xbf16>, vector<128x128xf32> -> vector<128x128xf32>
    %51 = arith.truncf %50 : vector<128x128xf32> to vector<128x128xbf16>
    %c0_27 = arith.constant 0 : index
    %c0_28 = arith.constant 0 : index
    %52 = vector.load %arg14[%c0_27, %c0_28] : memref<128x128xbf16, #tpu.memory_space<vmem>>, vector<128x128xbf16>
    %cst_29 = arith.constant dense<0.000000e+00> : vector<128x128xf32>
    %53 = tpu.matmul %51, %52, %cst_29 {dimension_numbers = #tpu.dot_dimension_numbers<[1], [0], [0], [1], [0, 0, 1, 1], [], []>} : vector<128x128xbf16>, vector<128x128xbf16>, vector<128x128xf32> -> vector<128x128xf32>
    %c0_30 = arith.constant 0 : index
    %c0_31 = arith.constant 0 : index
    %54 = vector.load %arg15[%c0_30, %c0_31] : memref<1x128xf32, #tpu.memory_space<vmem>>, vector<1x128xf32>
    %55 = vector.broadcast %54 : vector<1x128xf32> to vector<128x128xf32>
    %56 = arith.addf %53, %55 : vector<128x128xf32>
    %c0_32 = arith.constant 0 : index
    %c0_33 = arith.constant 0 : index
    %c0_34 = arith.constant 0 : index
    %57 = vector.load %arg17[%c0_32, %c0_33, %c0_34] : memref<1x128x128xf32, #tpu.memory_space<vmem>>, vector<1x128x128xf32>
    %58 = vector.shape_cast %57 : vector<1x128x128xf32> to vector<128x128xf32>
    %59 = vector.shape_cast %56 : vector<128x128xf32> to vector<1x128x128xf32>
    tpu.vector_store %arg17[%c0_32, %c0_33, %c0_34], %59 {strides = array<i32>} : memref<1x128x128xf32, #tpu.memory_space<vmem>>, vector<1x128x128xf32>,
    return
  }
  func.func @transform_0(%arg0: i32, %arg1: i32) -> (i32, i32, i32) {
    %c0_i32 = arith.constant 0 : i32
    %c0_i32_0 = arith.constant 0 : i32
    return %arg0, %arg1, %c0_i32 : i32, i32, i32
  }
  func.func @transform_1(%arg0: i32, %arg1: i32) -> (i32, i32, i32) {
    %c0_i32 = arith.constant 0 : i32
    %c0_i32_0 = arith.constant 0 : i32
    %c0_i32_1 = arith.constant 0 : i32
    return %arg0, %c0_i32, %c0_i32_0 : i32, i32, i32
  }
  func.func @transform_2(%arg0: i32, %arg1: i32) -> (i32, i32, i32) {
    %c0_i32 = arith.constant 0 : i32
    %c0_i32_0 = arith.constant 0 : i32
    %c0_i32_1 = arith.constant 0 : i32
    return %arg0, %c0_i32, %c0_i32_0 : i32, i32, i32
  }
  func.func @transform_3(%arg0: i32, %arg1: i32) -> (i32, i32) {
    %c0_i32 = arith.constant 0 : i32
    %c0_i32_0 = arith.constant 0 : i32
    %c0_i32_1 = arith.constant 0 : i32
    return %c0_i32, %c0_i32_0 : i32, i32
  }
  func.func @transform_4(%arg0: i32, %arg1: i32) -> (i32, i32) {
    %c0_i32 = arith.constant 0 : i32
    %c0_i32_0 = arith.constant 0 : i32
    %c0_i32_1 = arith.constant 0 : i32
    return %c0_i32, %c0_i32_0 : i32, i32
  }
  func.func @transform_5(%arg0: i32, %arg1: i32) -> (i32, i32) {
    %c0_i32 = arith.constant 0 : i32
    %c0_i32_0 = arith.constant 0 : i32
    %c0_i32_1 = arith.constant 0 : i32
    return %c0_i32, %c0_i32_0 : i32, i32
  }
  func.func @transform_6(%arg0: i32, %arg1: i32) -> (i32, i32) {
    %c0_i32 = arith.constant 0 : i32
    %c0_i32_0 = arith.constant 0 : i32
    %c0_i32_1 = arith.constant 0 : i32
    return %c0_i32, %c0_i32_0 : i32, i32
  }
  func.func @transform_7(%arg0: i32, %arg1: i32) -> (i32, i32) {
    %c0_i32 = arith.constant 0 : i32
    %c0_i32_0 = arith.constant 0 : i32
    %c0_i32_1 = arith.constant 0 : i32
    return %c0_i32, %c0_i32_0 : i32, i32
  }
  func.func @transform_8(%arg0: i32, %arg1: i32) -> (i32, i32) {
    %c0_i32 = arith.constant 0 : i32
    %c0_i32_0 = arith.constant 0 : i32
    %c0_i32_1 = arith.constant 0 : i32
    return %c0_i32, %c0_i32_0 : i32, i32
  }
  func.func @transform_9(%arg0: i32, %arg1: i32) -> (i32, i32) {
    %c0_i32 = arith.constant 0 : i32
    %c0_i32_0 = arith.constant 0 : i32
    %c0_i32_1 = arith.constant 0 : i32
    return %c0_i32, %c0_i32_0 : i32, i32
  }
  func.func @transform_10(%arg0: i32, %arg1: i32) -> (i32, i32) {
    %c0_i32 = arith.constant 0 : i32
    %c0_i32_0 = arith.constant 0 : i32
    %c0_i32_1 = arith.constant 0 : i32
    return %c0_i32, %c0_i32_0 : i32, i32
  }
  func.func @transform_11(%arg0: i32, %arg1: i32) -> (i32, i32) {
    %c0_i32 = arith.constant 0 : i32
    %c0_i32_0 = arith.constant 0 : i32
    %c0_i32_1 = arith.constant 0 : i32
    return %c0_i32, %c0_i32_0 : i32, i32
  }
  func.func @transform_12(%arg0: i32, %arg1: i32) -> (i32, i32) {
    %c0_i32 = arith.constant 0 : i32
    %c0_i32_0 = arith.constant 0 : i32
    %c0_i32_1 = arith.constant 0 : i32
    return %c0_i32, %c0_i32_0 : i32, i32
  }
  func.func @transform_13(%arg0: i32, %arg1: i32) -> (i32, i32) {
    %c0_i32 = arith.constant 0 : i32
    %c0_i32_0 = arith.constant 0 : i32
    %c0_i32_1 = arith.constant 0 : i32
    return %c0_i32, %c0_i32_0 : i32, i32
  }
  func.func @transform_14(%arg0: i32, %arg1: i32) -> (i32, i32, i32) {
    %c0_i32 = arith.constant 0 : i32
    %c0_i32_0 = arith.constant 0 : i32
    return %arg0, %arg1, %c0_i32 : i32, i32, i32
  }
  func.func @transform_15(%arg0: i32, %arg1: i32) -> (i32, i32, i32) {
    %c0_i32 = arith.constant 0 : i32
    %c0_i32_0 = arith.constant 0 : i32
    return %arg0, %arg1, %c0_i32 : i32, i32, i32
  }
}

</mosaic_0001>

<llo_original>
// kernel: tpu_custom_call.1
$region0: #{tpu_custom_call.1}
  #allocation0 [shape = 'u32[]', space=smem, size = 0x4, offset = 0x4, fixed_abs, tag = 'smem constant byte address 0x4 - core index']
  #allocation1 [shape = 'u32[144,128]{1,0:T(1,128)}', space=vmem, size = 0x12000, scoped, tag = 'internal scratch']
  #allocation2 [shape = 'bf16[256,128]{1,0:T(8,128)(2,1)}', space=vmem, size = 0x10000, scoped, tag = 'scratch operand']
  #allocation3 [shape = 'bf16[256,128]{1,0:T(8,128)(2,1)}', space=vmem, size = 0x10000, scoped, tag = 'scratch operand']
  %s0 = inlined_call_operand.hbm [shape: f32[2,256,128], index: 0, kind: input, shape index: {}]
  %s1 = inlined_call_operand.hbm [shape: f32[2,256,128], index: 1, kind: input, shape index: {}]
  %s2 = inlined_call_operand.hbm [shape: f32[2,256,128], index: 2, kind: input, shape index: {}]
  %s3 = inlined_call_operand.vmem [shape: f32[1,128], index: 3, kind: input, shape index: {}]
  %s4 = inlined_call_operand.vmem [shape: f32[1,128], index: 4, kind: input, shape index: {}]
  %s5 = inlined_call_operand.vmem [shape: f32[1,128], index: 5, kind: input, shape index: {}]
  %s6 = inlined_call_operand.vmem [shape: f32[1,128], index: 6, kind: input, shape index: {}]
  %s7 = inlined_call_operand.vmem [shape: f32[1,128], index: 7, kind: input, shape index: {}]
  %s8 = inlined_call_operand.vmem [shape: f32[1,128], index: 8, kind: input, shape index: {}]
  %s9 = inlined_call_operand.hbm [shape: bf16[128,128], index: 9, kind: input, shape index: {}]
  %s10 = inlined_call_operand.hbm [shape: bf16[128,128], index: 10, kind: input, shape index: {}]
  %s11 = inlined_call_operand.hbm [shape: bf16[128,128], index: 11, kind: input, shape index: {}]
  %s12 = inlined_call_operand.hbm [shape: bf16[128,128], index: 12, kind: input, shape index: {}]
  %s13 = inlined_call_operand.vmem [shape: f32[1,128], index: 13, kind: input, shape index: {}]
  %s14 = inlined_call_operand.hbm [shape: f32[2,256,256], index: 14, kind: output, shape index: {0}]
  %s15 = inlined_call_operand.hbm [shape: f32[2,256,128], index: 15, kind: output, shape index: {1}]
  %16 = xla_tuple %s14, %s15
  %s17 = sld [smem:[#allocation0]]
  $region129: #{tpu_custom_call.1} parent=0
    _
  %s19 = ssub.s32 1, %s17
  %s20 = scalar_select 0, %s19, %s17
  $region1: #{tpu_custom_call.1} parent=0
    #allocation4 [shape = 'u8[131072]{0}', space=vmem, size = 0x20000, scoped, tag = 'input window, operand 0']
    #allocation5 [shape = 's32[2]{0}', space=sflag, size = 0x8, scoped, tag = 'scoped memory for tpu_custom_call.1']
    #allocation6 [shape = 's32[2]{0}', space=sflag, size = 0x8, scoped, tag = 'scoped memory for tpu_custom_call.1']
    #allocation7 [shape = 'u8[262144]{0}', space=vmem, size = 0x40000, scoped, tag = 'input window, operand 1']
    #allocation8 [shape = 's32[2]{0}', space=sflag, size = 0x8, scoped, tag = 'scoped memory for tpu_custom_call.1']
    #allocation9 [shape = 'u8[262144]{0}', space=vmem, size = 0x40000, scoped, tag = 'input window, operand 2']
    #allocation10 [shape = 'u8[32768]{0}', space=vmem, size = 0x8000, scoped, tag = 'input window, operand 9, single buffered']
    #allocation11 [shape = 's32[1]{0}', space=sflag, size = 0x4, scoped, tag = 'scoped memory for tpu_custom_call.1']
    #allocation12 [shape = 'u8[32768]{0}', space=vmem, size = 0x8000, scoped, tag = 'input window, operand 10, single buffered']
    #allocation13 [shape = 'u8[32768]{0}', space=vmem, size = 0x8000, scoped, tag = 'input window, operand 11, single buffered']
    #allocation14 [shape = 's32[1]{0}', space=sflag, size = 0x4, scoped, tag = 'scoped memory for tpu_custom_call.1']
    #allocation15 [shape = 'u8[32768]{0}', space=vmem, size = 0x8000, scoped, tag = 'input window, operand 12, single buffered']
    #allocation16 [shape = 'u8[262144]{0}', space=vmem, size = 0x40000, scoped, tag = 'output window, operand 0']
    #allocation17 [shape = 'u8[131072]{0}', space=vmem, size = 0x20000, scoped, tag = 'output window, operand 1']
    #allocation18 [shape = 's32[2]{0}', space=sflag, size = 0x8, scoped, tag = 'scoped memory for tpu_custom_call.1']
    %21 = vsyncpa [#allocation5], 0
    %s22 = scalar_lea.sflag [#allocation5], 1
    %23 = vsyncpa %s22, 0
    %24 = vsyncpa [#allocation8], 0
    %s25 = scalar_lea.sflag [#allocation8], 1
    %26 = vsyncpa %s25, 0
    %27 = vsyncpa [#allocation11], 0
    %28 = vsyncpa [#allocation14], 0
    %29 = vsyncpa [#allocation6], 0
    %s30 = scalar_lea.sflag [#allocation6], 1
    %31 = vsyncpa %s30, 0
    %32 = vsyncpa [#allocation18], 0
    %s33 = scalar_lea.sflag [#allocation18], 1
    %34 = vsyncpa %s33, 0
    loop: start=0, step=1, limit=6
    $region2: #{tpu_custom_call.1} parent=1 // loop_pre_header
      _
    $region3: #{tpu_custom_call.1} parent=1 // loop_header
      %s36 = sphi 0, %s40
      %p37 = scmp.ge.s32.totalorder %s36, 6
      %s43 = sphi 0, %s55
      %s44 = sphi 0, %s51
      %s45 = sphi 0, %s43
      %s46 = sphi 0, %s44
      %s47 = sphi 0, %s45
      %s48 = sphi 0, %s46
      %s60 = sphi 0, %s62
      %s63 = sphi 0, %s60
      %s64 = sphi 0, %s63
      %s80 = sphi 0, %s64
      %s86 = sphi 0, %s88
      %s89 = sphi 0, %s86
      %s90 = sphi 0, %s89
      %s106 = sphi 0, %s90
      %s112 = sphi 0, %s114
      %s115 = sphi 0, %s112
      %s116 = sphi 0, %s115
      %s132 = sphi 0, %s116
      %s136 = sphi 0, %s136
      %s138 = sphi 0, %s136
      %s139 = sphi 0, %s138
      %s153 = sphi 0, %s139
      %s157 = sphi 0, %s157
      %s159 = sphi 0, %s157
      %s160 = sphi 0, %s159
      %s174 = sphi 0, %s160
      %s178 = sphi 0, %s178
      %s180 = sphi 0, %s178
      %s181 = sphi 0, %s180
      %s195 = sphi 0, %s181
      %s199 = sphi 0, %s199
      %s201 = sphi 0, %s199
      %s202 = sphi 0, %s201
      %s216 = sphi 0, %s202
      %s220 = sphi 0, %s220
      %s222 = sphi 0, %s220
      %s223 = sphi 0, %s222
      %s237 = sphi 0, %s223
      %s241 = sphi 0, %s241
      %s243 = sphi 0, %s241
      %s244 = sphi 0, %s243
      %s258 = sphi 0, %s244
      %s262 = sphi 0, %s262
      %s264 = sphi 0, %s262
      %s265 = sphi 0, %s264
      %s279 = sphi 0, %s265
      %s283 = sphi 0, %s283
      %s285 = sphi 0, %s283
      %s286 = sphi 0, %s285
      %s300 = sphi 0, %s286
      %s304 = sphi 0, %s304
      %s306 = sphi 0, %s304
      %s307 = sphi 0, %s306
      %s321 = sphi 0, %s307
      %s325 = sphi 0, %s325
      %s327 = sphi 0, %s325
      %s328 = sphi 0, %s327
      %s342 = sphi 0, %s328
      %s346 = sphi 0, %s346
      %s348 = sphi 0, %s346
      %s349 = sphi 0, %s348
      %s363 = sphi 0, %s349
      %s371 = sphi 0, %s373
      %s374 = sphi 0, %s371
      %s375 = sphi 0, %s374
      %s391 = sphi 0, %s375
      %s399 = sphi 0, %s401
      %s402 = sphi 0, %s399
      %s403 = sphi 0, %s402
      %s419 = sphi 0, %s403
    $region4: #{tpu_custom_call.1} parent=1 // loop_header_branch
      %39 = sbr.rel (%p37) target = $region8
    $region5: #{tpu_custom_call.1} parent=1 // loop_body
      %s41 = ssub.s32 %s36, 1
      %s42 = ssub.s32 %s36, 2
      %s49 = sadd.s32 1, %s44
      %p50 = scmp.ge.s32.totalorder %s49, 2
      %s51 = scalar_select %p50, 0, %s49
      %s52 = sadd.s32 1, %s43
      %s53 = scalar_select %p50, %s52, %s43
      %p54 = scmp.ge.s32.totalorder %s53, 2
      %s55 = scalar_select %p54, 0, %s53
      %s56 = ssub.s32 %s43, %s55
      %s57 = ssub.s32 %s44, %s51
      %s58 = sor.u32 %s56, %s57
      %p59 = scmp.eq.s32.totalorder %s58, 0
      %s61 = sadd.s32 %s60, 1
      %s62 = scalar_select %p59, %s60, %s61
      %p65 = pneg %p59
      %p66 = scmp.eq.s32.totalorder %s36, 3
      %p67 = por %p65, %p66
      %p68 = scmp.ne.s32.totalorder %s60, %s63
      %p69 = scmp.eq.s32.totalorder %s36, 0
      %p70 = por %p68, %p69
      %p71 = scmp.ne.s32.totalorder %s60, %s63
      %p72 = scmp.eq.s32.totalorder %s41, 3
      %p73 = por %p71, %p72
      %p74 = scmp.ne.s32.totalorder %s63, %s64
      %p75 = scmp.eq.s32.totalorder %s41, 0
      %p76 = por %p74, %p75
      %p77 = scmp.ne.s32.totalorder %s63, %s64
      %p78 = scmp.eq.s32.totalorder %s42, 3
      %p79 = por %p77, %p78
      %p81 = scmp.ne.s32.totalorder %s64, %s80
      %p82 = scmp.eq.s32.totalorder %s42, 0
      %p83 = por %p81, %p82
      %s84 = ssub.s32 %s43, %s55
      %p85 = scmp.eq.s32.totalorder %s84, 0
      %s87 = sadd.s32 %s86, 1
      %s88 = scalar_select %p85, %s86, %s87
      %p91 = pneg %p85
      %p92 = scmp.eq.s32.totalorder %s36, 3
      %p93 = por %p91, %p92
      %p94 = scmp.ne.s32.totalorder %s86, %s89
      %p95 = scmp.eq.s32.totalorder %s36, 0
      %p96 = por %p94, %p95
      %p97 = scmp.ne.s32.totalorder %s86, %s89
      %p98 = scmp.eq.s32.totalorder %s41, 3
      %p99 = por %p97, %p98
      %p100 = scmp.ne.s32.totalorder %s89, %s90
      %p101 = scmp.eq.s32.totalorder %s41, 0
      %p102 = por %p100, %p101
      %p103 = scmp.ne.s32.totalorder %s89, %s90
      %p104 = scmp.eq.s32.totalorder %s42, 3
      %p105 = por %p103, %p104
      %p107 = scmp.ne.s32.totalorder %s90, %s106
      %p108 = scmp.eq.s32.totalorder %s42, 0
      %p109 = por %p107, %p108
      %s110 = ssub.s32 %s43, %s55
      %p111 = scmp.eq.s32.totalorder %s110, 0
      %s113 = sadd.s32 %s112, 1
      %s114 = scalar_select %p111, %s112, %s113
      %p117 = pneg %p111
      %p118 = scmp.eq.s32.totalorder %s36, 3
      %p119 = por %p117, %p118
      %p120 = scmp.ne.s32.totalorder %s112, %s115
      %p121 = scmp.eq.s32.totalorder %s36, 0
      %p122 = por %p120, %p121
      %p123 = scmp.ne.s32.totalorder %s112, %s115
      %p124 = scmp.eq.s32.totalorder %s41, 3
      %p125 = por %p123, %p124
      %p126 = scmp.ne.s32.totalorder %s115, %s116
      %p127 = scmp.eq.s32.totalorder %s41, 0
      %p128 = por %p126, %p127
      %p129 = scmp.ne.s32.totalorder %s115, %s116
      %p130 = scmp.eq.s32.totalorder %s42, 3
      %p131 = por %p129, %p130
      %p133 = scmp.ne.s32.totalorder %s116, %s132
      %p134 = scmp.eq.s32.totalorder %s42, 0
      %p135 = por %p133, %p134
      %s137 = sadd.s32 %s136, 1
      %p140 = scmp.eq.s32.totalorder %s36, 3
      %p141 = scmp.ne.s32.totalorder %s136, %s138
      %p142 = scmp.eq.s32.totalorder %s36, 0
      %p143 = por %p141, %p142
      %p144 = scmp.ne.s32.totalorder %s136, %s138
      %p145 = scmp.eq.s32.totalorder %s41, 3
      %p146 = por %p144, %p145
      %p147 = scmp.ne.s32.totalorder %s138, %s139
      %p148 = scmp.eq.s32.totalorder %s41, 0
      %p149 = por %p147, %p148
      %p150 = scmp.ne.s32.totalorder %s138, %s139
      %p151 = scmp.eq.s32.totalorder %s42, 3
      %p152 = por %p150, %p151
      %p154 = scmp.ne.s32.totalorder %s139, %s153
      %p155 = scmp.eq.s32.totalorder %s42, 0
      %p156 = por %p154, %p155
      %s158 = sadd.s32 %s157, 1
      %p161 = scmp.eq.s32.totalorder %s36, 3
      %p162 = scmp.ne.s32.totalorder %s157, %s159
      %p163 = scmp.eq.s32.totalorder %s36, 0
      %p164 = por %p162, %p163
      %p165 = scmp.ne.s32.totalorder %s157, %s159
      %p166 = scmp.eq.s32.totalorder %s41, 3
      %p167 = por %p165, %p166
      %p168 = scmp.ne.s32.totalorder %s159, %s160
      %p169 = scmp.eq.s32.totalorder %s41, 0
      %p170 = por %p168, %p169
      %p171 = scmp.ne.s32.totalorder %s159, %s160
      %p172 = scmp.eq.s32.totalorder %s42, 3
      %p173 = por %p171, %p172
      %p175 = scmp.ne.s32.totalorder %s160, %s174
      %p176 = scmp.eq.s32.totalorder %s42, 0
      %p177 = por %p175, %p176
      %s179 = sadd.s32 %s178, 1
      %p182 = scmp.eq.s32.totalorder %s36, 3
      %p183 = scmp.ne.s32.totalorder %s178, %s180
      %p184 = scmp.eq.s32.totalorder %s36, 0
      %p185 = por %p183, %p184
      %p186 = scmp.ne.s32.totalorder %s178, %s180
      %p187 = scmp.eq.s32.totalorder %s41, 3
      %p188 = por %p186, %p187
      %p189 = scmp.ne.s32.totalorder %s180, %s181
      %p190 = scmp.eq.s32.totalorder %s41, 0
      %p191 = por %p189, %p190
      %p192 = scmp.ne.s32.totalorder %s180, %s181
      %p193 = scmp.eq.s32.totalorder %s42, 3
      %p194 = por %p192, %p193
      %p196 = scmp.ne.s32.totalorder %s181, %s195
      %p197 = scmp.eq.s32.totalorder %s42, 0
      %p198 = por %p196, %p197
      %s200 = sadd.s32 %s199, 1
      %p203 = scmp.eq.s32.totalorder %s36, 3
      %p204 = scmp.ne.s32.totalorder %s199, %s201
      %p205 = scmp.eq.s32.totalorder %s36, 0
      %p206 = por %p204, %p205
      %p207 = scmp.ne.s32.totalorder %s199, %s201
      %p208 = scmp.eq.s32.totalorder %s41, 3
      %p209 = por %p207, %p208
      %p210 = scmp.ne.s32.totalorder %s201, %s202
      %p211 = scmp.eq.s32.totalorder %s41, 0
      %p212 = por %p210, %p211
      %p213 = scmp.ne.s32.totalorder %s201, %s202
      %p214 = scmp.eq.s32.totalorder %s42, 3
      %p215 = por %p213, %p214
      %p217 = scmp.ne.s32.totalorder %s202, %s216
      %p218 = scmp.eq.s32.totalorder %s42, 0
      %p219 = por %p217, %p218
      %s221 = sadd.s32 %s220, 1
      %p224 = scmp.eq.s32.totalorder %s36, 3
      %p225 = scmp.ne.s32.totalorder %s220, %s222
      %p226 = scmp.eq.s32.totalorder %s36, 0
      %p227 = por %p225, %p226
      %p228 = scmp.ne.s32.totalorder %s220, %s222
      %p229 = scmp.eq.s32.totalorder %s41, 3
      %p230 = por %p228, %p229
      %p231 = scmp.ne.s32.totalorder %s222, %s223
      %p232 = scmp.eq.s32.totalorder %s41, 0
      %p233 = por %p231, %p232
      %p234 = scmp.ne.s32.totalorder %s222, %s223
      %p235 = scmp.eq.s32.totalorder %s42, 3
      %p236 = por %p234, %p235
      %p238 = scmp.ne.s32.totalorder %s223, %s237
      %p239 = scmp.eq.s32.totalorder %s42, 0
      %p240 = por %p238, %p239
      %s242 = sadd.s32 %s241, 1
      %p245 = scmp.eq.s32.totalorder %s36, 3
      %p246 = scmp.ne.s32.totalorder %s241, %s243
      %p247 = scmp.eq.s32.totalorder %s36, 0
      %p248 = por %p246, %p247
      %p249 = scmp.ne.s32.totalorder %s241, %s243
      %p250 = scmp.eq.s32.totalorder %s41, 3
      %p251 = por %p249, %p250
      %p252 = scmp.ne.s32.totalorder %s243, %s244
      %p253 = scmp.eq.s32.totalorder %s41, 0
      %p254 = por %p252, %p253
      %p255 = scmp.ne.s32.totalorder %s243, %s244
      %p256 = scmp.eq.s32.totalorder %s42, 3
      %p257 = por %p255, %p256
      %p259 = scmp.ne.s32.totalorder %s244, %s258
      %p260 = scmp.eq.s32.totalorder %s42, 0
      %p261 = por %p259, %p260
      %s263 = sadd.s32 %s262, 1
      %p266 = scmp.eq.s32.totalorder %s36, 3
      %p267 = scmp.ne.s32.totalorder %s262, %s264
      %p268 = scmp.eq.s32.totalorder %s36, 0
      %p269 = por %p267, %p268
      %p270 = scmp.ne.s32.totalorder %s262, %s264
      %p271 = scmp.eq.s32.totalorder %s41, 3
      %p272 = por %p270, %p271
      %p273 = scmp.ne.s32.totalorder %s264, %s265
      %p274 = scmp.eq.s32.totalorder %s41, 0
      %p275 = por %p273, %p274
      %p276 = scmp.ne.s32.totalorder %s264, %s265
      %p277 = scmp.eq.s32.totalorder %s42, 3
      %p278 = por %p276, %p277
      %p280 = scmp.ne.s32.totalorder %s265, %s279
      %p281 = scmp.eq.s32.totalorder %s42, 0
      %p282 = por %p280, %p281
      %s284 = sadd.s32 %s283, 1
      %p287 = scmp.eq.s32.totalorder %s36, 3
      %p288 = scmp.ne.s32.totalorder %s283, %s285
      %p289 = scmp.eq.s32.totalorder %s36, 0
      %p290 = por %p288, %p289
      %p291 = scmp.ne.s32.totalorder %s283, %s285
      %p292 = scmp.eq.s32.totalorder %s41, 3
      %p293 = por %p291, %p292
      %p294 = scmp.ne.s32.totalorder %s285, %s286
      %p295 = scmp.eq.s32.totalorder %s41, 0
      %p296 = por %p294, %p295
      %p297 = scmp.ne.s32.totalorder %s285, %s286
      %p298 = scmp.eq.s32.totalorder %s42, 3
      %p299 = por %p297, %p298
      %p301 = scmp.ne.s32.totalorder %s286, %s300
      %p302 = scmp.eq.s32.totalorder %s42, 0
      %p303 = por %p301, %p302
      %s305 = sadd.s32 %s304, 1
      %p308 = scmp.eq.s32.totalorder %s36, 3
      %p309 = scmp.ne.s32.totalorder %s304, %s306
      %p310 = scmp.eq.s32.totalorder %s36, 0
      %p311 = por %p309, %p310
      %p312 = scmp.ne.s32.totalorder %s304, %s306
      %p313 = scmp.eq.s32.totalorder %s41, 3
      %p314 = por %p312, %p313
      %p315 = scmp.ne.s32.totalorder %s306, %s307
      %p316 = scmp.eq.s32.totalorder %s41, 0
      %p317 = por %p315, %p316
      %p318 = scmp.ne.s32.totalorder %s306, %s307
      %p319 = scmp.eq.s32.totalorder %s42, 3
      %p320 = por %p318, %p319
      %p322 = scmp.ne.s32.totalorder %s307, %s321
      %p323 = scmp.eq.s32.totalorder %s42, 0
      %p324 = por %p322, %p323
      %s326 = sadd.s32 %s325, 1
      %p329 = scmp.eq.s32.totalorder %s36, 3
      %p330 = scmp.ne.s32.totalorder %s325, %s327
      %p331 = scmp.eq.s32.totalorder %s36, 0
      %p332 = por %p330, %p331
      %p333 = scmp.ne.s32.totalorder %s325, %s327
      %p334 = scmp.eq.s32.totalorder %s41, 3
      %p335 = por %p333, %p334
      %p336 = scmp.ne.s32.totalorder %s327, %s328
      %p337 = scmp.eq.s32.totalorder %s41, 0
      %p338 = por %p336, %p337
      %p339 = scmp.ne.s32.totalorder %s327, %s328
      %p340 = scmp.eq.s32.totalorder %s42, 3
      %p341 = por %p339, %p340
      %p343 = scmp.ne.s32.totalorder %s328, %s342
      %p344 = scmp.eq.s32.totalorder %s42, 0
      %p345 = por %p343, %p344
      %s347 = sadd.s32 %s346, 1
      %p350 = scmp.eq.s32.totalorder %s36, 3
      %p351 = scmp.ne.s32.totalorder %s346, %s348
      %p352 = scmp.eq.s32.totalorder %s36, 0
      %p353 = por %p351, %p352
      %p354 = scmp.ne.s32.totalorder %s346, %s348
      %p355 = scmp.eq.s32.totalorder %s41, 3
      %p356 = por %p354, %p355
      %p357 = scmp.ne.s32.totalorder %s348, %s349
      %p358 = scmp.eq.s32.totalorder %s41, 0
      %p359 = por %p357, %p358
      %p360 = scmp.ne.s32.totalorder %s348, %s349
      %p361 = scmp.eq.s32.totalorder %s42, 3
      %p362 = por %p360, %p361
      %p364 = scmp.ne.s32.totalorder %s349, %s363
      %p365 = scmp.eq.s32.totalorder %s42, 0
      %p366 = por %p364, %p365
      %s367 = ssub.s32 %s43, %s55
      %s368 = ssub.s32 %s44, %s51
      %s369 = sor.u32 %s367, %s368
      %p370 = scmp.eq.s32.totalorder %s369, 0
      %s372 = sadd.s32 %s371, 1
      %s373 = scalar_select %p370, %s371, %s372
      %p376 = pneg %p370
      %p377 = scmp.eq.s32.totalorder %s36, 3
      %p378 = por %p376, %p377
      %p379 = scmp.ne.s32.totalorder %s371, %s374
      %p380 = scmp.eq.s32.totalorder %s36, 0
      %p381 = por %p379, %p380
      %p382 = scmp.ne.s32.totalorder %s371, %s374
      %p383 = scmp.eq.s32.totalorder %s41, 3
      %p384 = por %p382, %p383
      %p385 = scmp.ne.s32.totalorder %s374, %s375
      %p386 = scmp.eq.s32.totalorder %s41, 0
      %p387 = por %p385, %p386
      %p388 = scmp.ne.s32.totalorder %s374, %s375
      %p389 = scmp.eq.s32.totalorder %s42, 3
      %p390 = por %p388, %p389
      %p392 = scmp.ne.s32.totalorder %s375, %s391
      %p393 = scmp.eq.s32.totalorder %s42, 0
      %p394 = por %p392, %p393
      %s395 = ssub.s32 %s43, %s55
      %s396 = ssub.s32 %s44, %s51
      %s397 = sor.u32 %s395, %s396
      %p398 = scmp.eq.s32.totalorder %s397, 0
      %s400 = sadd.s32 %s399, 1
      %s401 = scalar_select %p398, %s399, %s400
      %p404 = pneg %p398
      %p405 = scmp.eq.s32.totalorder %s36, 3
      %p406 = por %p404, %p405
      %p407 = scmp.ne.s32.totalorder %s399, %s402
      %p408 = scmp.eq.s32.totalorder %s36, 0
      %p409 = por %p407, %p408
      %p410 = scmp.ne.s32.totalorder %s399, %s402
      %p411 = scmp.eq.s32.totalorder %s41, 3
      %p412 = por %p410, %p411
      %p413 = scmp.ne.s32.totalorder %s402, %s403
      %p414 = scmp.eq.s32.totalorder %s41, 0
      %p415 = por %p413, %p414
      %p416 = scmp.ne.s32.totalorder %s402, %s403
      %p417 = scmp.eq.s32.totalorder %s42, 3
      %p418 = por %p416, %p417
      %p420 = scmp.ne.s32.totalorder %s403, %s419
      %p421 = scmp.eq.s32.totalorder %s42, 0
      %p422 = por %p420, %p421
      %p423 = scmp.le.s32.totalorder 1, %s36
      %p424 = scmp.lt.s32.totalorder %s36, 5
      %p425 = pnand %p423, %p424
      %p426 = pneg %p425
      // Predicated region
      $region9: #{tpu_custom_call.1} parent=5 // pred_check
        _
      $region10: #{tpu_custom_call.1} parent=5 // pred_check_branch
        %428 = sbr.rel (%p425) target = $region12
      $region11: #{tpu_custom_call.1} parent=5 // pred_region
        %s429 = ssub.s32 %s36, 1
        // Predicated region
        $region13: #{tpu_custom_call.1} parent=11 // pred_check
          %p430 = pneg %p149
        $region14: #{tpu_custom_call.1} parent=11 // pred_check_branch
          %432 = sbr.rel (%p430) target = $region16
        $region15: #{tpu_custom_call.1} parent=11 // pred_region
          _
        $region16: #{tpu_custom_call.1} parent=11 // pred_fallthru
          _
        // Predicated region
        $region17: #{tpu_custom_call.1} parent=11 // pred_check
          %p433 = pneg %p170
        $region18: #{tpu_custom_call.1} parent=11 // pred_check_branch
          %435 = sbr.rel (%p433) target = $region20
        $region19: #{tpu_custom_call.1} parent=11 // pred_region
          _
        $region20: #{tpu_custom_call.1} parent=11 // pred_fallthru
          _
        // Predicated region
        $region21: #{tpu_custom_call.1} parent=11 // pred_check
          %p436 = pneg %p191
        $region22: #{tpu_custom_call.1} parent=11 // pred_check_branch
          %438 = sbr.rel (%p436) target = $region24
        $region23: #{tpu_custom_call.1} parent=11 // pred_region
          _
        $region24: #{tpu_custom_call.1} parent=11 // pred_fallthru
          _
        // Predicated region
        $region25: #{tpu_custom_call.1} parent=11 // pred_check
          %p439 = pneg %p212
        $region26: #{tpu_custom_call.1} parent=11 // pred_check_branch
          %441 = sbr.rel (%p439) target = $region28
        $region27: #{tpu_custom_call.1} parent=11 // pred_region
          _
        $region28: #{tpu_custom_call.1} parent=11 // pred_fallthru
          _
        // Predicated region
        $region29: #{tpu_custom_call.1} parent=11 // pred_check
          %p442 = pneg %p233
        $region30: #{tpu_custom_call.1} parent=11 // pred_check_branch
          %444 = sbr.rel (%p442) target = $region32
        $region31: #{tpu_custom_call.1} parent=11 // pred_region
          _
        $region32: #{tpu_custom_call.1} parent=11 // pred_fallthru
          _
        // Predicated region
        $region33: #{tpu_custom_call.1} parent=11 // pred_check
          %p445 = pneg %p254
        $region34: #{tpu_custom_call.1} parent=11 // pred_check_branch
          %447 = sbr.rel (%p445) target = $region36
        $region35: #{tpu_custom_call.1} parent=11 // pred_region
          _
        $region36: #{tpu_custom_call.1} parent=11 // pred_fallthru
          _
        // Predicated region
        $region37: #{tpu_custom_call.1} parent=11 // pred_check
          %p448 = pneg %p275
        $region38: #{tpu_custom_call.1} parent=11 // pred_check_branch
          %450 = sbr.rel (%p448) target = $region40
        $region39: #{tpu_custom_call.1} parent=11 // pred_region
          %s452 = ssub.s32 1024, 1024
          %453 = vsyncadd [#allocation11], %s452
          %s454 = sshll.u32 [#allocation10], 4
          %s455 = int_to_ptr.vmem [resolvable:$true] %s454
          %460 = dma.hbm_to_vmem [thread:$0]  %s9, 1024, %s455, [#allocation11], 64, 64, 4
        $region40: #{tpu_custom_call.1} parent=11 // pred_fallthru
          _
        // Predicated region
        $region41: #{tpu_custom_call.1} parent=11 // pred_check
          %p461 = pneg %p296
        $region42: #{tpu_custom_call.1} parent=11 // pred_check_branch
          %463 = sbr.rel (%p461) target = $region44
        $region43: #{tpu_custom_call.1} parent=11 // pred_region
          %s465 = ssub.s32 1024, 1024
          %466 = vsyncadd [#allocation11], %s465
          %s467 = sshll.u32 [#allocation12], 4
          %s468 = int_to_ptr.vmem [resolvable:$true] %s467
          %473 = dma.hbm_to_vmem [thread:$0]  %s10, 1024, %s468, [#allocation11], 64, 64, 4
        $region44: #{tpu_custom_call.1} parent=11 // pred_fallthru
          _
        // Predicated region
        $region45: #{tpu_custom_call.1} parent=11 // pred_check
          %p474 = pneg %p317
        $region46: #{tpu_custom_call.1} parent=11 // pred_check_branch
          %476 = sbr.rel (%p474) target = $region48
        $region47: #{tpu_custom_call.1} parent=11 // pred_region
          %s478 = ssub.s32 1024, 1024
          %479 = vsyncadd [#allocation14], %s478
          %s480 = sshll.u32 [#allocation13], 4
          %s481 = int_to_ptr.vmem [resolvable:$true] %s480
          %486 = dma.hbm_to_vmem [thread:$0]  %s11, 1024, %s481, [#allocation14], 64, 64, 4
        $region48: #{tpu_custom_call.1} parent=11 // pred_fallthru
          _
        // Predicated region
        $region49: #{tpu_custom_call.1} parent=11 // pred_check
          %p487 = pneg %p338
        $region50: #{tpu_custom_call.1} parent=11 // pred_check_branch
          %489 = sbr.rel (%p487) target = $region52
        $region51: #{tpu_custom_call.1} parent=11 // pred_region
          %s491 = ssub.s32 1024, 1024
          %492 = vsyncadd [#allocation14], %s491
          %s493 = sshll.u32 [#allocation15], 4
          %s494 = int_to_ptr.vmem [resolvable:$true] %s493
          %499 = dma.hbm_to_vmem [thread:$0]  %s12, 1024, %s494, [#allocation14], 64, 64, 4
        $region52: #{tpu_custom_call.1} parent=11 // pred_fallthru
          _
        // Predicated region
        $region53: #{tpu_custom_call.1} parent=11 // pred_check
          %p500 = pneg %p359
        $region54: #{tpu_custom_call.1} parent=11 // pred_check_branch
          %502 = sbr.rel (%p500) target = $region56
        $region55: #{tpu_custom_call.1} parent=11 // pred_region
          _
        $region56: #{tpu_custom_call.1} parent=11 // pred_fallthru
          _
      $region12: #{tpu_custom_call.1} parent=5 // pred_fallthru
        _
      %p503 = scmp.lt.s32.totalorder %s36, 4
      // Predicated region
      $region57: #{tpu_custom_call.1} parent=5 // pred_check
        %p504 = pneg %p503
      $region58: #{tpu_custom_call.1} parent=5 // pred_check_branch
        %506 = sbr.rel (%p504) target = $region60
      $region59: #{tpu_custom_call.1} parent=5 // pred_region
        // Predicated region
        $region61: #{tpu_custom_call.1} parent=59 // pred_check
          %p507 = pneg %p70
        $region62: #{tpu_custom_call.1} parent=59 // pred_check_branch
          %509 = sbr.rel (%p507) target = $region64
        $region63: #{tpu_custom_call.1} parent=59 // pred_region
          %s510 = sand.u32 %s60, 1
          %s511 = scalar_lea.sflag [#allocation5], %s510
          %s512 = sand.u32 %s60, 1
          %s513 = smul.addr %s512, 128
          %s514 = scalar_lea.vmem [#allocation4], %s513
          %s515 = smul.u32 16, %s44
          %s517 = ssub.s32 2048, 2048
          %518 = vsyncadd %s511, %s517
          %s519 = smul.addr %s43, 32
          %s520 = sadd.s32 %s515, %s519
          %s521 = smul.addr %s520, 128
          %s522 = scalar_lea.hbm %s0, %s521
          %s523 = sshll.u32 %s514, 4
          %s524 = int_to_ptr.vmem [resolvable:$true] %s523
          %529 = dma.hbm_to_vmem [thread:$0]  %s522, 2048, %s524, %s511, 128, 128, 8
        $region64: #{tpu_custom_call.1} parent=59 // pred_fallthru
          _
        // Predicated region
        $region65: #{tpu_custom_call.1} parent=59 // pred_check
          %p530 = pneg %p96
        $region66: #{tpu_custom_call.1} parent=59 // pred_check_branch
          %532 = sbr.rel (%p530) target = $region68
        $region67: #{tpu_custom_call.1} parent=59 // pred_region
          %s533 = sand.u32 %s36, 1
          %s534 = scalar_lea.sflag [#allocation8], %s533
          %s535 = sand.u32 %s86, 1
          %s536 = smul.addr %s535, 256
          %s537 = scalar_lea.vmem [#allocation7], %s536
          %s539 = ssub.s32 4096, 4096
          %540 = vsyncadd %s534, %s539
          %s541 = smul.addr %s43, 32
          %s542 = smul.addr %s541, 128
          %s543 = scalar_lea.hbm %s1, %s542
          %s544 = sshll.u32 %s537, 4
          %s545 = int_to_ptr.vmem [resolvable:$true] %s544
          %550 = dma.hbm_to_vmem [thread:$0]  %s543, 4096, %s545, %s534, 128, 128, 8
        $region68: #{tpu_custom_call.1} parent=59 // pred_fallthru
          _
        // Predicated region
        $region69: #{tpu_custom_call.1} parent=59 // pred_check
          %p551 = pneg %p122
        $region70: #{tpu_custom_call.1} parent=59 // pred_check_branch
          %553 = sbr.rel (%p551) target = $region72
        $region71: #{tpu_custom_call.1} parent=59 // pred_region
          %s554 = sand.u32 %s36, 1
          %s555 = scalar_lea.sflag [#allocation8], %s554
          %s556 = sand.u32 %s112, 1
          %s557 = smul.addr %s556, 256
          %s558 = scalar_lea.vmem [#allocation9], %s557
          %s560 = ssub.s32 4096, 4096
          %561 = vsyncadd %s555, %s560
          %s562 = smul.addr %s43, 32
          %s563 = smul.addr %s562, 128
          %s564 = scalar_lea.hbm %s2, %s563
          %s565 = sshll.u32 %s558, 4
          %s566 = int_to_ptr.vmem [resolvable:$true] %s565
          %571 = dma.hbm_to_vmem [thread:$0]  %s564, 4096, %s566, %s555, 128, 128, 8
        $region72: #{tpu_custom_call.1} parent=59 // pred_fallthru
          _
      $region60: #{tpu_custom_call.1} parent=5 // pred_fallthru
        _
      %p572 = scmp.le.s32.totalorder 1, %s36
      %p573 = scmp.lt.s32.totalorder %s36, 5
      %p574 = pnand %p572, %p573
      %p575 = pneg %p574
      // Predicated region
      $region73: #{tpu_custom_call.1} parent=5 // pred_check
        _
      $region74: #{tpu_custom_call.1} parent=5 // pred_check_branch
        %577 = sbr.rel (%p574) target = $region76
      $region75: #{tpu_custom_call.1} parent=5 // pred_region
        %s578 = ssub.s32 %s36, 1
        %s579 = sand.u32 %s63, 1
        %s580 = scalar_lea.sflag [#allocation5], %s579
        %s581 = sand.u32 %s63, 1
        %s582 = smul.addr %s581, 128
        %s583 = scalar_lea.vmem [#allocation4], %s582
        // Predicated region
        $region77: #{tpu_custom_call.1} parent=75 // pred_check
          %p584 = pneg %p76
        $region78: #{tpu_custom_call.1} parent=75 // pred_check_branch
          %586 = sbr.rel (%p584) target = $region80
        $region79: #{tpu_custom_call.1} parent=75 // pred_region
          %587 = dma.done %s580, 2048
        $region80: #{tpu_custom_call.1} parent=75 // pred_fallthru
          _
        %s588 = sand.u32 %s41, 1
        %s589 = scalar_lea.sflag [#allocation8], %s588
        %s590 = sand.u32 %s89, 1
        %s591 = smul.addr %s590, 256
        %s592 = scalar_lea.vmem [#allocation7], %s591
        // Predicated region
        $region81: #{tpu_custom_call.1} parent=75 // pred_check
          %p593 = pneg %p102
        $region82: #{tpu_custom_call.1} parent=75 // pred_check_branch
          %595 = sbr.rel (%p593) target = $region84
        $region83: #{tpu_custom_call.1} parent=75 // pred_region
          %596 = dma.done %s589, 4096
        $region84: #{tpu_custom_call.1} parent=75 // pred_fallthru
          _
        %s597 = sand.u32 %s41, 1
        %s598 = scalar_lea.sflag [#allocation8], %s597
        %s599 = sand.u32 %s115, 1
        %s600 = smul.addr %s599, 256
        %s601 = scalar_lea.vmem [#allocation9], %s600
        // Predicated region
        $region85: #{tpu_custom_call.1} parent=75 // pred_check
          %p602 = pneg %p128
        $region86: #{tpu_custom_call.1} parent=75 // pred_check_branch
          %604 = sbr.rel (%p602) target = $region88
        $region87: #{tpu_custom_call.1} parent=75 // pred_region
          %605 = dma.done %s598, 4096
        $region88: #{tpu_custom_call.1} parent=75 // pred_fallthru
          _
        // Predicated region
        $region89: #{tpu_custom_call.1} parent=75 // pred_check
          %p606 = pneg %p275
        $region90: #{tpu_custom_call.1} parent=75 // pred_check_branch
          %608 = sbr.rel (%p606) target = $region92
        $region91: #{tpu_custom_call.1} parent=75 // pred_region
          %609 = dma.done [#allocation11], 1024
        $region92: #{tpu_custom_call.1} parent=75 // pred_fallthru
          _
        // Predicated region
        $region93: #{tpu_custom_call.1} parent=75 // pred_check
          %p610 = pneg %p296
        $region94: #{tpu_custom_call.1} parent=75 // pred_check_branch
          %612 = sbr.rel (%p610) target = $region96
        $region95: #{tpu_custom_call.1} parent=75 // pred_region
          %613 = dma.done [#allocation11], 1024
        $region96: #{tpu_custom_call.1} parent=75 // pred_fallthru
          _
        // Predicated region
        $region97: #{tpu_custom_call.1} parent=75 // pred_check
          %p614 = pneg %p317
        $region98: #{tpu_custom_call.1} parent=75 // pred_check_branch
          %616 = sbr.rel (%p614) target = $region100
        $region99: #{tpu_custom_call.1} parent=75 // pred_region
          %617 = dma.done [#allocation14], 1024
        $region100: #{tpu_custom_call.1} parent=75 // pred_fallthru
          _
        // Predicated region
        $region101: #{tpu_custom_call.1} parent=75 // pred_check
          %p618 = pneg %p338
        $region102: #{tpu_custom_call.1} parent=75 // pred_check_branch
          %620 = sbr.rel (%p618) target = $region104
        $region103: #{tpu_custom_call.1} parent=75 // pred_region
          %621 = dma.done [#allocation14], 1024
        $region104: #{tpu_custom_call.1} parent=75 // pred_fallthru
          _
        %s622 = sand.u32 %s63, 1
        %s623 = scalar_lea.sflag [#allocation5], %s622
        %s624 = sand.u32 %s63, 1
        %s625 = smul.addr %s624, 128
        %s626 = scalar_lea.vmem [#allocation4], %s625
        %p627 = pneg %p76
        %p628 = pneg %p73
        %s629 = sand.u32 %s41, 1
        %s630 = scalar_lea.sflag [#allocation8], %s629
        %s631 = sand.u32 %s89, 1
        %s632 = smul.addr %s631, 256
        %s633 = scalar_lea.vmem [#allocation7], %s632
        %p634 = pneg %p102
        %p635 = pneg %p99
        %s636 = sand.u32 %s41, 1
        %s637 = scalar_lea.sflag [#allocation8], %s636
        %s638 = sand.u32 %s115, 1
        %s639 = smul.addr %s638, 256
        %s640 = scalar_lea.vmem [#allocation9], %s639
        %p641 = pneg %p128
        %p642 = pneg %p125
        %p643 = pneg %p149
        %p644 = pneg %p146
        %p645 = pneg %p170
        %p646 = pneg %p167
        %p647 = pneg %p191
        %p648 = pneg %p188
        %p649 = pneg %p212
        %p650 = pneg %p209
        %p651 = pneg %p233
        %p652 = pneg %p230
        %p653 = pneg %p254
        %p654 = pneg %p251
        %p655 = pneg %p275
        %p656 = pneg %p272
        %p657 = pneg %p296
        %p658 = pneg %p293
        %p659 = pneg %p317
        %p660 = pneg %p314
        %p661 = pneg %p338
        %p662 = pneg %p335
        %p663 = pneg %p359
        %p664 = pneg %p356
        %p665 = pneg %p387
        %p666 = pneg %p384
        %s667 = sand.u32 %s374, 1
        %s668 = scalar_lea.sflag [#allocation6], %s667
        %s669 = sand.u32 %s374, 1
        %s670 = smul.addr %s669, 256
        %s671 = scalar_lea.vmem [#allocation16], %s670
        %p672 = pneg %p415
        %p673 = pneg %p412
        %s674 = sand.u32 %s402, 1
        %s675 = scalar_lea.sflag [#allocation18], %s674
        %s676 = sand.u32 %s402, 1
        %s677 = smul.addr %s676, 128
        %s678 = scalar_lea.vmem [#allocation17], %s677
        %s679 = smul.u32 16, %s46
        %s680 = smul.u32 16, %s46
        %s681 = smul.u32 16, %s46
        %p683 = scmp.eq.s32.totalorder %s46, 0
        // Predicated region
        $region105: #{tpu_custom_call.1} parent=75 // pred_check
          %p684 = pneg %p683
        $region106: #{tpu_custom_call.1} parent=75 // pred_check_branch
          %686 = sbr.rel (%p684) target = $region108
        $region107: #{tpu_custom_call.1} parent=75 // pred_region
          %v687 = vld [vmem:[%s592] sm:$0xff]
          %v688 = vld [vmem:[%s592 + $0x8] sm:$0xff]
          %v689 = vld [vmem:[%s592 + $0x10] sm:$0xff]
          %v690 = vld [vmem:[%s592 + $0x18] sm:$0xff]
          %v691 = vld [vmem:[%s592 + $0x20] sm:$0xff]
          %v692 = vld [vmem:[%s592 + $0x28] sm:$0xff]
          %v693 = vld [vmem:[%s592 + $0x30] sm:$0xff]
          %v694 = vld [vmem:[%s592 + $0x38] sm:$0xff]
          %v695 = vld [vmem:[%s592 + $0x40] sm:$0xff]
          %v696 = vld [vmem:[%s592 + $0x48] sm:$0xff]
          %v697 = vld [vmem:[%s592 + $0x50] sm:$0xff]
          %v698 = vld [vmem:[%s592 + $0x58] sm:$0xff]
          %v699 = vld [vmem:[%s592 + $0x60] sm:$0xff]
          %v700 = vld [vmem:[%s592 + $0x68] sm:$0xff]
          %v701 = vld [vmem:[%s592 + $0x70] sm:$0xff]
          %v702 = vld [vmem:[%s592 + $0x78] sm:$0xff]
          %v703 = vld [vmem:[%s592 + $0x80] sm:$0xff]
          %v704 = vld [vmem:[%s592 + $0x88] sm:$0xff]
          %v705 = vld [vmem:[%s592 + $0x90] sm:$0xff]
          %v706 = vld [vmem:[%s592 + $0x98] sm:$0xff]
          %v707 = vld [vmem:[%s592 + $0xa0] sm:$0xff]
          %v708 = vld [vmem:[%s592 + $0xa8] sm:$0xff]
          %v709 = vld [vmem:[%s592 + $0xb0] sm:$0xff]
          %v710 = vld [vmem:[%s592 + $0xb8] sm:$0xff]
          %v711 = vld [vmem:[%s592 + $0xc0] sm:$0xff]
          %v712 = vld [vmem:[%s592 + $0xc8] sm:$0xff]
          %v713 = vld [vmem:[%s592 + $0xd0] sm:$0xff]
          %v714 = vld [vmem:[%s592 + $0xd8] sm:$0xff]
          %v715 = vld [vmem:[%s592 + $0xe0] sm:$0xff]
          %v716 = vld [vmem:[%s592 + $0xe8] sm:$0xff]
          %v717 = vld [vmem:[%s592 + $0xf0] sm:$0xff]
          %v718 = vld [vmem:[%s592 + $0xf8] sm:$0xff]
          %v719 = vld [vmem:[%s5] sm:$0x1]
          %v720 = vld [vmem:[%s6] sm:$0x1]
          %721 = vadd.xlane.f32.xlu0 %v687
          %v722 = vpop.xlane.xlu0 %721
          %723 = vadd.xlane.f32.xlu0 %v688
          %v724 = vpop.xlane.xlu0 %723
          %725 = vadd.xlane.f32.xlu0 %v689
          %v726 = vpop.xlane.xlu0 %725
          %727 = vadd.xlane.f32.xlu0 %v690
          %v728 = vpop.xlane.xlu0 %727
          %729 = vadd.xlane.f32.xlu0 %v691
          %v730 = vpop.xlane.xlu0 %729
          %731 = vadd.xlane.f32.xlu0 %v692
          %v732 = vpop.xlane.xlu0 %731
          %733 = vadd.xlane.f32.xlu0 %v693
          %v734 = vpop.xlane.xlu0 %733
          %735 = vadd.xlane.f32.xlu0 %v694
          %v736 = vpop.xlane.xlu0 %735
          %737 = vadd.xlane.f32.xlu0 %v695
          %v738 = vpop.xlane.xlu0 %737
          %739 = vadd.xlane.f32.xlu0 %v696
          %v740 = vpop.xlane.xlu0 %739
          %741 = vadd.xlane.f32.xlu0 %v697
          %v742 = vpop.xlane.xlu0 %741
          %743 = vadd.xlane.f32.xlu0 %v698
          %v744 = vpop.xlane.xlu0 %743
          %745 = vadd.xlane.f32.xlu0 %v699
          %v746 = vpop.xlane.xlu0 %745
          %747 = vadd.xlane.f32.xlu0 %v700
          %v748 = vpop.xlane.xlu0 %747
          %749 = vadd.xlane.f32.xlu0 %v701
          %v750 = vpop.xlane.xlu0 %749
          %751 = vadd.xlane.f32.xlu0 %v702
          %v752 = vpop.xlane.xlu0 %751
          %753 = vadd.xlane.f32.xlu0 %v703
          %v754 = vpop.xlane.xlu0 %753
          %755 = vadd.xlane.f32.xlu0 %v704
          %v756 = vpop.xlane.xlu0 %755
          %757 = vadd.xlane.f32.xlu0 %v705
          %v758 = vpop.xlane.xlu0 %757
          %759 = vadd.xlane.f32.xlu0 %v706
          %v760 = vpop.xlane.xlu0 %759
          %761 = vadd.xlane.f32.xlu0 %v707
          %v762 = vpop.xlane.xlu0 %761
          %763 = vadd.xlane.f32.xlu0 %v708
          %v764 = vpop.xlane.xlu0 %763
          %765 = vadd.xlane.f32.xlu0 %v709
          %v766 = vpop.xlane.xlu0 %765
          %767 = vadd.xlane.f32.xlu0 %v710
          %v768 = vpop.xlane.xlu0 %767
          %769 = vadd.xlane.f32.xlu0 %v711
          %v770 = vpop.xlane.xlu0 %769
          %771 = vadd.xlane.f32.xlu0 %v712
          %v772 = vpop.xlane.xlu0 %771
          %773 = vadd.xlane.f32.xlu0 %v713
          %v774 = vpop.xlane.xlu0 %773
          %775 = vadd.xlane.f32.xlu0 %v714
          %v776 = vpop.xlane.xlu0 %775
          %777 = vadd.xlane.f32.xlu0 %v715
          %v778 = vpop.xlane.xlu0 %777
          %779 = vadd.xlane.f32.xlu0 %v716
          %v780 = vpop.xlane.xlu0 %779
          %781 = vadd.xlane.f32.xlu0 %v717
          %v782 = vpop.xlane.xlu0 %781
          %783 = vadd.xlane.f32.xlu0 %v718
          %v784 = vpop.xlane.xlu0 %783
          %v785 = vrcp.pop 128.0
          %v786 = vmul.f32 %v722, %v785
          %v787 = vmul.f32 %v724, %v785
          %v788 = vmul.f32 %v726, %v785
          %v789 = vmul.f32 %v728, %v785
          %v790 = vmul.f32 %v730, %v785
          %v791 = vmul.f32 %v732, %v785
          %v792 = vmul.f32 %v734, %v785
          %v793 = vmul.f32 %v736, %v785
          %v794 = vmul.f32 %v738, %v785
          %v795 = vmul.f32 %v740, %v785
          %v796 = vmul.f32 %v742, %v785
          %v797 = vmul.f32 %v744, %v785
          %v798 = vmul.f32 %v746, %v785
          %v799 = vmul.f32 %v748, %v785
          %v800 = vmul.f32 %v750, %v785
          %v801 = vmul.f32 %v752, %v785
          %v802 = vmul.f32 %v754, %v785
          %v803 = vmul.f32 %v756, %v785
          %v804 = vmul.f32 %v758, %v785
          %v805 = vmul.f32 %v760, %v785
          %v806 = vmul.f32 %v762, %v785
          %v807 = vmul.f32 %v764, %v785
          %v808 = vmul.f32 %v766, %v785
          %v809 = vmul.f32 %v768, %v785
          %v810 = vmul.f32 %v770, %v785
          %v811 = vmul.f32 %v772, %v785
          %v812 = vmul.f32 %v774, %v785
          %v813 = vmul.f32 %v776, %v785
          %v814 = vmul.f32 %v778, %v785
          %v815 = vmul.f32 %v780, %v785
          %v816 = vmul.f32 %v782, %v785
          %v817 = vmul.f32 %v784, %v785
          %v818 = vsub.f32 %v687, %v786
          %v819 = vsub.f32 %v688, %v787
          %v820 = vsub.f32 %v689, %v788
          %v821 = vsub.f32 %v690, %v789
          %v822 = vsub.f32 %v691, %v790
          %v823 = vsub.f32 %v692, %v791
          %v824 = vsub.f32 %v693, %v792
          %v825 = vsub.f32 %v694, %v793
          %v826 = vsub.f32 %v695, %v794
          %v827 = vsub.f32 %v696, %v795
          %v828 = vsub.f32 %v697, %v796
          %v829 = vsub.f32 %v698, %v797
          %v830 = vsub.f32 %v699, %v798
          %v831 = vsub.f32 %v700, %v799
          %v832 = vsub.f32 %v701, %v800
          %v833 = vsub.f32 %v702, %v801
          %v834 = vsub.f32 %v703, %v802
          %v835 = vsub.f32 %v704, %v803
          %v836 = vsub.f32 %v705, %v804
          %v837 = vsub.f32 %v706, %v805
          %v838 = vsub.f32 %v707, %v806
          %v839 = vsub.f32 %v708, %v807
          %v840 = vsub.f32 %v709, %v808
          %v841 = vsub.f32 %v710, %v809
          %v842 = vsub.f32 %v711, %v810
          %v843 = vsub.f32 %v712, %v811
          %v844 = vsub.f32 %v713, %v812
          %v845 = vsub.f32 %v714, %v813
          %v846 = vsub.f32 %v715, %v814
          %v847 = vsub.f32 %v716, %v815
          %v848 = vsub.f32 %v717, %v816
          %v849 = vsub.f32 %v718, %v817
          %v850 = vmul.f32 %v818, %v818
          %v851 = vmul.f32 %v819, %v819
          %v852 = vmul.f32 %v820, %v820
          %v853 = vmul.f32 %v821, %v821
          %v854 = vmul.f32 %v822, %v822
          %v855 = vmul.f32 %v823, %v823
          %v856 = vmul.f32 %v824, %v824
          %v857 = vmul.f32 %v825, %v825
          %v858 = vmul.f32 %v826, %v826
          %v859 = vmul.f32 %v827, %v827
          %v860 = vmul.f32 %v828, %v828
          %v861 = vmul.f32 %v829, %v829
          %v862 = vmul.f32 %v830, %v830
          %v863 = vmul.f32 %v831, %v831
          %v864 = vmul.f32 %v832, %v832
          %v865 = vmul.f32 %v833, %v833
          %v866 = vmul.f32 %v834, %v834
          %v867 = vmul.f32 %v835, %v835
          %v868 = vmul.f32 %v836, %v836
          %v869 = vmul.f32 %v837, %v837
          %v870 = vmul.f32 %v838, %v838
          %v871 = vmul.f32 %v839, %v839
          %v872 = vmul.f32 %v840, %v840
          %v873 = vmul.f32 %v841, %v841
          %v874 = vmul.f32 %v842, %v842
          %v875 = vmul.f32 %v843, %v843
          %v876 = vmul.f32 %v844, %v844
          %v877 = vmul.f32 %v845, %v845
          %v878 = vmul.f32 %v846, %v846
          %v879 = vmul.f32 %v847, %v847
          %v880 = vmul.f32 %v848, %v848
          %v881 = vmul.f32 %v849, %v849
          %882 = vadd.xlane.f32.xlu0 %v850
          %v883 = vpop.xlane.xlu0 %882
          %884 = vadd.xlane.f32.xlu0 %v851
          %v885 = vpop.xlane.xlu0 %884
          %886 = vadd.xlane.f32.xlu0 %v852
          %v887 = vpop.xlane.xlu0 %886
          %888 = vadd.xlane.f32.xlu0 %v853
          %v889 = vpop.xlane.xlu0 %888
          %890 = vadd.xlane.f32.xlu0 %v854
          %v891 = vpop.xlane.xlu0 %890
          %892 = vadd.xlane.f32.xlu0 %v855
          %v893 = vpop.xlane.xlu0 %892
          %894 = vadd.xlane.f32.xlu0 %v856
          %v895 = vpop.xlane.xlu0 %894
          %896 = vadd.xlane.f32.xlu0 %v857
          %v897 = vpop.xlane.xlu0 %896
          %898 = vadd.xlane.f32.xlu0 %v858
          %v899 = vpop.xlane.xlu0 %898
          %900 = vadd.xlane.f32.xlu0 %v859
          %v901 = vpop.xlane.xlu0 %900
          %902 = vadd.xlane.f32.xlu0 %v860
          %v903 = vpop.xlane.xlu0 %902
          %904 = vadd.xlane.f32.xlu0 %v861
          %v905 = vpop.xlane.xlu0 %904
          %906 = vadd.xlane.f32.xlu0 %v862
          %v907 = vpop.xlane.xlu0 %906
          %908 = vadd.xlane.f32.xlu0 %v863
          %v909 = vpop.xlane.xlu0 %908
          %910 = vadd.xlane.f32.xlu0 %v864
          %v911 = vpop.xlane.xlu0 %910
          %912 = vadd.xlane.f32.xlu0 %v865
          %v913 = vpop.xlane.xlu0 %912
          %914 = vadd.xlane.f32.xlu0 %v866
          %v915 = vpop.xlane.xlu0 %914
          %916 = vadd.xlane.f32.xlu0 %v867
          %v917 = vpop.xlane.xlu0 %916
          %918 = vadd.xlane.f32.xlu0 %v868
          %v919 = vpop.xlane.xlu0 %918
          %920 = vadd.xlane.f32.xlu0 %v869
          %v921 = vpop.xlane.xlu0 %920
          %922 = vadd.xlane.f32.xlu0 %v870
          %v923 = vpop.xlane.xlu0 %922
          %924 = vadd.xlane.f32.xlu0 %v871
          %v925 = vpop.xlane.xlu0 %924
          %926 = vadd.xlane.f32.xlu0 %v872
          %v927 = vpop.xlane.xlu0 %926
          %928 = vadd.xlane.f32.xlu0 %v873
          %v929 = vpop.xlane.xlu0 %928
          %930 = vadd.xlane.f32.xlu0 %v874
          %v931 = vpop.xlane.xlu0 %930
          %932 = vadd.xlane.f32.xlu0 %v875
          %v933 = vpop.xlane.xlu0 %932
          %934 = vadd.xlane.f32.xlu0 %v876
          %v935 = vpop.xlane.xlu0 %934
          %936 = vadd.xlane.f32.xlu0 %v877
          %v937 = vpop.xlane.xlu0 %936
          %938 = vadd.xlane.f32.xlu0 %v878
          %v939 = vpop.xlane.xlu0 %938
          %940 = vadd.xlane.f32.xlu0 %v879
          %v941 = vpop.xlane.xlu0 %940
          %942 = vadd.xlane.f32.xlu0 %v880
          %v943 = vpop.xlane.xlu0 %942
          %944 = vadd.xlane.f32.xlu0 %v881
          %v945 = vpop.xlane.xlu0 %944
          %v946 = vmul.f32 %v883, %v785
          %v947 = vmul.f32 %v885, %v785
          %v948 = vmul.f32 %v887, %v785
          %v949 = vmul.f32 %v889, %v785
          %v950 = vmul.f32 %v891, %v785
          %v951 = vmul.f32 %v893, %v785
          %v952 = vmul.f32 %v895, %v785
          %v953 = vmul.f32 %v897, %v785
          %v954 = vmul.f32 %v899, %v785
          %v955 = vmul.f32 %v901, %v785
          %v956 = vmul.f32 %v903, %v785
          %v957 = vmul.f32 %v905, %v785
          %v958 = vmul.f32 %v907, %v785
          %v959 = vmul.f32 %v909, %v785
          %v960 = vmul.f32 %v911, %v785
          %v961 = vmul.f32 %v913, %v785
          %v962 = vmul.f32 %v915, %v785
          %v963 = vmul.f32 %v917, %v785
          %v964 = vmul.f32 %v919, %v785
          %v965 = vmul.f32 %v921, %v785
          %v966 = vmul.f32 %v923, %v785
          %v967 = vmul.f32 %v925, %v785
          %v968 = vmul.f32 %v927, %v785
          %v969 = vmul.f32 %v929, %v785
          %v970 = vmul.f32 %v931, %v785
          %v971 = vmul.f32 %v933, %v785
          %v972 = vmul.f32 %v935, %v785
          %v973 = vmul.f32 %v937, %v785
          %v974 = vmul.f32 %v939, %v785
          %v975 = vmul.f32 %v941, %v785
          %v976 = vmul.f32 %v943, %v785
          %v977 = vmul.f32 %v945, %v785
          %v978 = vadd.f32 %v946, 1e-05
          %v979 = vadd.f32 %v947, 1e-05
          %v980 = vadd.f32 %v948, 1e-05
          %v981 = vadd.f32 %v949, 1e-05
          %v982 = vadd.f32 %v950, 1e-05
          %v983 = vadd.f32 %v951, 1e-05
          %v984 = vadd.f32 %v952, 1e-05
          %v985 = vadd.f32 %v953, 1e-05
          %v986 = vadd.f32 %v954, 1e-05
          %v987 = vadd.f32 %v955, 1e-05
          %v988 = vadd.f32 %v956, 1e-05
          %v989 = vadd.f32 %v957, 1e-05
          %v990 = vadd.f32 %v958, 1e-05
          %v991 = vadd.f32 %v959, 1e-05
          %v992 = vadd.f32 %v960, 1e-05
          %v993 = vadd.f32 %v961, 1e-05
          %v994 = vadd.f32 %v962, 1e-05
          %v995 = vadd.f32 %v963, 1e-05
          %v996 = vadd.f32 %v964, 1e-05
          %v997 = vadd.f32 %v965, 1e-05
          %v998 = vadd.f32 %v966, 1e-05
          %v999 = vadd.f32 %v967, 1e-05
          %v1000 = vadd.f32 %v968, 1e-05
          %v1001 = vadd.f32 %v969, 1e-05
          %v1002 = vadd.f32 %v970, 1e-05
          %v1003 = vadd.f32 %v971, 1e-05
          %v1004 = vadd.f32 %v972, 1e-05
          %v1005 = vadd.f32 %v973, 1e-05
          %v1006 = vadd.f32 %v974, 1e-05
          %v1007 = vadd.f32 %v975, 1e-05
          %v1008 = vadd.f32 %v976, 1e-05
          %v1009 = vadd.f32 %v977, 1e-05
          %v1010 = vrsqrt.pop %v978
          %v1011 = vrsqrt.pop %v979
          %v1012 = vrsqrt.pop %v980
          %v1013 = vrsqrt.pop %v981
          %v1014 = vrsqrt.pop %v982
          %v1015 = vrsqrt.pop %v983
          %v1016 = vrsqrt.pop %v984
          %v1017 = vrsqrt.pop %v985
          %v1018 = vrsqrt.pop %v986
          %v1019 = vrsqrt.pop %v987
          %v1020 = vrsqrt.pop %v988
          %v1021 = vrsqrt.pop %v989
          %v1022 = vrsqrt.pop %v990
          %v1023 = vrsqrt.pop %v991
          %v1024 = vrsqrt.pop %v992
          %v1025 = vrsqrt.pop %v993
          %v1026 = vrsqrt.pop %v994
          %v1027 = vrsqrt.pop %v995
          %v1028 = vrsqrt.pop %v996
          %v1029 = vrsqrt.pop %v997
          %v1030 = vrsqrt.pop %v998
          %v1031 = vrsqrt.pop %v999
          %v1032 = vrsqrt.pop %v1000
          %v1033 = vrsqrt.pop %v1001
          %v1034 = vrsqrt.pop %v1002
          %v1035 = vrsqrt.pop %v1003
          %v1036 = vrsqrt.pop %v1004
          %v1037 = vrsqrt.pop %v1005
          %v1038 = vrsqrt.pop %v1006
          %v1039 = vrsqrt.pop %v1007
          %v1040 = vrsqrt.pop %v1008
          %v1041 = vrsqrt.pop %v1009
          %v1042 = vmul.f32 %v818, %v1010
          %v1043 = vmul.f32 %v819, %v1011
          %v1044 = vmul.f32 %v820, %v1012
          %v1045 = vmul.f32 %v821, %v1013
          %v1046 = vmul.f32 %v822, %v1014
          %v1047 = vmul.f32 %v823, %v1015
          %v1048 = vmul.f32 %v824, %v1016
          %v1049 = vmul.f32 %v825, %v1017
          %v1050 = vmul.f32 %v826, %v1018
          %v1051 = vmul.f32 %v827, %v1019
          %v1052 = vmul.f32 %v828, %v1020
          %v1053 = vmul.f32 %v829, %v1021
          %v1054 = vmul.f32 %v830, %v1022
          %v1055 = vmul.f32 %v831, %v1023
          %v1056 = vmul.f32 %v832, %v1024
          %v1057 = vmul.f32 %v833, %v1025
          %v1058 = vmul.f32 %v834, %v1026
          %v1059 = vmul.f32 %v835, %v1027
          %v1060 = vmul.f32 %v836, %v1028
          %v1061 = vmul.f32 %v837, %v1029
          %v1062 = vmul.f32 %v838, %v1030
          %v1063 = vmul.f32 %v839, %v1031
          %v1064 = vmul.f32 %v840, %v1032
          %v1065 = vmul.f32 %v841, %v1033
          %v1066 = vmul.f32 %v842, %v1034
          %v1067 = vmul.f32 %v843, %v1035
          %v1068 = vmul.f32 %v844, %v1036
          %v1069 = vmul.f32 %v845, %v1037
          %v1070 = vmul.f32 %v846, %v1038
          %v1071 = vmul.f32 %v847, %v1039
          %v1072 = vmul.f32 %v848, %v1040
          %v1073 = vmul.f32 %v849, %v1041
          %v1075 = vlaneseq
          %v1076 = vshrl.u32 %v1075, 7
          %v1077 = vsub.s32 0, %v1076
          %v1078 = vrot.slane %v719, %v1077
          %v1080 = vmul.f32 %v1042, %v1078
          %v1081 = vmul.f32 %v1043, %v1078
          %v1082 = vmul.f32 %v1044, %v1078
          %v1083 = vmul.f32 %v1045, %v1078
          %v1084 = vmul.f32 %v1046, %v1078
          %v1085 = vmul.f32 %v1047, %v1078
          %v1086 = vmul.f32 %v1048, %v1078
          %v1087 = vmul.f32 %v1049, %v1078
          %v1088 = vmul.f32 %v1050, %v1078
          %v1089 = vmul.f32 %v1051, %v1078
          %v1090 = vmul.f32 %v1052, %v1078
          %v1091 = vmul.f32 %v1053, %v1078
          %v1092 = vmul.f32 %v1054, %v1078
          %v1093 = vmul.f32 %v1055, %v1078
          %v1094 = vmul.f32 %v1056, %v1078
          %v1095 = vmul.f32 %v1057, %v1078
          %v1096 = vmul.f32 %v1058, %v1078
          %v1097 = vmul.f32 %v1059, %v1078
          %v1098 = vmul.f32 %v1060, %v1078
          %v1099 = vmul.f32 %v1061, %v1078
          %v1100 = vmul.f32 %v1062, %v1078
          %v1101 = vmul.f32 %v1063, %v1078
          %v1102 = vmul.f32 %v1064, %v1078
          %v1103 = vmul.f32 %v1065, %v1078
          %v1104 = vmul.f32 %v1066, %v1078
          %v1105 = vmul.f32 %v1067, %v1078
          %v1106 = vmul.f32 %v1068, %v1078
          %v1107 = vmul.f32 %v1069, %v1078
          %v1108 = vmul.f32 %v1070, %v1078
          %v1109 = vmul.f32 %v1071, %v1078
          %v1110 = vmul.f32 %v1072, %v1078
          %v1111 = vmul.f32 %v1073, %v1078
          %v1113 = vlaneseq
          %v1114 = vshrl.u32 %v1113, 7
          %v1115 = vsub.s32 0, %v1114
          %v1116 = vrot.slane %v720, %v1115
          %v1118 = vadd.f32 %v1080, %v1116
          %v1119 = vadd.f32 %v1081, %v1116
          %v1120 = vadd.f32 %v1082, %v1116
          %v1121 = vadd.f32 %v1083, %v1116
          %v1122 = vadd.f32 %v1084, %v1116
          %v1123 = vadd.f32 %v1085, %v1116
          %v1124 = vadd.f32 %v1086, %v1116
          %v1125 = vadd.f32 %v1087, %v1116
          %v1126 = vadd.f32 %v1088, %v1116
          %v1127 = vadd.f32 %v1089, %v1116
          %v1128 = vadd.f32 %v1090, %v1116
          %v1129 = vadd.f32 %v1091, %v1116
          %v1130 = vadd.f32 %v1092, %v1116
          %v1131 = vadd.f32 %v1093, %v1116
          %v1132 = vadd.f32 %v1094, %v1116
          %v1133 = vadd.f32 %v1095, %v1116
          %v1134 = vadd.f32 %v1096, %v1116
          %v1135 = vadd.f32 %v1097, %v1116
          %v1136 = vadd.f32 %v1098, %v1116
          %v1137 = vadd.f32 %v1099, %v1116
          %v1138 = vadd.f32 %v1100, %v1116
          %v1139 = vadd.f32 %v1101, %v1116
          %v1140 = vadd.f32 %v1102, %v1116
          %v1141 = vadd.f32 %v1103, %v1116
          %v1142 = vadd.f32 %v1104, %v1116
          %v1143 = vadd.f32 %v1105, %v1116
          %v1144 = vadd.f32 %v1106, %v1116
          %v1145 = vadd.f32 %v1107, %v1116
          %v1146 = vadd.f32 %v1108, %v1116
          %v1147 = vadd.f32 %v1109, %v1116
          %v1148 = vadd.f32 %v1110, %v1116
          %v1149 = vadd.f32 %v1111, %v1116
          %v1150 = vld [vmem:[%s601] sm:$0xff]
          %v1151 = vld [vmem:[%s601 + $0x8] sm:$0xff]
          %v1152 = vld [vmem:[%s601 + $0x10] sm:$0xff]
          %v1153 = vld [vmem:[%s601 + $0x18] sm:$0xff]
          %v1154 = vld [vmem:[%s601 + $0x20] sm:$0xff]
          %v1155 = vld [vmem:[%s601 + $0x28] sm:$0xff]
          %v1156 = vld [vmem:[%s601 + $0x30] sm:$0xff]
          %v1157 = vld [vmem:[%s601 + $0x38] sm:$0xff]
          %v1158 = vld [vmem:[%s601 + $0x40] sm:$0xff]
          %v1159 = vld [vmem:[%s601 + $0x48] sm:$0xff]
          %v1160 = vld [vmem:[%s601 + $0x50] sm:$0xff]
          %v1161 = vld [vmem:[%s601 + $0x58] sm:$0xff]
          %v1162 = vld [vmem:[%s601 + $0x60] sm:$0xff]
          %v1163 = vld [vmem:[%s601 + $0x68] sm:$0xff]
          %v1164 = vld [vmem:[%s601 + $0x70] sm:$0xff]
          %v1165 = vld [vmem:[%s601 + $0x78] sm:$0xff]
          %v1166 = vld [vmem:[%s601 + $0x80] sm:$0xff]
          %v1167 = vld [vmem:[%s601 + $0x88] sm:$0xff]
          %v1168 = vld [vmem:[%s601 + $0x90] sm:$0xff]
          %v1169 = vld [vmem:[%s601 + $0x98] sm:$0xff]
          %v1170 = vld [vmem:[%s601 + $0xa0] sm:$0xff]
          %v1171 = vld [vmem:[%s601 + $0xa8] sm:$0xff]
          %v1172 = vld [vmem:[%s601 + $0xb0] sm:$0xff]
          %v1173 = vld [vmem:[%s601 + $0xb8] sm:$0xff]
          %v1174 = vld [vmem:[%s601 + $0xc0] sm:$0xff]
          %v1175 = vld [vmem:[%s601 + $0xc8] sm:$0xff]
          %v1176 = vld [vmem:[%s601 + $0xd0] sm:$0xff]
          %v1177 = vld [vmem:[%s601 + $0xd8] sm:$0xff]
          %v1178 = vld [vmem:[%s601 + $0xe0] sm:$0xff]
          %v1179 = vld [vmem:[%s601 + $0xe8] sm:$0xff]
          %v1180 = vld [vmem:[%s601 + $0xf0] sm:$0xff]
          %v1181 = vld [vmem:[%s601 + $0xf8] sm:$0xff]
          %v1182 = vld [vmem:[%s7] sm:$0x1]
          %v1183 = vld [vmem:[%s8] sm:$0x1]
          %1184 = vadd.xlane.f32.xlu0 %v1150
          %v1185 = vpop.xlane.xlu0 %1184
          %1186 = vadd.xlane.f32.xlu0 %v1151
          %v1187 = vpop.xlane.xlu0 %1186
          %1188 = vadd.xlane.f32.xlu0 %v1152
          %v1189 = vpop.xlane.xlu0 %1188
          %1190 = vadd.xlane.f32.xlu0 %v1153
          %v1191 = vpop.xlane.xlu0 %1190
          %1192 = vadd.xlane.f32.xlu0 %v1154
          %v1193 = vpop.xlane.xlu0 %1192
          %1194 = vadd.xlane.f32.xlu0 %v1155
          %v1195 = vpop.xlane.xlu0 %1194
          %1196 = vadd.xlane.f32.xlu0 %v1156
          %v1197 = vpop.xlane.xlu0 %1196
          %1198 = vadd.xlane.f32.xlu0 %v1157
          %v1199 = vpop.xlane.xlu0 %1198
          %1200 = vadd.xlane.f32.xlu0 %v1158
          %v1201 = vpop.xlane.xlu0 %1200
          %1202 = vadd.xlane.f32.xlu0 %v1159
          %v1203 = vpop.xlane.xlu0 %1202
          %1204 = vadd.xlane.f32.xlu0 %v1160
          %v1205 = vpop.xlane.xlu0 %1204
          %1206 = vadd.xlane.f32.xlu0 %v1161
          %v1207 = vpop.xlane.xlu0 %1206
          %1208 = vadd.xlane.f32.xlu0 %v1162
          %v1209 = vpop.xlane.xlu0 %1208
          %1210 = vadd.xlane.f32.xlu0 %v1163
          %v1211 = vpop.xlane.xlu0 %1210
          %1212 = vadd.xlane.f32.xlu0 %v1164
          %v1213 = vpop.xlane.xlu0 %1212
          %1214 = vadd.xlane.f32.xlu0 %v1165
          %v1215 = vpop.xlane.xlu0 %1214
          %1216 = vadd.xlane.f32.xlu0 %v1166
          %v1217 = vpop.xlane.xlu0 %1216
          %1218 = vadd.xlane.f32.xlu0 %v1167
          %v1219 = vpop.xlane.xlu0 %1218
          %1220 = vadd.xlane.f32.xlu0 %v1168
          %v1221 = vpop.xlane.xlu0 %1220
          %1222 = vadd.xlane.f32.xlu0 %v1169
          %v1223 = vpop.xlane.xlu0 %1222
          %1224 = vadd.xlane.f32.xlu0 %v1170
          %v1225 = vpop.xlane.xlu0 %1224
          %1226 = vadd.xlane.f32.xlu0 %v1171
          %v1227 = vpop.xlane.xlu0 %1226
          %1228 = vadd.xlane.f32.xlu0 %v1172
          %v1229 = vpop.xlane.xlu0 %1228
          %1230 = vadd.xlane.f32.xlu0 %v1173
          %v1231 = vpop.xlane.xlu0 %1230
          %1232 = vadd.xlane.f32.xlu0 %v1174
          %v1233 = vpop.xlane.xlu0 %1232
          %1234 = vadd.xlane.f32.xlu0 %v1175
          %v1235 = vpop.xlane.xlu0 %1234
          %1236 = vadd.xlane.f32.xlu0 %v1176
          %v1237 = vpop.xlane.xlu0 %1236
          %1238 = vadd.xlane.f32.xlu0 %v1177
          %v1239 = vpop.xlane.xlu0 %1238
          %1240 = vadd.xlane.f32.xlu0 %v1178
          %v1241 = vpop.xlane.xlu0 %1240
          %1242 = vadd.xlane.f32.xlu0 %v1179
          %v1243 = vpop.xlane.xlu0 %1242
          %1244 = vadd.xlane.f32.xlu0 %v1180
          %v1245 = vpop.xlane.xlu0 %1244
          %1246 = vadd.xlane.f32.xlu0 %v1181
          %v1247 = vpop.xlane.xlu0 %1246
          %v1248 = vmul.f32 %v1185, %v785
          %v1249 = vmul.f32 %v1187, %v785
          %v1250 = vmul.f32 %v1189, %v785
          %v1251 = vmul.f32 %v1191, %v785
          %v1252 = vmul.f32 %v1193, %v785
          %v1253 = vmul.f32 %v1195, %v785
          %v1254 = vmul.f32 %v1197, %v785
          %v1255 = vmul.f32 %v1199, %v785
          %v1256 = vmul.f32 %v1201, %v785
          %v1257 = vmul.f32 %v1203, %v785
          %v1258 = vmul.f32 %v1205, %v785
          %v1259 = vmul.f32 %v1207, %v785
          %v1260 = vmul.f32 %v1209, %v785
          %v1261 = vmul.f32 %v1211, %v785
          %v1262 = vmul.f32 %v1213, %v785
          %v1263 = vmul.f32 %v1215, %v785
          %v1264 = vmul.f32 %v1217, %v785
          %v1265 = vmul.f32 %v1219, %v785
          %v1266 = vmul.f32 %v1221, %v785
          %v1267 = vmul.f32 %v1223, %v785
          %v1268 = vmul.f32 %v1225, %v785
          %v1269 = vmul.f32 %v1227, %v785
          %v1270 = vmul.f32 %v1229, %v785
          %v1271 = vmul.f32 %v1231, %v785
          %v1272 = vmul.f32 %v1233, %v785
          %v1273 = vmul.f32 %v1235, %v785
          %v1274 = vmul.f32 %v1237, %v785
          %v1275 = vmul.f32 %v1239, %v785
          %v1276 = vmul.f32 %v1241, %v785
          %v1277 = vmul.f32 %v1243, %v785
          %v1278 = vmul.f32 %v1245, %v785
          %v1279 = vmul.f32 %v1247, %v785
          %v1280 = vsub.f32 %v1150, %v1248
          %v1281 = vsub.f32 %v1151, %v1249
          %v1282 = vsub.f32 %v1152, %v1250
          %v1283 = vsub.f32 %v1153, %v1251
          %v1284 = vsub.f32 %v1154, %v1252
          %v1285 = vsub.f32 %v1155, %v1253
          %v1286 = vsub.f32 %v1156, %v1254
          %v1287 = vsub.f32 %v1157, %v1255
          %v1288 = vsub.f32 %v1158, %v1256
          %v1289 = vsub.f32 %v1159, %v1257
          %v1290 = vsub.f32 %v1160, %v1258
          %v1291 = vsub.f32 %v1161, %v1259
          %v1292 = vsub.f32 %v1162, %v1260
          %v1293 = vsub.f32 %v1163, %v1261
          %v1294 = vsub.f32 %v1164, %v1262
          %v1295 = vsub.f32 %v1165, %v1263
          %v1296 = vsub.f32 %v1166, %v1264
          %v1297 = vsub.f32 %v1167, %v1265
          %v1298 = vsub.f32 %v1168, %v1266
          %v1299 = vsub.f32 %v1169, %v1267
          %v1300 = vsub.f32 %v1170, %v1268
          %v1301 = vsub.f32 %v1171, %v1269
          %v1302 = vsub.f32 %v1172, %v1270
          %v1303 = vsub.f32 %v1173, %v1271
          %v1304 = vsub.f32 %v1174, %v1272
          %v1305 = vsub.f32 %v1175, %v1273
          %v1306 = vsub.f32 %v1176, %v1274
          %v1307 = vsub.f32 %v1177, %v1275
          %v1308 = vsub.f32 %v1178, %v1276
          %v1309 = vsub.f32 %v1179, %v1277
          %v1310 = vsub.f32 %v1180, %v1278
          %v1311 = vsub.f32 %v1181, %v1279
          %v1312 = vmul.f32 %v1280, %v1280
          %v1313 = vmul.f32 %v1281, %v1281
          %v1314 = vmul.f32 %v1282, %v1282
          %v1315 = vmul.f32 %v1283, %v1283
          %v1316 = vmul.f32 %v1284, %v1284
          %v1317 = vmul.f32 %v1285, %v1285
          %v1318 = vmul.f32 %v1286, %v1286
          %v1319 = vmul.f32 %v1287, %v1287
          %v1320 = vmul.f32 %v1288, %v1288
          %v1321 = vmul.f32 %v1289, %v1289
          %v1322 = vmul.f32 %v1290, %v1290
          %v1323 = vmul.f32 %v1291, %v1291
          %v1324 = vmul.f32 %v1292, %v1292
          %v1325 = vmul.f32 %v1293, %v1293
          %v1326 = vmul.f32 %v1294, %v1294
          %v1327 = vmul.f32 %v1295, %v1295
          %v1328 = vmul.f32 %v1296, %v1296
          %v1329 = vmul.f32 %v1297, %v1297
          %v1330 = vmul.f32 %v1298, %v1298
          %v1331 = vmul.f32 %v1299, %v1299
          %v1332 = vmul.f32 %v1300, %v1300
          %v1333 = vmul.f32 %v1301, %v1301
          %v1334 = vmul.f32 %v1302, %v1302
          %v1335 = vmul.f32 %v1303, %v1303
          %v1336 = vmul.f32 %v1304, %v1304
          %v1337 = vmul.f32 %v1305, %v1305
          %v1338 = vmul.f32 %v1306, %v1306
          %v1339 = vmul.f32 %v1307, %v1307
          %v1340 = vmul.f32 %v1308, %v1308
          %v1341 = vmul.f32 %v1309, %v1309
          %v1342 = vmul.f32 %v1310, %v1310
          %v1343 = vmul.f32 %v1311, %v1311
          %1344 = vadd.xlane.f32.xlu0 %v1312
          %v1345 = vpop.xlane.xlu0 %1344
          %1346 = vadd.xlane.f32.xlu0 %v1313
          %v1347 = vpop.xlane.xlu0 %1346
          %1348 = vadd.xlane.f32.xlu0 %v1314
          %v1349 = vpop.xlane.xlu0 %1348
          %1350 = vadd.xlane.f32.xlu0 %v1315
          %v1351 = vpop.xlane.xlu0 %1350
          %1352 = vadd.xlane.f32.xlu0 %v1316
          %v1353 = vpop.xlane.xlu0 %1352
          %1354 = vadd.xlane.f32.xlu0 %v1317
          %v1355 = vpop.xlane.xlu0 %1354
          %1356 = vadd.xlane.f32.xlu0 %v1318
          %v1357 = vpop.xlane.xlu0 %1356
          %1358 = vadd.xlane.f32.xlu0 %v1319
          %v1359 = vpop.xlane.xlu0 %1358
          %1360 = vadd.xlane.f32.xlu0 %v1320
          %v1361 = vpop.xlane.xlu0 %1360
          %1362 = vadd.xlane.f32.xlu0 %v1321
          %v1363 = vpop.xlane.xlu0 %1362
          %1364 = vadd.xlane.f32.xlu0 %v1322
          %v1365 = vpop.xlane.xlu0 %1364
          %1366 = vadd.xlane.f32.xlu0 %v1323
          %v1367 = vpop.xlane.xlu0 %1366
          %1368 = vadd.xlane.f32.xlu0 %v1324
          %v1369 = vpop.xlane.xlu0 %1368
          %1370 = vadd.xlane.f32.xlu0 %v1325
          %v1371 = vpop.xlane.xlu0 %1370
          %1372 = vadd.xlane.f32.xlu0 %v1326
          %v1373 = vpop.xlane.xlu0 %1372
          %1374 = vadd.xlane.f32.xlu0 %v1327
          %v1375 = vpop.xlane.xlu0 %1374
          %1376 = vadd.xlane.f32.xlu0 %v1328
          %v1377 = vpop.xlane.xlu0 %1376
          %1378 = vadd.xlane.f32.xlu0 %v1329
          %v1379 = vpop.xlane.xlu0 %1378
          %1380 = vadd.xlane.f32.xlu0 %v1330
          %v1381 = vpop.xlane.xlu0 %1380
          %1382 = vadd.xlane.f32.xlu0 %v1331
          %v1383 = vpop.xlane.xlu0 %1382
          %1384 = vadd.xlane.f32.xlu0 %v1332
          %v1385 = vpop.xlane.xlu0 %1384
          %1386 = vadd.xlane.f32.xlu0 %v1333
          %v1387 = vpop.xlane.xlu0 %1386
          %1388 = vadd.xlane.f32.xlu0 %v1334
          %v1389 = vpop.xlane.xlu0 %1388
          %1390 = vadd.xlane.f32.xlu0 %v1335
          %v1391 = vpop.xlane.xlu0 %1390
          %1392 = vadd.xlane.f32.xlu0 %v1336
          %v1393 = vpop.xlane.xlu0 %1392
          %1394 = vadd.xlane.f32.xlu0 %v1337
          %v1395 = vpop.xlane.xlu0 %1394
          %1396 = vadd.xlane.f32.xlu0 %v1338
          %v1397 = vpop.xlane.xlu0 %1396
          %1398 = vadd.xlane.f32.xlu0 %v1339
          %v1399 = vpop.xlane.xlu0 %1398
          %1400 = vadd.xlane.f32.xlu0 %v1340
          %v1401 = vpop.xlane.xlu0 %1400
          %1402 = vadd.xlane.f32.xlu0 %v1341
          %v1403 = vpop.xlane.xlu0 %1402
          %1404 = vadd.xlane.f32.xlu0 %v1342
          %v1405 = vpop.xlane.xlu0 %1404
          %1406 = vadd.xlane.f32.xlu0 %v1343
          %v1407 = vpop.xlane.xlu0 %1406
          %v1408 = vmul.f32 %v1345, %v785
          %v1409 = vmul.f32 %v1347, %v785
          %v1410 = vmul.f32 %v1349, %v785
          %v1411 = vmul.f32 %v1351, %v785
          %v1412 = vmul.f32 %v1353, %v785
          %v1413 = vmul.f32 %v1355, %v785
          %v1414 = vmul.f32 %v1357, %v785
          %v1415 = vmul.f32 %v1359, %v785
          %v1416 = vmul.f32 %v1361, %v785
          %v1417 = vmul.f32 %v1363, %v785
          %v1418 = vmul.f32 %v1365, %v785
          %v1419 = vmul.f32 %v1367, %v785
          %v1420 = vmul.f32 %v1369, %v785
          %v1421 = vmul.f32 %v1371, %v785
          %v1422 = vmul.f32 %v1373, %v785
          %v1423 = vmul.f32 %v1375, %v785
          %v1424 = vmul.f32 %v1377, %v785
          %v1425 = vmul.f32 %v1379, %v785
          %v1426 = vmul.f32 %v1381, %v785
          %v1427 = vmul.f32 %v1383, %v785
          %v1428 = vmul.f32 %v1385, %v785
          %v1429 = vmul.f32 %v1387, %v785
          %v1430 = vmul.f32 %v1389, %v785
          %v1431 = vmul.f32 %v1391, %v785
          %v1432 = vmul.f32 %v1393, %v785
          %v1433 = vmul.f32 %v1395, %v785
          %v1434 = vmul.f32 %v1397, %v785
          %v1435 = vmul.f32 %v1399, %v785
          %v1436 = vmul.f32 %v1401, %v785
          %v1437 = vmul.f32 %v1403, %v785
          %v1438 = vmul.f32 %v1405, %v785
          %v1439 = vmul.f32 %v1407, %v785
          %v1440 = vadd.f32 %v1408, 1e-05
          %v1441 = vadd.f32 %v1409, 1e-05
          %v1442 = vadd.f32 %v1410, 1e-05
          %v1443 = vadd.f32 %v1411, 1e-05
          %v1444 = vadd.f32 %v1412, 1e-05
          %v1445 = vadd.f32 %v1413, 1e-05
          %v1446 = vadd.f32 %v1414, 1e-05
          %v1447 = vadd.f32 %v1415, 1e-05
          %v1448 = vadd.f32 %v1416, 1e-05
          %v1449 = vadd.f32 %v1417, 1e-05
          %v1450 = vadd.f32 %v1418, 1e-05
          %v1451 = vadd.f32 %v1419, 1e-05
          %v1452 = vadd.f32 %v1420, 1e-05
          %v1453 = vadd.f32 %v1421, 1e-05
          %v1454 = vadd.f32 %v1422, 1e-05
          %v1455 = vadd.f32 %v1423, 1e-05
          %v1456 = vadd.f32 %v1424, 1e-05
          %v1457 = vadd.f32 %v1425, 1e-05
          %v1458 = vadd.f32 %v1426, 1e-05
          %v1459 = vadd.f32 %v1427, 1e-05
          %v1460 = vadd.f32 %v1428, 1e-05
          %v1461 = vadd.f32 %v1429, 1e-05
          %v1462 = vadd.f32 %v1430, 1e-05
          %v1463 = vadd.f32 %v1431, 1e-05
          %v1464 = vadd.f32 %v1432, 1e-05
          %v1465 = vadd.f32 %v1433, 1e-05
          %v1466 = vadd.f32 %v1434, 1e-05
          %v1467 = vadd.f32 %v1435, 1e-05
          %v1468 = vadd.f32 %v1436, 1e-05
          %v1469 = vadd.f32 %v1437, 1e-05
          %v1470 = vadd.f32 %v1438, 1e-05
          %v1471 = vadd.f32 %v1439, 1e-05
          %v1472 = vrsqrt.pop %v1440
          %v1473 = vrsqrt.pop %v1441
          %v1474 = vrsqrt.pop %v1442
          %v1475 = vrsqrt.pop %v1443
          %v1476 = vrsqrt.pop %v1444
          %v1477 = vrsqrt.pop %v1445
          %v1478 = vrsqrt.pop %v1446
          %v1479 = vrsqrt.pop %v1447
          %v1480 = vrsqrt.pop %v1448
          %v1481 = vrsqrt.pop %v1449
          %v1482 = vrsqrt.pop %v1450
          %v1483 = vrsqrt.pop %v1451
          %v1484 = vrsqrt.pop %v1452
          %v1485 = vrsqrt.pop %v1453
          %v1486 = vrsqrt.pop %v1454
          %v1487 = vrsqrt.pop %v1455
          %v1488 = vrsqrt.pop %v1456
          %v1489 = vrsqrt.pop %v1457
          %v1490 = vrsqrt.pop %v1458
          %v1491 = vrsqrt.pop %v1459
          %v1492 = vrsqrt.pop %v1460
          %v1493 = vrsqrt.pop %v1461
          %v1494 = vrsqrt.pop %v1462
          %v1495 = vrsqrt.pop %v1463
          %v1496 = vrsqrt.pop %v1464
          %v1497 = vrsqrt.pop %v1465
          %v1498 = vrsqrt.pop %v1466
          %v1499 = vrsqrt.pop %v1467
          %v1500 = vrsqrt.pop %v1468
          %v1501 = vrsqrt.pop %v1469
          %v1502 = vrsqrt.pop %v1470
          %v1503 = vrsqrt.pop %v1471
          %v1504 = vmul.f32 %v1280, %v1472
          %v1505 = vmul.f32 %v1281, %v1473
          %v1506 = vmul.f32 %v1282, %v1474
          %v1507 = vmul.f32 %v1283, %v1475
          %v1508 = vmul.f32 %v1284, %v1476
          %v1509 = vmul.f32 %v1285, %v1477
          %v1510 = vmul.f32 %v1286, %v1478
          %v1511 = vmul.f32 %v1287, %v1479
          %v1512 = vmul.f32 %v1288, %v1480
          %v1513 = vmul.f32 %v1289, %v1481
          %v1514 = vmul.f32 %v1290, %v1482
          %v1515 = vmul.f32 %v1291, %v1483
          %v1516 = vmul.f32 %v1292, %v1484
          %v1517 = vmul.f32 %v1293, %v1485
          %v1518 = vmul.f32 %v1294, %v1486
          %v1519 = vmul.f32 %v1295, %v1487
          %v1520 = vmul.f32 %v1296, %v1488
          %v1521 = vmul.f32 %v1297, %v1489
          %v1522 = vmul.f32 %v1298, %v1490
          %v1523 = vmul.f32 %v1299, %v1491
          %v1524 = vmul.f32 %v1300, %v1492
          %v1525 = vmul.f32 %v1301, %v1493
          %v1526 = vmul.f32 %v1302, %v1494
          %v1527 = vmul.f32 %v1303, %v1495
          %v1528 = vmul.f32 %v1304, %v1496
          %v1529 = vmul.f32 %v1305, %v1497
          %v1530 = vmul.f32 %v1306, %v1498
          %v1531 = vmul.f32 %v1307, %v1499
          %v1532 = vmul.f32 %v1308, %v1500
          %v1533 = vmul.f32 %v1309, %v1501
          %v1534 = vmul.f32 %v1310, %v1502
          %v1535 = vmul.f32 %v1311, %v1503
          %v1537 = vlaneseq
          %v1538 = vshrl.u32 %v1537, 7
          %v1539 = vsub.s32 0, %v1538
          %v1540 = vrot.slane %v1182, %v1539
          %v1542 = vmul.f32 %v1504, %v1540
          %v1543 = vmul.f32 %v1505, %v1540
          %v1544 = vmul.f32 %v1506, %v1540
          %v1545 = vmul.f32 %v1507, %v1540
          %v1546 = vmul.f32 %v1508, %v1540
          %v1547 = vmul.f32 %v1509, %v1540
          %v1548 = vmul.f32 %v1510, %v1540
          %v1549 = vmul.f32 %v1511, %v1540
          %v1550 = vmul.f32 %v1512, %v1540
          %v1551 = vmul.f32 %v1513, %v1540
          %v1552 = vmul.f32 %v1514, %v1540
          %v1553 = vmul.f32 %v1515, %v1540
          %v1554 = vmul.f32 %v1516, %v1540
          %v1555 = vmul.f32 %v1517, %v1540
          %v1556 = vmul.f32 %v1518, %v1540
          %v1557 = vmul.f32 %v1519, %v1540
          %v1558 = vmul.f32 %v1520, %v1540
          %v1559 = vmul.f32 %v1521, %v1540
          %v1560 = vmul.f32 %v1522, %v1540
          %v1561 = vmul.f32 %v1523, %v1540
          %v1562 = vmul.f32 %v1524, %v1540
          %v1563 = vmul.f32 %v1525, %v1540
          %v1564 = vmul.f32 %v1526, %v1540
          %v1565 = vmul.f32 %v1527, %v1540
          %v1566 = vmul.f32 %v1528, %v1540
          %v1567 = vmul.f32 %v1529, %v1540
          %v1568 = vmul.f32 %v1530, %v1540
          %v1569 = vmul.f32 %v1531, %v1540
          %v1570 = vmul.f32 %v1532, %v1540
          %v1571 = vmul.f32 %v1533, %v1540
          %v1572 = vmul.f32 %v1534, %v1540
          %v1573 = vmul.f32 %v1535, %v1540
          %v1575 = vlaneseq
          %v1576 = vshrl.u32 %v1575, 7
          %v1577 = vsub.s32 0, %v1576
          %v1578 = vrot.slane %v1183, %v1577
          %v1580 = vadd.f32 %v1542, %v1578
          %v1581 = vadd.f32 %v1543, %v1578
          %v1582 = vadd.f32 %v1544, %v1578
          %v1583 = vadd.f32 %v1545, %v1578
          %v1584 = vadd.f32 %v1546, %v1578
          %v1585 = vadd.f32 %v1547, %v1578
          %v1586 = vadd.f32 %v1548, %v1578
          %v1587 = vadd.f32 %v1549, %v1578
          %v1588 = vadd.f32 %v1550, %v1578
          %v1589 = vadd.f32 %v1551, %v1578
          %v1590 = vadd.f32 %v1552, %v1578
          %v1591 = vadd.f32 %v1553, %v1578
          %v1592 = vadd.f32 %v1554, %v1578
          %v1593 = vadd.f32 %v1555, %v1578
          %v1594 = vadd.f32 %v1556, %v1578
          %v1595 = vadd.f32 %v1557, %v1578
          %v1596 = vadd.f32 %v1558, %v1578
          %v1597 = vadd.f32 %v1559, %v1578
          %v1598 = vadd.f32 %v1560, %v1578
          %v1599 = vadd.f32 %v1561, %v1578
          %v1600 = vadd.f32 %v1562, %v1578
          %v1601 = vadd.f32 %v1563, %v1578
          %v1602 = vadd.f32 %v1564, %v1578
          %v1603 = vadd.f32 %v1565, %v1578
          %v1604 = vadd.f32 %v1566, %v1578
          %v1605 = vadd.f32 %v1567, %v1578
          %v1606 = vadd.f32 %v1568, %v1578
          %v1607 = vadd.f32 %v1569, %v1578
          %v1608 = vadd.f32 %v1570, %v1578
          %v1609 = vadd.f32 %v1571, %v1578
          %v1610 = vadd.f32 %v1572, %v1578
          %v1611 = vadd.f32 %v1573, %v1578
          %v1612 = vpack.c.bf16 %v1119, %v1118
          %v1613 = vpack.c.bf16 %v1121, %v1120
          %v1614 = vpack.c.bf16 %v1123, %v1122
          %v1615 = vpack.c.bf16 %v1125, %v1124
          %v1616 = vpack.c.bf16 %v1127, %v1126
          %v1617 = vpack.c.bf16 %v1129, %v1128
          %v1618 = vpack.c.bf16 %v1131, %v1130
          %v1619 = vpack.c.bf16 %v1133, %v1132
          %v1620 = vpack.c.bf16 %v1135, %v1134
          %v1621 = vpack.c.bf16 %v1137, %v1136
          %v1622 = vpack.c.bf16 %v1139, %v1138
          %v1623 = vpack.c.bf16 %v1141, %v1140
          %v1624 = vpack.c.bf16 %v1143, %v1142
          %v1625 = vpack.c.bf16 %v1145, %v1144
          %v1626 = vpack.c.bf16 %v1147, %v1146
          %v1627 = vpack.c.bf16 %v1149, %v1148
          %v1628 = vld [vmem:[#allocation12] sm:$0xf]
          %v1629 = vld [vmem:[#allocation12 + $0x4] sm:$0xf]
          %v1630 = vld [vmem:[#allocation12 + $0x8] sm:$0xf]
          %v1631 = vld [vmem:[#allocation12 + $0xc] sm:$0xf]
          %v1632 = vld [vmem:[#allocation12 + $0x10] sm:$0xf]
          %v1633 = vld [vmem:[#allocation12 + $0x14] sm:$0xf]
          %v1634 = vld [vmem:[#allocation12 + $0x18] sm:$0xf]
          %v1635 = vld [vmem:[#allocation12 + $0x1c] sm:$0xf]
          %v1636 = vld [vmem:[#allocation12 + $0x20] sm:$0xf]
          %v1637 = vld [vmem:[#allocation12 + $0x24] sm:$0xf]
          %v1638 = vld [vmem:[#allocation12 + $0x28] sm:$0xf]
          %v1639 = vld [vmem:[#allocation12 + $0x2c] sm:$0xf]
          %v1640 = vld [vmem:[#allocation12 + $0x30] sm:$0xf]
          %v1641 = vld [vmem:[#allocation12 + $0x34] sm:$0xf]
          %v1642 = vld [vmem:[#allocation12 + $0x38] sm:$0xf]
          %v1643 = vld [vmem:[#allocation12 + $0x3c] sm:$0xf]
          %v1660 = vunpack.c.l.b16 %v1628
          %v1661 = vunpack.c.l.b16 %v1629
          %v1662 = vunpack.c.l.b16 %v1630
          %v1663 = vunpack.c.l.b16 %v1631
          %v1664 = vunpack.c.l.b16 %v1632
          %v1665 = vunpack.c.l.b16 %v1633
          %v1666 = vunpack.c.l.b16 %v1634
          %v1667 = vunpack.c.l.b16 %v1635
          %v1668 = vunpack.c.l.b16 %v1636
          %v1669 = vunpack.c.l.b16 %v1637
          %v1670 = vunpack.c.l.b16 %v1638
          %v1671 = vunpack.c.l.b16 %v1639
          %v1672 = vunpack.c.l.b16 %v1640
          %v1673 = vunpack.c.l.b16 %v1641
          %v1674 = vunpack.c.l.b16 %v1642
          %v1675 = vunpack.c.l.b16 %v1643
          %v1676 = vpack.c.b16 %v1661, %v1660
          %v1677 = vpack.c.b16 %v1663, %v1662
          %v1678 = vpack.c.b16 %v1665, %v1664
          %v1679 = vpack.c.b16 %v1667, %v1666
          %v1680 = vpack.c.b16 %v1669, %v1668
          %v1681 = vpack.c.b16 %v1671, %v1670
          %v1682 = vpack.c.b16 %v1673, %v1672
          %v1683 = vpack.c.b16 %v1675, %v1674
          %1692 = vmatprep.subr.bf16.mxu0 0
          %1693 = vmatpush1.bf16.msra.mxu0 %v1683
          %1694 = vmatprep.subr.bf16.mxu0 0
          %1695 = vmatpush1.bf16.msra.mxu0 %v1682
          %1696 = vmatprep.subr.bf16.mxu0 0
          %1697 = vmatpush1.bf16.msra.mxu0 %v1681
          %1698 = vmatprep.subr.bf16.mxu0 0
          %1699 = vmatpush1.bf16.msra.mxu0 %v1680
          %1700 = vmatprep.subr.bf16.mxu0 0
          %1701 = vmatpush1.bf16.msra.mxu0 %v1679
          %1702 = vmatprep.subr.bf16.mxu0 0
          %1703 = vmatpush1.bf16.msra.mxu0 %v1678
          %1704 = vmatprep.subr.bf16.mxu0 0
          %1705 = vmatpush1.bf16.msra.mxu0 %v1677
          %1706 = vmatprep.subr.bf16.mxu0 0
          %1707 = vmatpush1.bf16.msra.mxu0 %v1676
          %1708 = vmatprep.subr.bf16.mxu0 0
          %1709 = vmatpush2.bf16.msra.mxu0 0
          %1710 = vmatprep.subr.bf16.mxu0 0
          %1711 = vmatpush2.bf16.msra.mxu0 0
          %1712 = vmatprep.subr.bf16.mxu0 0
          %1713 = vmatpush2.bf16.msra.mxu0 0
          %1714 = vmatprep.subr.bf16.mxu0 0
          %1715 = vmatpush2.bf16.msra.mxu0 0
          %1716 = vmatprep.subr.bf16.mxu0 0
          %1717 = vmatpush2.bf16.msra.mxu0 0
          %1718 = vmatprep.subr.bf16.mxu0 0
          %1719 = vmatpush2.bf16.msra.mxu0 0
          %1720 = vmatprep.subr.bf16.mxu0 0
          %1721 = vmatpush2.bf16.msra.mxu0 0
          %1722 = vmatprep.subr.bf16.mxu0 0
          %1723 = vmatpush2.bf16.msra.mxu0 0
          %1724 = vmatprep.mubr.bf16.mxu0 0
          %1725 = vmatmul.mubr.bf16.gmra.mxu0 %v1612
          %v1726 = vpop.f32.mrf.mxu0
          %v1727 = vadd.f32 0.0, %v1726
          %v1728 = vpop.f32.mrf.mxu0
          %v1729 = vpop.f32.mrf.mxu0
          %v1730 = vadd.f32 0.0, %v1729
          %v1731 = vpop.f32.mrf.mxu0
          %1732 = vmatprep.mubr.bf16.mxu0 0
          %1733 = vmatmul.mubr.bf16.gmra.mxu0 %v1613
          %v1734 = vpop.f32.mrf.mxu0
          %v1735 = vadd.f32 0.0, %v1734
          %v1736 = vpop.f32.mrf.mxu0
          %v1737 = vpop.f32.mrf.mxu0
          %v1738 = vadd.f32 0.0, %v1737
          %v1739 = vpop.f32.mrf.mxu0
          %1740 = vmatprep.mubr.bf16.mxu0 0
          %1741 = vmatmul.mubr.bf16.gmra.mxu0 %v1614
          %v1742 = vpop.f32.mrf.mxu0
          %v1743 = vadd.f32 0.0, %v1742
          %v1744 = vpop.f32.mrf.mxu0
          %v1745 = vpop.f32.mrf.mxu0
          %v1746 = vadd.f32 0.0, %v1745
          %v1747 = vpop.f32.mrf.mxu0
          %1748 = vmatprep.mubr.bf16.mxu0 0
          %1749 = vmatmul.mubr.bf16.gmra.mxu0 %v1615
          %v1750 = vpop.f32.mrf.mxu0
          %v1751 = vadd.f32 0.0, %v1750
          %v1752 = vpop.f32.mrf.mxu0
          %v1753 = vpop.f32.mrf.mxu0
          %v1754 = vadd.f32 0.0, %v1753
          %v1755 = vpop.f32.mrf.mxu0
          %1756 = vmatprep.mubr.bf16.mxu0 0
          %1757 = vmatmul.mubr.bf16.gmra.mxu0 %v1616
          %v1758 = vpop.f32.mrf.mxu0
          %v1759 = vadd.f32 0.0, %v1758
          %v1760 = vpop.f32.mrf.mxu0
          %v1761 = vpop.f32.mrf.mxu0
          %v1762 = vadd.f32 0.0, %v1761
          %v1763 = vpop.f32.mrf.mxu0
          %1764 = vmatprep.mubr.bf16.mxu0 0
          %1765 = vmatmul.mubr.bf16.gmra.mxu0 %v1617
          %v1766 = vpop.f32.mrf.mxu0
          %v1767 = vadd.f32 0.0, %v1766
          %v1768 = vpop.f32.mrf.mxu0
          %v1769 = vpop.f32.mrf.mxu0
          %v1770 = vadd.f32 0.0, %v1769
          %v1771 = vpop.f32.mrf.mxu0
          %1772 = vmatprep.mubr.bf16.mxu0 0
          %1773 = vmatmul.mubr.bf16.gmra.mxu0 %v1618
          %v1774 = vpop.f32.mrf.mxu0
          %v1775 = vadd.f32 0.0, %v1774
          %v1776 = vpop.f32.mrf.mxu0
          %v1777 = vpop.f32.mrf.mxu0
          %v1778 = vadd.f32 0.0, %v1777
          %v1779 = vpop.f32.mrf.mxu0
          %1780 = vmatprep.mubr.bf16.mxu0 0
          %1781 = vmatmul.mubr.bf16.gmra.mxu0 %v1619
          %v1782 = vpop.f32.mrf.mxu0
          %v1783 = vadd.f32 0.0, %v1782
          %v1784 = vpop.f32.mrf.mxu0
          %v1785 = vpop.f32.mrf.mxu0
          %v1786 = vadd.f32 0.0, %v1785
          %v1787 = vpop.f32.mrf.mxu0
          %1788 = vmatprep.mubr.bf16.mxu0 0
          %1789 = vmatmul.mubr.bf16.gmra.mxu0 %v1620
          %v1790 = vpop.f32.mrf.mxu0
          %v1791 = vadd.f32 0.0, %v1790
          %v1792 = vpop.f32.mrf.mxu0
          %v1793 = vpop.f32.mrf.mxu0
          %v1794 = vadd.f32 0.0, %v1793
          %v1795 = vpop.f32.mrf.mxu0
          %1796 = vmatprep.mubr.bf16.mxu0 0
          %1797 = vmatmul.mubr.bf16.gmra.mxu0 %v1621
          %v1798 = vpop.f32.mrf.mxu0
          %v1799 = vadd.f32 0.0, %v1798
          %v1800 = vpop.f32.mrf.mxu0
          %v1801 = vpop.f32.mrf.mxu0
          %v1802 = vadd.f32 0.0, %v1801
          %v1803 = vpop.f32.mrf.mxu0
          %1804 = vmatprep.mubr.bf16.mxu0 0
          %1805 = vmatmul.mubr.bf16.gmra.mxu0 %v1622
          %v1806 = vpop.f32.mrf.mxu0
          %v1807 = vadd.f32 0.0, %v1806
          %v1808 = vpop.f32.mrf.mxu0
          %v1809 = vpop.f32.mrf.mxu0
          %v1810 = vadd.f32 0.0, %v1809
          %v1811 = vpop.f32.mrf.mxu0
          %1812 = vmatprep.mubr.bf16.mxu0 0
          %1813 = vmatmul.mubr.bf16.gmra.mxu0 %v1623
          %v1814 = vpop.f32.mrf.mxu0
          %v1815 = vadd.f32 0.0, %v1814
          %v1816 = vpop.f32.mrf.mxu0
          %v1817 = vpop.f32.mrf.mxu0
          %v1818 = vadd.f32 0.0, %v1817
          %v1819 = vpop.f32.mrf.mxu0
          %1820 = vmatprep.mubr.bf16.mxu0 0
          %1821 = vmatmul.mubr.bf16.gmra.mxu0 %v1624
          %v1822 = vpop.f32.mrf.mxu0
          %v1823 = vadd.f32 0.0, %v1822
          %v1824 = vpop.f32.mrf.mxu0
          %v1825 = vpop.f32.mrf.mxu0
          %v1826 = vadd.f32 0.0, %v1825
          %v1827 = vpop.f32.mrf.mxu0
          %1828 = vmatprep.mubr.bf16.mxu0 0
          %1829 = vmatmul.mubr.bf16.gmra.mxu0 %v1625
          %v1830 = vpop.f32.mrf.mxu0
          %v1831 = vadd.f32 0.0, %v1830
          %v1832 = vpop.f32.mrf.mxu0
          %v1833 = vpop.f32.mrf.mxu0
          %v1834 = vadd.f32 0.0, %v1833
          %v1835 = vpop.f32.mrf.mxu0
          %1836 = vmatprep.mubr.bf16.mxu0 0
          %1837 = vmatmul.mubr.bf16.gmra.mxu0 %v1626
          %v1838 = vpop.f32.mrf.mxu0
          %v1839 = vadd.f32 0.0, %v1838
          %v1840 = vpop.f32.mrf.mxu0
          %v1841 = vpop.f32.mrf.mxu0
          %v1842 = vadd.f32 0.0, %v1841
          %v1843 = vpop.f32.mrf.mxu0
          %1844 = vmatprep.mubr.bf16.mxu0 0
          %1845 = vmatmul.mubr.bf16.gmra.mxu0 %v1627
          %v1846 = vpop.f32.mrf.mxu0
          %v1847 = vadd.f32 0.0, %v1846
          %v1848 = vpop.f32.mrf.mxu0
          %v1849 = vpop.f32.mrf.mxu0
          %v1850 = vadd.f32 0.0, %v1849
          %v1851 = vpop.f32.mrf.mxu0
          %1852 = vdwg.mxu0
          %v1853 = vpack.c.bf16 %v1581, %v1580
          %v1854 = vpack.c.bf16 %v1583, %v1582
          %v1855 = vpack.c.bf16 %v1585, %v1584
          %v1856 = vpack.c.bf16 %v1587, %v1586
          %v1857 = vpack.c.bf16 %v1589, %v1588
          %v1858 = vpack.c.bf16 %v1591, %v1590
          %v1859 = vpack.c.bf16 %v1593, %v1592
          %v1860 = vpack.c.bf16 %v1595, %v1594
          %v1861 = vpack.c.bf16 %v1597, %v1596
          %v1862 = vpack.c.bf16 %v1599, %v1598
          %v1863 = vpack.c.bf16 %v1601, %v1600
          %v1864 = vpack.c.bf16 %v1603, %v1602
          %v1865 = vpack.c.bf16 %v1605, %v1604
          %v1866 = vpack.c.bf16 %v1607, %v1606
          %v1867 = vpack.c.bf16 %v1609, %v1608
          %v1868 = vpack.c.bf16 %v1611, %v1610
          %v1869 = vld [vmem:[#allocation13] sm:$0xf]
          %v1870 = vld [vmem:[#allocation13 + $0x4] sm:$0xf]
          %v1871 = vld [vmem:[#allocation13 + $0x8] sm:$0xf]
          %v1872 = vld [vmem:[#allocation13 + $0xc] sm:$0xf]
          %v1873 = vld [vmem:[#allocation13 + $0x10] sm:$0xf]
          %v1874 = vld [vmem:[#allocation13 + $0x14] sm:$0xf]
          %v1875 = vld [vmem:[#allocation13 + $0x18] sm:$0xf]
          %v1876 = vld [vmem:[#allocation13 + $0x1c] sm:$0xf]
          %v1877 = vld [vmem:[#allocation13 + $0x20] sm:$0xf]
          %v1878 = vld [vmem:[#allocation13 + $0x24] sm:$0xf]
          %v1879 = vld [vmem:[#allocation13 + $0x28] sm:$0xf]
          %v1880 = vld [vmem:[#allocation13 + $0x2c] sm:$0xf]
          %v1881 = vld [vmem:[#allocation13 + $0x30] sm:$0xf]
          %v1882 = vld [vmem:[#allocation13 + $0x34] sm:$0xf]
          %v1883 = vld [vmem:[#allocation13 + $0x38] sm:$0xf]
          %v1884 = vld [vmem:[#allocation13 + $0x3c] sm:$0xf]
          %v1901 = vunpack.c.l.b16 %v1869
          %v1902 = vunpack.c.l.b16 %v1870
          %v1903 = vunpack.c.l.b16 %v1871
          %v1904 = vunpack.c.l.b16 %v1872
          %v1905 = vunpack.c.l.b16 %v1873
          %v1906 = vunpack.c.l.b16 %v1874
          %v1907 = vunpack.c.l.b16 %v1875
          %v1908 = vunpack.c.l.b16 %v1876
          %v1909 = vunpack.c.l.b16 %v1877
          %v1910 = vunpack.c.l.b16 %v1878
          %v1911 = vunpack.c.l.b16 %v1879
          %v1912 = vunpack.c.l.b16 %v1880
          %v1913 = vunpack.c.l.b16 %v1881
          %v1914 = vunpack.c.l.b16 %v1882
          %v1915 = vunpack.c.l.b16 %v1883
          %v1916 = vunpack.c.l.b16 %v1884
          %v1917 = vpack.c.b16 %v1902, %v1901
          %v1918 = vpack.c.b16 %v1904, %v1903
          %v1919 = vpack.c.b16 %v1906, %v1905
          %v1920 = vpack.c.b16 %v1908, %v1907
          %v1921 = vpack.c.b16 %v1910, %v1909
          %v1922 = vpack.c.b16 %v1912, %v1911
          %v1923 = vpack.c.b16 %v1914, %v1913
          %v1924 = vpack.c.b16 %v1916, %v1915
          %1933 = vmatprep.subr.bf16.mxu0 0
          %1934 = vmatpush1.bf16.msra.mxu0 %v1924
          %1935 = vmatprep.subr.bf16.mxu0 0
          %1936 = vmatpush1.bf16.msra.mxu0 %v1923
          %1937 = vmatprep.subr.bf16.mxu0 0
          %1938 = vmatpush1.bf16.msra.mxu0 %v1922
          %1939 = vmatprep.subr.bf16.mxu0 0
          %1940 = vmatpush1.bf16.msra.mxu0 %v1921
          %1941 = vmatprep.subr.bf16.mxu0 0
          %1942 = vmatpush1.bf16.msra.mxu0 %v1920
          %1943 = vmatprep.subr.bf16.mxu0 0
          %1944 = vmatpush1.bf16.msra.mxu0 %v1919
          %1945 = vmatprep.subr.bf16.mxu0 0
          %1946 = vmatpush1.bf16.msra.mxu0 %v1918
          %1947 = vmatprep.subr.bf16.mxu0 0
          %1948 = vmatpush1.bf16.msra.mxu0 %v1917
          %1949 = vmatprep.subr.bf16.mxu0 0
          %1950 = vmatpush2.bf16.msra.mxu0 0
          %1951 = vmatprep.subr.bf16.mxu0 0
          %1952 = vmatpush2.bf16.msra.mxu0 0
          %1953 = vmatprep.subr.bf16.mxu0 0
          %1954 = vmatpush2.bf16.msra.mxu0 0
          %1955 = vmatprep.subr.bf16.mxu0 0
          %1956 = vmatpush2.bf16.msra.mxu0 0
          %1957 = vmatprep.subr.bf16.mxu0 0
          %1958 = vmatpush2.bf16.msra.mxu0 0
          %1959 = vmatprep.subr.bf16.mxu0 0
          %1960 = vmatpush2.bf16.msra.mxu0 0
          %1961 = vmatprep.subr.bf16.mxu0 0
          %1962 = vmatpush2.bf16.msra.mxu0 0
          %1963 = vmatprep.subr.bf16.mxu0 0
          %1964 = vmatpush2.bf16.msra.mxu0 0
          %1965 = vmatprep.mubr.bf16.mxu0 0
          %1966 = vmatmul.mubr.bf16.gmra.mxu0 %v1853
          %v1967 = vpop.f32.mrf.mxu0
          %v1968 = vadd.f32 0.0, %v1967
          %v1969 = vpop.f32.mrf.mxu0
          %v1970 = vpop.f32.mrf.mxu0
          %v1971 = vadd.f32 0.0, %v1970
          %v1972 = vpop.f32.mrf.mxu0
          %1973 = vmatprep.mubr.bf16.mxu0 0
          %1974 = vmatmul.mubr.bf16.gmra.mxu0 %v1854
          %v1975 = vpop.f32.mrf.mxu0
          %v1976 = vadd.f32 0.0, %v1975
          %v1977 = vpop.f32.mrf.mxu0
          %v1978 = vpop.f32.mrf.mxu0
          %v1979 = vadd.f32 0.0, %v1978
          %v1980 = vpop.f32.mrf.mxu0
          %1981 = vmatprep.mubr.bf16.mxu0 0
          %1982 = vmatmul.mubr.bf16.gmra.mxu0 %v1855
          %v1983 = vpop.f32.mrf.mxu0
          %v1984 = vadd.f32 0.0, %v1983
          %v1985 = vpop.f32.mrf.mxu0
          %v1986 = vpop.f32.mrf.mxu0
          %v1987 = vadd.f32 0.0, %v1986
          %v1988 = vpop.f32.mrf.mxu0
          %1989 = vmatprep.mubr.bf16.mxu0 0
          %1990 = vmatmul.mubr.bf16.gmra.mxu0 %v1856
          %v1991 = vpop.f32.mrf.mxu0
          %v1992 = vadd.f32 0.0, %v1991
          %v1993 = vpop.f32.mrf.mxu0
          %v1994 = vpop.f32.mrf.mxu0
          %v1995 = vadd.f32 0.0, %v1994
          %v1996 = vpop.f32.mrf.mxu0
          %1997 = vmatprep.mubr.bf16.mxu0 0
          %1998 = vmatmul.mubr.bf16.gmra.mxu0 %v1857
          %v1999 = vpop.f32.mrf.mxu0
          %v2000 = vadd.f32 0.0, %v1999
          %v2001 = vpop.f32.mrf.mxu0
          %v2002 = vpop.f32.mrf.mxu0
          %v2003 = vadd.f32 0.0, %v2002
          %v2004 = vpop.f32.mrf.mxu0
          %2005 = vmatprep.mubr.bf16.mxu0 0
          %2006 = vmatmul.mubr.bf16.gmra.mxu0 %v1858
          %v2007 = vpop.f32.mrf.mxu0
          %v2008 = vadd.f32 0.0, %v2007
          %v2009 = vpop.f32.mrf.mxu0
          %v2010 = vpop.f32.mrf.mxu0
          %v2011 = vadd.f32 0.0, %v2010
          %v2012 = vpop.f32.mrf.mxu0
          %2013 = vmatprep.mubr.bf16.mxu0 0
          %2014 = vmatmul.mubr.bf16.gmra.mxu0 %v1859
          %v2015 = vpop.f32.mrf.mxu0
          %v2016 = vadd.f32 0.0, %v2015
          %v2017 = vpop.f32.mrf.mxu0
          %v2018 = vpop.f32.mrf.mxu0
          %v2019 = vadd.f32 0.0, %v2018
          %v2020 = vpop.f32.mrf.mxu0
          %2021 = vmatprep.mubr.bf16.mxu0 0
          %2022 = vmatmul.mubr.bf16.gmra.mxu0 %v1860
          %v2023 = vpop.f32.mrf.mxu0
          %v2024 = vadd.f32 0.0, %v2023
          %v2025 = vpop.f32.mrf.mxu0
          %v2026 = vpop.f32.mrf.mxu0
          %v2027 = vadd.f32 0.0, %v2026
          %v2028 = vpop.f32.mrf.mxu0
          %2029 = vmatprep.mubr.bf16.mxu0 0
          %2030 = vmatmul.mubr.bf16.gmra.mxu0 %v1861
          %v2031 = vpop.f32.mrf.mxu0
          %v2032 = vadd.f32 0.0, %v2031
          %v2033 = vpop.f32.mrf.mxu0
          %v2034 = vpop.f32.mrf.mxu0
          %v2035 = vadd.f32 0.0, %v2034
          %v2036 = vpop.f32.mrf.mxu0
          %2037 = vmatprep.mubr.bf16.mxu0 0
          %2038 = vmatmul.mubr.bf16.gmra.mxu0 %v1862
          %v2039 = vpop.f32.mrf.mxu0
          %v2040 = vadd.f32 0.0, %v2039
          %v2041 = vpop.f32.mrf.mxu0
          %v2042 = vpop.f32.mrf.mxu0
          %v2043 = vadd.f32 0.0, %v2042
          %v2044 = vpop.f32.mrf.mxu0
          %2045 = vmatprep.mubr.bf16.mxu0 0
          %2046 = vmatmul.mubr.bf16.gmra.mxu0 %v1863
          %v2047 = vpop.f32.mrf.mxu0
          %v2048 = vadd.f32 0.0, %v2047
          %v2049 = vpop.f32.mrf.mxu0
          %v2050 = vpop.f32.mrf.mxu0
          %v2051 = vadd.f32 0.0, %v2050
          %v2052 = vpop.f32.mrf.mxu0
          %2053 = vmatprep.mubr.bf16.mxu0 0
          %2054 = vmatmul.mubr.bf16.gmra.mxu0 %v1864
          %v2055 = vpop.f32.mrf.mxu0
          %v2056 = vadd.f32 0.0, %v2055
          %v2057 = vpop.f32.mrf.mxu0
          %v2058 = vpop.f32.mrf.mxu0
          %v2059 = vadd.f32 0.0, %v2058
          %v2060 = vpop.f32.mrf.mxu0
          %2061 = vmatprep.mubr.bf16.mxu0 0
          %2062 = vmatmul.mubr.bf16.gmra.mxu0 %v1865
          %v2063 = vpop.f32.mrf.mxu0
          %v2064 = vadd.f32 0.0, %v2063
          %v2065 = vpop.f32.mrf.mxu0
          %v2066 = vpop.f32.mrf.mxu0
          %v2067 = vadd.f32 0.0, %v2066
          %v2068 = vpop.f32.mrf.mxu0
          %2069 = vmatprep.mubr.bf16.mxu0 0
          %2070 = vmatmul.mubr.bf16.gmra.mxu0 %v1866
          %v2071 = vpop.f32.mrf.mxu0
          %v2072 = vadd.f32 0.0, %v2071
          %v2073 = vpop.f32.mrf.mxu0
          %v2074 = vpop.f32.mrf.mxu0
          %v2075 = vadd.f32 0.0, %v2074
          %v2076 = vpop.f32.mrf.mxu0
          %2077 = vmatprep.mubr.bf16.mxu0 0
          %2078 = vmatmul.mubr.bf16.gmra.mxu0 %v1867
          %v2079 = vpop.f32.mrf.mxu0
          %v2080 = vadd.f32 0.0, %v2079
          %v2081 = vpop.f32.mrf.mxu0
          %v2082 = vpop.f32.mrf.mxu0
          %v2083 = vadd.f32 0.0, %v2082
          %v2084 = vpop.f32.mrf.mxu0
          %2085 = vmatprep.mubr.bf16.mxu0 0
          %2086 = vmatmul.mubr.bf16.gmra.mxu0 %v1868
          %v2087 = vpop.f32.mrf.mxu0
          %v2088 = vadd.f32 0.0, %v2087
          %v2089 = vpop.f32.mrf.mxu0
          %v2090 = vpop.f32.mrf.mxu0
          %v2091 = vadd.f32 0.0, %v2090
          %v2092 = vpop.f32.mrf.mxu0
          %2093 = vdwg.mxu0
          %v2094 = vpack.c.bf16 %v1730, %v1727
          %v2095 = vpack.c.bf16 %v1738, %v1735
          %v2096 = vpack.c.bf16 %v1746, %v1743
          %v2097 = vpack.c.bf16 %v1754, %v1751
          %v2098 = vpack.c.bf16 %v1762, %v1759
          %v2099 = vpack.c.bf16 %v1770, %v1767
          %v2100 = vpack.c.bf16 %v1778, %v1775
          %v2101 = vpack.c.bf16 %v1786, %v1783
          %v2102 = vpack.c.bf16 %v1794, %v1791
          %v2103 = vpack.c.bf16 %v1802, %v1799
          %v2104 = vpack.c.bf16 %v1810, %v1807
          %v2105 = vpack.c.bf16 %v1818, %v1815
          %v2106 = vpack.c.bf16 %v1826, %v1823
          %v2107 = vpack.c.bf16 %v1834, %v1831
          %v2108 = vpack.c.bf16 %v1842, %v1839
          %v2109 = vpack.c.bf16 %v1850, %v1847
          %v2126 = vunpack.c.l.b16 %v2094
          %v2127 = vunpack.c.h.b16 %v2094
          %v2128 = vunpack.c.l.b16 %v2095
          %v2129 = vunpack.c.h.b16 %v2095
          %v2130 = vunpack.c.l.b16 %v2096
          %v2131 = vunpack.c.h.b16 %v2096
          %v2132 = vunpack.c.l.b16 %v2097
          %v2133 = vunpack.c.h.b16 %v2097
          %v2134 = vunpack.c.l.b16 %v2098
          %v2135 = vunpack.c.h.b16 %v2098
          %v2136 = vunpack.c.l.b16 %v2099
          %v2137 = vunpack.c.h.b16 %v2099
          %v2138 = vunpack.c.l.b16 %v2100
          %v2139 = vunpack.c.h.b16 %v2100
          %v2140 = vunpack.c.l.b16 %v2101
          %v2141 = vunpack.c.h.b16 %v2101
          %v2142 = vunpack.c.l.b16 %v2102
          %v2143 = vunpack.c.h.b16 %v2102
          %v2144 = vunpack.c.l.b16 %v2103
          %v2145 = vunpack.c.h.b16 %v2103
          %v2146 = vunpack.c.l.b16 %v2104
          %v2147 = vunpack.c.h.b16 %v2104
          %v2148 = vunpack.c.l.b16 %v2105
          %v2149 = vunpack.c.h.b16 %v2105
          %v2150 = vunpack.c.l.b16 %v2106
          %v2151 = vunpack.c.h.b16 %v2106
          %v2152 = vunpack.c.l.b16 %v2107
          %v2153 = vunpack.c.h.b16 %v2107
          %v2154 = vunpack.c.l.b16 %v2108
          %v2155 = vunpack.c.h.b16 %v2108
          %v2156 = vunpack.c.l.b16 %v2109
          %v2157 = vunpack.c.h.b16 %v2109
          %v2158 = vpack.c.b16 %v2126, %v2126
          %v2159 = vpack.c.b16 %v2127, %v2127
          %v2160 = vpack.c.b16 %v2128, %v2128
          %v2161 = vpack.c.b16 %v2129, %v2129
          %v2162 = vpack.c.b16 %v2130, %v2130
          %v2163 = vpack.c.b16 %v2131, %v2131
          %v2164 = vpack.c.b16 %v2132, %v2132
          %v2165 = vpack.c.b16 %v2133, %v2133
          %v2166 = vpack.c.b16 %v2134, %v2134
          %v2167 = vpack.c.b16 %v2135, %v2135
          %v2168 = vpack.c.b16 %v2136, %v2136
          %v2169 = vpack.c.b16 %v2137, %v2137
          %v2170 = vpack.c.b16 %v2138, %v2138
          %v2171 = vpack.c.b16 %v2139, %v2139
          %v2172 = vpack.c.b16 %v2140, %v2140
          %v2173 = vpack.c.b16 %v2141, %v2141
          %v2174 = vpack.c.b16 %v2142, %v2142
          %v2175 = vpack.c.b16 %v2143, %v2143
          %v2176 = vpack.c.b16 %v2144, %v2144
          %v2177 = vpack.c.b16 %v2145, %v2145
          %v2178 = vpack.c.b16 %v2146, %v2146
          %v2179 = vpack.c.b16 %v2147, %v2147
          %v2180 = vpack.c.b16 %v2148, %v2148
          %v2181 = vpack.c.b16 %v2149, %v2149
          %v2182 = vpack.c.b16 %v2150, %v2150
          %v2183 = vpack.c.b16 %v2151, %v2151
          %v2184 = vpack.c.b16 %v2152, %v2152
          %v2185 = vpack.c.b16 %v2153, %v2153
          %v2186 = vpack.c.b16 %v2154, %v2154
          %v2187 = vpack.c.b16 %v2155, %v2155
          %v2188 = vpack.c.b16 %v2156, %v2156
          %v2189 = vpack.c.b16 %v2157, %v2157
          %2222 = vst [vmem:[#allocation2] sm:$0xf] %v2158
          %2223 = vst [vmem:[#allocation2 + $0x4] sm:$0xf] %v2159
          %2224 = vst [vmem:[#allocation2 + $0x8] sm:$0xf] %v2160
          %2225 = vst [vmem:[#allocation2 + $0xc] sm:$0xf] %v2161
          %2226 = vst [vmem:[#allocation2 + $0x10] sm:$0xf] %v2162
          %2227 = vst [vmem:[#allocation2 + $0x14] sm:$0xf] %v2163
          %2228 = vst [vmem:[#allocation2 + $0x18] sm:$0xf] %v2164
          %2229 = vst [vmem:[#allocation2 + $0x1c] sm:$0xf] %v2165
          %2230 = vst [vmem:[#allocation2 + $0x20] sm:$0xf] %v2166
          %2231 = vst [vmem:[#allocation2 + $0x24] sm:$0xf] %v2167
          %2232 = vst [vmem:[#allocation2 + $0x28] sm:$0xf] %v2168
          %2233 = vst [vmem:[#allocation2 + $0x2c] sm:$0xf] %v2169
          %2234 = vst [vmem:[#allocation2 + $0x30] sm:$0xf] %v2170
          %2235 = vst [vmem:[#allocation2 + $0x34] sm:$0xf] %v2171
          %2236 = vst [vmem:[#allocation2 + $0x38] sm:$0xf] %v2172
          %2237 = vst [vmem:[#allocation2 + $0x3c] sm:$0xf] %v2173
          %2238 = vst [vmem:[#allocation2 + $0x40] sm:$0xf] %v2174
          %2239 = vst [vmem:[#allocation2 + $0x44] sm:$0xf] %v2175
          %2240 = vst [vmem:[#allocation2 + $0x48] sm:$0xf] %v2176
          %2241 = vst [vmem:[#allocation2 + $0x4c] sm:$0xf] %v2177
          %2242 = vst [vmem:[#allocation2 + $0x50] sm:$0xf] %v2178
          %2243 = vst [vmem:[#allocation2 + $0x54] sm:$0xf] %v2179
          %2244 = vst [vmem:[#allocation2 + $0x58] sm:$0xf] %v2180
          %2245 = vst [vmem:[#allocation2 + $0x5c] sm:$0xf] %v2181
          %2246 = vst [vmem:[#allocation2 + $0x60] sm:$0xf] %v2182
          %2247 = vst [vmem:[#allocation2 + $0x64] sm:$0xf] %v2183
          %2248 = vst [vmem:[#allocation2 + $0x68] sm:$0xf] %v2184
          %2249 = vst [vmem:[#allocation2 + $0x6c] sm:$0xf] %v2185
          %2250 = vst [vmem:[#allocation2 + $0x70] sm:$0xf] %v2186
          %2251 = vst [vmem:[#allocation2 + $0x74] sm:$0xf] %v2187
          %2252 = vst [vmem:[#allocation2 + $0x78] sm:$0xf] %v2188
          %2253 = vst [vmem:[#allocation2 + $0x7c] sm:$0xf] %v2189
          %v2254 = vpack.c.bf16 %v1971, %v1968
          %v2255 = vpack.c.bf16 %v1979, %v1976
          %v2256 = vpack.c.bf16 %v1987, %v1984
          %v2257 = vpack.c.bf16 %v1995, %v1992
          %v2258 = vpack.c.bf16 %v2003, %v2000
          %v2259 = vpack.c.bf16 %v2011, %v2008
          %v2260 = vpack.c.bf16 %v2019, %v2016
          %v2261 = vpack.c.bf16 %v2027, %v2024
          %v2262 = vpack.c.bf16 %v2035, %v2032
          %v2263 = vpack.c.bf16 %v2043, %v2040
          %v2264 = vpack.c.bf16 %v2051, %v2048
          %v2265 = vpack.c.bf16 %v2059, %v2056
          %v2266 = vpack.c.bf16 %v2067, %v2064
          %v2267 = vpack.c.bf16 %v2075, %v2072
          %v2268 = vpack.c.bf16 %v2083, %v2080
          %v2269 = vpack.c.bf16 %v2091, %v2088
          %v2286 = vunpack.c.l.b16 %v2254
          %v2287 = vunpack.c.h.b16 %v2254
          %v2288 = vunpack.c.l.b16 %v2255
          %v2289 = vunpack.c.h.b16 %v2255
          %v2290 = vunpack.c.l.b16 %v2256
          %v2291 = vunpack.c.h.b16 %v2256
          %v2292 = vunpack.c.l.b16 %v2257
          %v2293 = vunpack.c.h.b16 %v2257
          %v2294 = vunpack.c.l.b16 %v2258
          %v2295 = vunpack.c.h.b16 %v2258
          %v2296 = vunpack.c.l.b16 %v2259
          %v2297 = vunpack.c.h.b16 %v2259
          %v2298 = vunpack.c.l.b16 %v2260
          %v2299 = vunpack.c.h.b16 %v2260
          %v2300 = vunpack.c.l.b16 %v2261
          %v2301 = vunpack.c.h.b16 %v2261
          %v2302 = vunpack.c.l.b16 %v2262
          %v2303 = vunpack.c.h.b16 %v2262
          %v2304 = vunpack.c.l.b16 %v2263
          %v2305 = vunpack.c.h.b16 %v2263
          %v2306 = vunpack.c.l.b16 %v2264
          %v2307 = vunpack.c.h.b16 %v2264
          %v2308 = vunpack.c.l.b16 %v2265
          %v2309 = vunpack.c.h.b16 %v2265
          %v2310 = vunpack.c.l.b16 %v2266
          %v2311 = vunpack.c.h.b16 %v2266
          %v2312 = vunpack.c.l.b16 %v2267
          %v2313 = vunpack.c.h.b16 %v2267
          %v2314 = vunpack.c.l.b16 %v2268
          %v2315 = vunpack.c.h.b16 %v2268
          %v2316 = vunpack.c.l.b16 %v2269
          %v2317 = vunpack.c.h.b16 %v2269
          %v2318 = vpack.c.b16 %v2286, %v2286
          %v2319 = vpack.c.b16 %v2287, %v2287
          %v2320 = vpack.c.b16 %v2288, %v2288
          %v2321 = vpack.c.b16 %v2289, %v2289
          %v2322 = vpack.c.b16 %v2290, %v2290
          %v2323 = vpack.c.b16 %v2291, %v2291
          %v2324 = vpack.c.b16 %v2292, %v2292
          %v2325 = vpack.c.b16 %v2293, %v2293
          %v2326 = vpack.c.b16 %v2294, %v2294
          %v2327 = vpack.c.b16 %v2295, %v2295
          %v2328 = vpack.c.b16 %v2296, %v2296
          %v2329 = vpack.c.b16 %v2297, %v2297
          %v2330 = vpack.c.b16 %v2298, %v2298
          %v2331 = vpack.c.b16 %v2299, %v2299
          %v2332 = vpack.c.b16 %v2300, %v2300
          %v2333 = vpack.c.b16 %v2301, %v2301
          %v2334 = vpack.c.b16 %v2302, %v2302
          %v2335 = vpack.c.b16 %v2303, %v2303
          %v2336 = vpack.c.b16 %v2304, %v2304
          %v2337 = vpack.c.b16 %v2305, %v2305
          %v2338 = vpack.c.b16 %v2306, %v2306
          %v2339 = vpack.c.b16 %v2307, %v2307
          %v2340 = vpack.c.b16 %v2308, %v2308
          %v2341 = vpack.c.b16 %v2309, %v2309
          %v2342 = vpack.c.b16 %v2310, %v2310
          %v2343 = vpack.c.b16 %v2311, %v2311
          %v2344 = vpack.c.b16 %v2312, %v2312
          %v2345 = vpack.c.b16 %v2313, %v2313
          %v2346 = vpack.c.b16 %v2314, %v2314
          %v2347 = vpack.c.b16 %v2315, %v2315
          %v2348 = vpack.c.b16 %v2316, %v2316
          %v2349 = vpack.c.b16 %v2317, %v2317
          %2382 = vst [vmem:[#allocation3] sm:$0xf] %v2318
          %2383 = vst [vmem:[#allocation3 + $0x4] sm:$0xf] %v2319
          %2384 = vst [vmem:[#allocation3 + $0x8] sm:$0xf] %v2320
          %2385 = vst [vmem:[#allocation3 + $0xc] sm:$0xf] %v2321
          %2386 = vst [vmem:[#allocation3 + $0x10] sm:$0xf] %v2322
          %2387 = vst [vmem:[#allocation3 + $0x14] sm:$0xf] %v2323
          %2388 = vst [vmem:[#allocation3 + $0x18] sm:$0xf] %v2324
          %2389 = vst [vmem:[#allocation3 + $0x1c] sm:$0xf] %v2325
          %2390 = vst [vmem:[#allocation3 + $0x20] sm:$0xf] %v2326
          %2391 = vst [vmem:[#allocation3 + $0x24] sm:$0xf] %v2327
          %2392 = vst [vmem:[#allocation3 + $0x28] sm:$0xf] %v2328
          %2393 = vst [vmem:[#allocation3 + $0x2c] sm:$0xf] %v2329
          %2394 = vst [vmem:[#allocation3 + $0x30] sm:$0xf] %v2330
          %2395 = vst [vmem:[#allocation3 + $0x34] sm:$0xf] %v2331
          %2396 = vst [vmem:[#allocation3 + $0x38] sm:$0xf] %v2332
          %2397 = vst [vmem:[#allocation3 + $0x3c] sm:$0xf] %v2333
          %2398 = vst [vmem:[#allocation3 + $0x40] sm:$0xf] %v2334
          %2399 = vst [vmem:[#allocation3 + $0x44] sm:$0xf] %v2335
          %2400 = vst [vmem:[#allocation3 + $0x48] sm:$0xf] %v2336
          %2401 = vst [vmem:[#allocation3 + $0x4c] sm:$0xf] %v2337
          %2402 = vst [vmem:[#allocation3 + $0x50] sm:$0xf] %v2338
          %2403 = vst [vmem:[#allocation3 + $0x54] sm:$0xf] %v2339
          %2404 = vst [vmem:[#allocation3 + $0x58] sm:$0xf] %v2340
          %2405 = vst [vmem:[#allocation3 + $0x5c] sm:$0xf] %v2341
          %2406 = vst [vmem:[#allocation3 + $0x60] sm:$0xf] %v2342
          %2407 = vst [vmem:[#allocation3 + $0x64] sm:$0xf] %v2343
          %2408 = vst [vmem:[#allocation3 + $0x68] sm:$0xf] %v2344
          %2409 = vst [vmem:[#allocation3 + $0x6c] sm:$0xf] %v2345
          %2410 = vst [vmem:[#allocation3 + $0x70] sm:$0xf] %v2346
          %2411 = vst [vmem:[#allocation3 + $0x74] sm:$0xf] %v2347
          %2412 = vst [vmem:[#allocation3 + $0x78] sm:$0xf] %v2348
          %2413 = vst [vmem:[#allocation3 + $0x7c] sm:$0xf] %v2349
        $region108: #{tpu_custom_call.1} parent=75 // pred_fallthru
          _
        %v2414 = vld [vmem:[%s583] sm:$0xff]
        %v2415 = vld [vmem:[%s583 + $0x8] sm:$0xff]
        %v2416 = vld [vmem:[%s583 + $0x10] sm:$0xff]
        %v2417 = vld [vmem:[%s583 + $0x18] sm:$0xff]
        %v2418 = vld [vmem:[%s583 + $0x20] sm:$0xff]
        %v2419 = vld [vmem:[%s583 + $0x28] sm:$0xff]
        %v2420 = vld [vmem:[%s583 + $0x30] sm:$0xff]
        %v2421 = vld [vmem:[%s583 + $0x38] sm:$0xff]
        %v2422 = vld [vmem:[%s583 + $0x40] sm:$0xff]
        %v2423 = vld [vmem:[%s583 + $0x48] sm:$0xff]
        %v2424 = vld [vmem:[%s583 + $0x50] sm:$0xff]
        %v2425 = vld [vmem:[%s583 + $0x58] sm:$0xff]
        %v2426 = vld [vmem:[%s583 + $0x60] sm:$0xff]
        %v2427 = vld [vmem:[%s583 + $0x68] sm:$0xff]
        %v2428 = vld [vmem:[%s583 + $0x70] sm:$0xff]
        %v2429 = vld [vmem:[%s583 + $0x78] sm:$0xff]
        %v2430 = vld [vmem:[%s3] sm:$0x1]
        %v2431 = vld [vmem:[%s4] sm:$0x1]
        %2432 = vadd.xlane.f32.xlu0 %v2414
        %v2433 = vpop.xlane.xlu0 %2432
        %2434 = vadd.xlane.f32.xlu0 %v2415
        %v2435 = vpop.xlane.xlu0 %2434
        %2436 = vadd.xlane.f32.xlu0 %v2416
        %v2437 = vpop.xlane.xlu0 %2436
        %2438 = vadd.xlane.f32.xlu0 %v2417
        %v2439 = vpop.xlane.xlu0 %2438
        %2440 = vadd.xlane.f32.xlu0 %v2418
        %v2441 = vpop.xlane.xlu0 %2440
        %2442 = vadd.xlane.f32.xlu0 %v2419
        %v2443 = vpop.xlane.xlu0 %2442
        %2444 = vadd.xlane.f32.xlu0 %v2420
        %v2445 = vpop.xlane.xlu0 %2444
        %2446 = vadd.xlane.f32.xlu0 %v2421
        %v2447 = vpop.xlane.xlu0 %2446
        %2448 = vadd.xlane.f32.xlu0 %v2422
        %v2449 = vpop.xlane.xlu0 %2448
        %2450 = vadd.xlane.f32.xlu0 %v2423
        %v2451 = vpop.xlane.xlu0 %2450
        %2452 = vadd.xlane.f32.xlu0 %v2424
        %v2453 = vpop.xlane.xlu0 %2452
        %2454 = vadd.xlane.f32.xlu0 %v2425
        %v2455 = vpop.xlane.xlu0 %2454
        %2456 = vadd.xlane.f32.xlu0 %v2426
        %v2457 = vpop.xlane.xlu0 %2456
        %2458 = vadd.xlane.f32.xlu0 %v2427
        %v2459 = vpop.xlane.xlu0 %2458
        %2460 = vadd.xlane.f32.xlu0 %v2428
        %v2461 = vpop.xlane.xlu0 %2460
        %2462 = vadd.xlane.f32.xlu0 %v2429
        %v2463 = vpop.xlane.xlu0 %2462
        %v2464 = vrcp.pop 128.0
        %v2465 = vmul.f32 %v2433, %v2464
        %v2466 = vmul.f32 %v2435, %v2464
        %v2467 = vmul.f32 %v2437, %v2464
        %v2468 = vmul.f32 %v2439, %v2464
        %v2469 = vmul.f32 %v2441, %v2464
        %v2470 = vmul.f32 %v2443, %v2464
        %v2471 = vmul.f32 %v2445, %v2464
        %v2472 = vmul.f32 %v2447, %v2464
        %v2473 = vmul.f32 %v2449, %v2464
        %v2474 = vmul.f32 %v2451, %v2464
        %v2475 = vmul.f32 %v2453, %v2464
        %v2476 = vmul.f32 %v2455, %v2464
        %v2477 = vmul.f32 %v2457, %v2464
        %v2478 = vmul.f32 %v2459, %v2464
        %v2479 = vmul.f32 %v2461, %v2464
        %v2480 = vmul.f32 %v2463, %v2464
        %v2481 = vsub.f32 %v2414, %v2465
        %v2482 = vsub.f32 %v2415, %v2466
        %v2483 = vsub.f32 %v2416, %v2467
        %v2484 = vsub.f32 %v2417, %v2468
        %v2485 = vsub.f32 %v2418, %v2469
        %v2486 = vsub.f32 %v2419, %v2470
        %v2487 = vsub.f32 %v2420, %v2471
        %v2488 = vsub.f32 %v2421, %v2472
        %v2489 = vsub.f32 %v2422, %v2473
        %v2490 = vsub.f32 %v2423, %v2474
        %v2491 = vsub.f32 %v2424, %v2475
        %v2492 = vsub.f32 %v2425, %v2476
        %v2493 = vsub.f32 %v2426, %v2477
        %v2494 = vsub.f32 %v2427, %v2478
        %v2495 = vsub.f32 %v2428, %v2479
        %v2496 = vsub.f32 %v2429, %v2480
        %v2497 = vmul.f32 %v2481, %v2481
        %v2498 = vmul.f32 %v2482, %v2482
        %v2499 = vmul.f32 %v2483, %v2483
        %v2500 = vmul.f32 %v2484, %v2484
        %v2501 = vmul.f32 %v2485, %v2485
        %v2502 = vmul.f32 %v2486, %v2486
        %v2503 = vmul.f32 %v2487, %v2487
        %v2504 = vmul.f32 %v2488, %v2488
        %v2505 = vmul.f32 %v2489, %v2489
        %v2506 = vmul.f32 %v2490, %v2490
        %v2507 = vmul.f32 %v2491, %v2491
        %v2508 = vmul.f32 %v2492, %v2492
        %v2509 = vmul.f32 %v2493, %v2493
        %v2510 = vmul.f32 %v2494, %v2494
        %v2511 = vmul.f32 %v2495, %v2495
        %v2512 = vmul.f32 %v2496, %v2496
        %2513 = vadd.xlane.f32.xlu0 %v2497
        %v2514 = vpop.xlane.xlu0 %2513
        %2515 = vadd.xlane.f32.xlu0 %v2498
        %v2516 = vpop.xlane.xlu0 %2515
        %2517 = vadd.xlane.f32.xlu0 %v2499
        %v2518 = vpop.xlane.xlu0 %2517
        %2519 = vadd.xlane.f32.xlu0 %v2500
        %v2520 = vpop.xlane.xlu0 %2519
        %2521 = vadd.xlane.f32.xlu0 %v2501
        %v2522 = vpop.xlane.xlu0 %2521
        %2523 = vadd.xlane.f32.xlu0 %v2502
        %v2524 = vpop.xlane.xlu0 %2523
        %2525 = vadd.xlane.f32.xlu0 %v2503
        %v2526 = vpop.xlane.xlu0 %2525
        %2527 = vadd.xlane.f32.xlu0 %v2504
        %v2528 = vpop.xlane.xlu0 %2527
        %2529 = vadd.xlane.f32.xlu0 %v2505
        %v2530 = vpop.xlane.xlu0 %2529
        %2531 = vadd.xlane.f32.xlu0 %v2506
        %v2532 = vpop.xlane.xlu0 %2531
        %2533 = vadd.xlane.f32.xlu0 %v2507
        %v2534 = vpop.xlane.xlu0 %2533
        %2535 = vadd.xlane.f32.xlu0 %v2508
        %v2536 = vpop.xlane.xlu0 %2535
        %2537 = vadd.xlane.f32.xlu0 %v2509
        %v2538 = vpop.xlane.xlu0 %2537
        %2539 = vadd.xlane.f32.xlu0 %v2510
        %v2540 = vpop.xlane.xlu0 %2539
        %2541 = vadd.xlane.f32.xlu0 %v2511
        %v2542 = vpop.xlane.xlu0 %2541
        %2543 = vadd.xlane.f32.xlu0 %v2512
        %v2544 = vpop.xlane.xlu0 %2543
        %v2545 = vmul.f32 %v2514, %v2464
        %v2546 = vmul.f32 %v2516, %v2464
        %v2547 = vmul.f32 %v2518, %v2464
        %v2548 = vmul.f32 %v2520, %v2464
        %v2549 = vmul.f32 %v2522, %v2464
        %v2550 = vmul.f32 %v2524, %v2464
        %v2551 = vmul.f32 %v2526, %v2464
        %v2552 = vmul.f32 %v2528, %v2464
        %v2553 = vmul.f32 %v2530, %v2464
        %v2554 = vmul.f32 %v2532, %v2464
        %v2555 = vmul.f32 %v2534, %v2464
        %v2556 = vmul.f32 %v2536, %v2464
        %v2557 = vmul.f32 %v2538, %v2464
        %v2558 = vmul.f32 %v2540, %v2464
        %v2559 = vmul.f32 %v2542, %v2464
        %v2560 = vmul.f32 %v2544, %v2464
        %v2561 = vadd.f32 %v2545, 1e-05
        %v2562 = vadd.f32 %v2546, 1e-05
        %v2563 = vadd.f32 %v2547, 1e-05
        %v2564 = vadd.f32 %v2548, 1e-05
        %v2565 = vadd.f32 %v2549, 1e-05
        %v2566 = vadd.f32 %v2550, 1e-05
        %v2567 = vadd.f32 %v2551, 1e-05
        %v2568 = vadd.f32 %v2552, 1e-05
        %v2569 = vadd.f32 %v2553, 1e-05
        %v2570 = vadd.f32 %v2554, 1e-05
        %v2571 = vadd.f32 %v2555, 1e-05
        %v2572 = vadd.f32 %v2556, 1e-05
        %v2573 = vadd.f32 %v2557, 1e-05
        %v2574 = vadd.f32 %v2558, 1e-05
        %v2575 = vadd.f32 %v2559, 1e-05
        %v2576 = vadd.f32 %v2560, 1e-05
        %v2577 = vrsqrt.pop %v2561
        %v2578 = vrsqrt.pop %v2562
        %v2579 = vrsqrt.pop %v2563
        %v2580 = vrsqrt.pop %v2564
        %v2581 = vrsqrt.pop %v2565
        %v2582 = vrsqrt.pop %v2566
        %v2583 = vrsqrt.pop %v2567
        %v2584 = vrsqrt.pop %v2568
        %v2585 = vrsqrt.pop %v2569
        %v2586 = vrsqrt.pop %v2570
        %v2587 = vrsqrt.pop %v2571
        %v2588 = vrsqrt.pop %v2572
        %v2589 = vrsqrt.pop %v2573
        %v2590 = vrsqrt.pop %v2574
        %v2591 = vrsqrt.pop %v2575
        %v2592 = vrsqrt.pop %v2576
        %v2593 = vmul.f32 %v2481, %v2577
        %v2594 = vmul.f32 %v2482, %v2578
        %v2595 = vmul.f32 %v2483, %v2579
        %v2596 = vmul.f32 %v2484, %v2580
        %v2597 = vmul.f32 %v2485, %v2581
        %v2598 = vmul.f32 %v2486, %v2582
        %v2599 = vmul.f32 %v2487, %v2583
        %v2600 = vmul.f32 %v2488, %v2584
        %v2601 = vmul.f32 %v2489, %v2585
        %v2602 = vmul.f32 %v2490, %v2586
        %v2603 = vmul.f32 %v2491, %v2587
        %v2604 = vmul.f32 %v2492, %v2588
        %v2605 = vmul.f32 %v2493, %v2589
        %v2606 = vmul.f32 %v2494, %v2590
        %v2607 = vmul.f32 %v2495, %v2591
        %v2608 = vmul.f32 %v2496, %v2592
        %v2610 = vlaneseq
        %v2611 = vshrl.u32 %v2610, 7
        %v2612 = vsub.s32 0, %v2611
        %v2613 = vrot.slane %v2430, %v2612
        %v2615 = vmul.f32 %v2593, %v2613
        %v2616 = vmul.f32 %v2594, %v2613
        %v2617 = vmul.f32 %v2595, %v2613
        %v2618 = vmul.f32 %v2596, %v2613
        %v2619 = vmul.f32 %v2597, %v2613
        %v2620 = vmul.f32 %v2598, %v2613
        %v2621 = vmul.f32 %v2599, %v2613
        %v2622 = vmul.f32 %v2600, %v2613
        %v2623 = vmul.f32 %v2601, %v2613
        %v2624 = vmul.f32 %v2602, %v2613
        %v2625 = vmul.f32 %v2603, %v2613
        %v2626 = vmul.f32 %v2604, %v2613
        %v2627 = vmul.f32 %v2605, %v2613
        %v2628 = vmul.f32 %v2606, %v2613
        %v2629 = vmul.f32 %v2607, %v2613
        %v2630 = vmul.f32 %v2608, %v2613
        %v2632 = vlaneseq
        %v2633 = vshrl.u32 %v2632, 7
        %v2634 = vsub.s32 0, %v2633
        %v2635 = vrot.slane %v2431, %v2634
        %v2637 = vadd.f32 %v2615, %v2635
        %v2638 = vadd.f32 %v2616, %v2635
        %v2639 = vadd.f32 %v2617, %v2635
        %v2640 = vadd.f32 %v2618, %v2635
        %v2641 = vadd.f32 %v2619, %v2635
        %v2642 = vadd.f32 %v2620, %v2635
        %v2643 = vadd.f32 %v2621, %v2635
        %v2644 = vadd.f32 %v2622, %v2635
        %v2645 = vadd.f32 %v2623, %v2635
        %v2646 = vadd.f32 %v2624, %v2635
        %v2647 = vadd.f32 %v2625, %v2635
        %v2648 = vadd.f32 %v2626, %v2635
        %v2649 = vadd.f32 %v2627, %v2635
        %v2650 = vadd.f32 %v2628, %v2635
        %v2651 = vadd.f32 %v2629, %v2635
        %v2652 = vadd.f32 %v2630, %v2635
        %v2653 = vpack.c.bf16 %v2638, %v2637
        %v2654 = vpack.c.bf16 %v2640, %v2639
        %v2655 = vpack.c.bf16 %v2642, %v2641
        %v2656 = vpack.c.bf16 %v2644, %v2643
        %v2657 = vpack.c.bf16 %v2646, %v2645
        %v2658 = vpack.c.bf16 %v2648, %v2647
        %v2659 = vpack.c.bf16 %v2650, %v2649
        %v2660 = vpack.c.bf16 %v2652, %v2651
        %v2661 = vld [vmem:[#allocation10] sm:$0xf]
        %v2662 = vld [vmem:[#allocation10 + $0x4] sm:$0xf]
        %v2663 = vld [vmem:[#allocation10 + $0x8] sm:$0xf]
        %v2664 = vld [vmem:[#allocation10 + $0xc] sm:$0xf]
        %v2665 = vld [vmem:[#allocation10 + $0x10] sm:$0xf]
        %v2666 = vld [vmem:[#allocation10 + $0x14] sm:$0xf]
        %v2667 = vld [vmem:[#allocation10 + $0x18] sm:$0xf]
        %v2668 = vld [vmem:[#allocation10 + $0x1c] sm:$0xf]
        %v2669 = vld [vmem:[#allocation10 + $0x20] sm:$0xf]
        %v2670 = vld [vmem:[#allocation10 + $0x24] sm:$0xf]
        %v2671 = vld [vmem:[#allocation10 + $0x28] sm:$0xf]
        %v2672 = vld [vmem:[#allocation10 + $0x2c] sm:$0xf]
        %v2673 = vld [vmem:[#allocation10 + $0x30] sm:$0xf]
        %v2674 = vld [vmem:[#allocation10 + $0x34] sm:$0xf]
        %v2675 = vld [vmem:[#allocation10 + $0x38] sm:$0xf]
        %v2676 = vld [vmem:[#allocation10 + $0x3c] sm:$0xf]
        %v2693 = vunpack.c.l.b16 %v2661
        %v2694 = vunpack.c.l.b16 %v2662
        %v2695 = vunpack.c.l.b16 %v2663
        %v2696 = vunpack.c.l.b16 %v2664
        %v2697 = vunpack.c.l.b16 %v2665
        %v2698 = vunpack.c.l.b16 %v2666
        %v2699 = vunpack.c.l.b16 %v2667
        %v2700 = vunpack.c.l.b16 %v2668
        %v2701 = vunpack.c.l.b16 %v2669
        %v2702 = vunpack.c.l.b16 %v2670
        %v2703 = vunpack.c.l.b16 %v2671
        %v2704 = vunpack.c.l.b16 %v2672
        %v2705 = vunpack.c.l.b16 %v2673
        %v2706 = vunpack.c.l.b16 %v2674
        %v2707 = vunpack.c.l.b16 %v2675
        %v2708 = vunpack.c.l.b16 %v2676
        %v2709 = vpack.c.b16 %v2694, %v2693
        %v2710 = vpack.c.b16 %v2696, %v2695
        %v2711 = vpack.c.b16 %v2698, %v2697
        %v2712 = vpack.c.b16 %v2700, %v2699
        %v2713 = vpack.c.b16 %v2702, %v2701
        %v2714 = vpack.c.b16 %v2704, %v2703
        %v2715 = vpack.c.b16 %v2706, %v2705
        %v2716 = vpack.c.b16 %v2708, %v2707
        %2725 = vmatprep.subr.bf16.mxu0 0
        %2726 = vmatpush1.bf16.msra.mxu0 %v2716
        %2727 = vmatprep.subr.bf16.mxu0 0
        %2728 = vmatpush1.bf16.msra.mxu0 %v2715
        %2729 = vmatprep.subr.bf16.mxu0 0
        %2730 = vmatpush1.bf16.msra.mxu0 %v2714
        %2731 = vmatprep.subr.bf16.mxu0 0
        %2732 = vmatpush1.bf16.msra.mxu0 %v2713
        %2733 = vmatprep.subr.bf16.mxu0 0
        %2734 = vmatpush1.bf16.msra.mxu0 %v2712
        %2735 = vmatprep.subr.bf16.mxu0 0
        %2736 = vmatpush1.bf16.msra.mxu0 %v2711
        %2737 = vmatprep.subr.bf16.mxu0 0
        %2738 = vmatpush1.bf16.msra.mxu0 %v2710
        %2739 = vmatprep.subr.bf16.mxu0 0
        %2740 = vmatpush1.bf16.msra.mxu0 %v2709
        %2741 = vmatprep.subr.bf16.mxu0 0
        %2742 = vmatpush2.bf16.msra.mxu0 0
        %2743 = vmatprep.subr.bf16.mxu0 0
        %2744 = vmatpush2.bf16.msra.mxu0 0
        %2745 = vmatprep.subr.bf16.mxu0 0
        %2746 = vmatpush2.bf16.msra.mxu0 0
        %2747 = vmatprep.subr.bf16.mxu0 0
        %2748 = vmatpush2.bf16.msra.mxu0 0
        %2749 = vmatprep.subr.bf16.mxu0 0
        %2750 = vmatpush2.bf16.msra.mxu0 0
        %2751 = vmatprep.subr.bf16.mxu0 0
        %2752 = vmatpush2.bf16.msra.mxu0 0
        %2753 = vmatprep.subr.bf16.mxu0 0
        %2754 = vmatpush2.bf16.msra.mxu0 0
        %2755 = vmatprep.subr.bf16.mxu0 0
        %2756 = vmatpush2.bf16.msra.mxu0 0
        %2757 = vmatprep.mubr.bf16.mxu0 0
        %2758 = vmatmul.mubr.bf16.gmra.mxu0 %v2653
        %v2759 = vpop.f32.mrf.mxu0
        %v2760 = vadd.f32 0.0, %v2759
        %v2761 = vpop.f32.mrf.mxu0
        %v2762 = vpop.f32.mrf.mxu0
        %v2763 = vadd.f32 0.0, %v2762
        %v2764 = vpop.f32.mrf.mxu0
        %2765 = vmatprep.mubr.bf16.mxu0 0
        %2766 = vmatmul.mubr.bf16.gmra.mxu0 %v2654
        %v2767 = vpop.f32.mrf.mxu0
        %v2768 = vadd.f32 0.0, %v2767
        %v2769 = vpop.f32.mrf.mxu0
        %v2770 = vpop.f32.mrf.mxu0
        %v2771 = vadd.f32 0.0, %v2770
        %v2772 = vpop.f32.mrf.mxu0
        %2773 = vmatprep.mubr.bf16.mxu0 0
        %2774 = vmatmul.mubr.bf16.gmra.mxu0 %v2655
        %v2775 = vpop.f32.mrf.mxu0
        %v2776 = vadd.f32 0.0, %v2775
        %v2777 = vpop.f32.mrf.mxu0
        %v2778 = vpop.f32.mrf.mxu0
        %v2779 = vadd.f32 0.0, %v2778
        %v2780 = vpop.f32.mrf.mxu0
        %2781 = vmatprep.mubr.bf16.mxu0 0
        %2782 = vmatmul.mubr.bf16.gmra.mxu0 %v2656
        %v2783 = vpop.f32.mrf.mxu0
        %v2784 = vadd.f32 0.0, %v2783
        %v2785 = vpop.f32.mrf.mxu0
        %v2786 = vpop.f32.mrf.mxu0
        %v2787 = vadd.f32 0.0, %v2786
        %v2788 = vpop.f32.mrf.mxu0
        %2789 = vmatprep.mubr.bf16.mxu0 0
        %2790 = vmatmul.mubr.bf16.gmra.mxu0 %v2657
        %v2791 = vpop.f32.mrf.mxu0
        %v2792 = vadd.f32 0.0, %v2791
        %v2793 = vpop.f32.mrf.mxu0
        %v2794 = vpop.f32.mrf.mxu0
        %v2795 = vadd.f32 0.0, %v2794
        %v2796 = vpop.f32.mrf.mxu0
        %2797 = vmatprep.mubr.bf16.mxu0 0
        %2798 = vmatmul.mubr.bf16.gmra.mxu0 %v2658
        %v2799 = vpop.f32.mrf.mxu0
        %v2800 = vadd.f32 0.0, %v2799
        %v2801 = vpop.f32.mrf.mxu0
        %v2802 = vpop.f32.mrf.mxu0
        %v2803 = vadd.f32 0.0, %v2802
        %v2804 = vpop.f32.mrf.mxu0
        %2805 = vmatprep.mubr.bf16.mxu0 0
        %2806 = vmatmul.mubr.bf16.gmra.mxu0 %v2659
        %v2807 = vpop.f32.mrf.mxu0
        %v2808 = vadd.f32 0.0, %v2807
        %v2809 = vpop.f32.mrf.mxu0
        %v2810 = vpop.f32.mrf.mxu0
        %v2811 = vadd.f32 0.0, %v2810
        %v2812 = vpop.f32.mrf.mxu0
        %2813 = vmatprep.mubr.bf16.mxu0 0
        %2814 = vmatmul.mubr.bf16.gmra.mxu0 %v2660
        %v2815 = vpop.f32.mrf.mxu0
        %v2816 = vadd.f32 0.0, %v2815
        %v2817 = vpop.f32.mrf.mxu0
        %v2818 = vpop.f32.mrf.mxu0
        %v2819 = vadd.f32 0.0, %v2818
        %v2820 = vpop.f32.mrf.mxu0
        %2821 = vdwg.mxu0
        %v2822 = vpack.c.bf16 %v2763, %v2760
        %v2823 = vpack.c.bf16 %v2771, %v2768
        %v2824 = vpack.c.bf16 %v2779, %v2776
        %v2825 = vpack.c.bf16 %v2787, %v2784
        %v2826 = vpack.c.bf16 %v2795, %v2792
        %v2827 = vpack.c.bf16 %v2803, %v2800
        %v2828 = vpack.c.bf16 %v2811, %v2808
        %v2829 = vpack.c.bf16 %v2819, %v2816
        %v2830 = vld [vmem:[#allocation2] sm:$0xf]
        %v2831 = vld [vmem:[#allocation2 + $0x4] sm:$0xf]
        %v2832 = vld [vmem:[#allocation2 + $0x8] sm:$0xf]
        %v2833 = vld [vmem:[#allocation2 + $0xc] sm:$0xf]
        %v2834 = vld [vmem:[#allocation2 + $0x10] sm:$0xf]
        %v2835 = vld [vmem:[#allocation2 + $0x14] sm:$0xf]
        %v2836 = vld [vmem:[#allocation2 + $0x18] sm:$0xf]
        %v2837 = vld [vmem:[#allocation2 + $0x1c] sm:$0xf]
        %v2838 = vld [vmem:[#allocation2 + $0x20] sm:$0xf]
        %v2839 = vld [vmem:[#allocation2 + $0x24] sm:$0xf]
        %v2840 = vld [vmem:[#allocation2 + $0x28] sm:$0xf]
        %v2841 = vld [vmem:[#allocation2 + $0x2c] sm:$0xf]
        %v2842 = vld [vmem:[#allocation2 + $0x30] sm:$0xf]
        %v2843 = vld [vmem:[#allocation2 + $0x34] sm:$0xf]
        %v2844 = vld [vmem:[#allocation2 + $0x38] sm:$0xf]
        %v2845 = vld [vmem:[#allocation2 + $0x3c] sm:$0xf]
        %v2846 = vld [vmem:[#allocation2 + $0x40] sm:$0xf]
        %v2847 = vld [vmem:[#allocation2 + $0x44] sm:$0xf]
        %v2848 = vld [vmem:[#allocation2 + $0x48] sm:$0xf]
        %v2849 = vld [vmem:[#allocation2 + $0x4c] sm:$0xf]
        %v2850 = vld [vmem:[#allocation2 + $0x50] sm:$0xf]
        %v2851 = vld [vmem:[#allocation2 + $0x54] sm:$0xf]
        %v2852 = vld [vmem:[#allocation2 + $0x58] sm:$0xf]
        %v2853 = vld [vmem:[#allocation2 + $0x5c] sm:$0xf]
        %v2854 = vld [vmem:[#allocation2 + $0x60] sm:$0xf]
        %v2855 = vld [vmem:[#allocation2 + $0x64] sm:$0xf]
        %v2856 = vld [vmem:[#allocation2 + $0x68] sm:$0xf]
        %v2857 = vld [vmem:[#allocation2 + $0x6c] sm:$0xf]
        %v2858 = vld [vmem:[#allocation2 + $0x70] sm:$0xf]
        %v2859 = vld [vmem:[#allocation2 + $0x74] sm:$0xf]
        %v2860 = vld [vmem:[#allocation2 + $0x78] sm:$0xf]
        %v2861 = vld [vmem:[#allocation2 + $0x7c] sm:$0xf]
        %v2894 = vunpack.c.l.b16 %v2830
        %v2895 = vunpack.c.l.b16 %v2831
        %v2896 = vunpack.c.l.b16 %v2832
        %v2897 = vunpack.c.l.b16 %v2833
        %v2898 = vunpack.c.l.b16 %v2834
        %v2899 = vunpack.c.l.b16 %v2835
        %v2900 = vunpack.c.l.b16 %v2836
        %v2901 = vunpack.c.l.b16 %v2837
        %v2902 = vunpack.c.l.b16 %v2838
        %v2903 = vunpack.c.l.b16 %v2839
        %v2904 = vunpack.c.l.b16 %v2840
        %v2905 = vunpack.c.l.b16 %v2841
        %v2906 = vunpack.c.l.b16 %v2842
        %v2907 = vunpack.c.l.b16 %v2843
        %v2908 = vunpack.c.l.b16 %v2844
        %v2909 = vunpack.c.l.b16 %v2845
        %v2910 = vunpack.c.l.b16 %v2846
        %v2911 = vunpack.c.l.b16 %v2847
        %v2912 = vunpack.c.l.b16 %v2848
        %v2913 = vunpack.c.l.b16 %v2849
        %v2914 = vunpack.c.l.b16 %v2850
        %v2915 = vunpack.c.l.b16 %v2851
        %v2916 = vunpack.c.l.b16 %v2852
        %v2917 = vunpack.c.l.b16 %v2853
        %v2918 = vunpack.c.l.b16 %v2854
        %v2919 = vunpack.c.l.b16 %v2855
        %v2920 = vunpack.c.l.b16 %v2856
        %v2921 = vunpack.c.l.b16 %v2857
        %v2922 = vunpack.c.l.b16 %v2858
        %v2923 = vunpack.c.l.b16 %v2859
        %v2924 = vunpack.c.l.b16 %v2860
        %v2925 = vunpack.c.l.b16 %v2861
        %v2926 = vpack.c.b16 %v2895, %v2894
        %v2927 = vpack.c.b16 %v2897, %v2896
        %v2928 = vpack.c.b16 %v2899, %v2898
        %v2929 = vpack.c.b16 %v2901, %v2900
        %v2930 = vpack.c.b16 %v2903, %v2902
        %v2931 = vpack.c.b16 %v2905, %v2904
        %v2932 = vpack.c.b16 %v2907, %v2906
        %v2933 = vpack.c.b16 %v2909, %v2908
        %v2934 = vpack.c.b16 %v2911, %v2910
        %v2935 = vpack.c.b16 %v2913, %v2912
        %v2936 = vpack.c.b16 %v2915, %v2914
        %v2937 = vpack.c.b16 %v2917, %v2916
        %v2938 = vpack.c.b16 %v2919, %v2918
        %v2939 = vpack.c.b16 %v2921, %v2920
        %v2940 = vpack.c.b16 %v2923, %v2922
        %v2941 = vpack.c.b16 %v2925, %v2924
        %2958 = vmatprep.subr.bf16.mxu0 0
        %2959 = vmatpush1.bf16.xpose.msra.mxu0 %v2933
        %2960 = vmatprep.subr.bf16.mxu0 0
        %2961 = vmatpush1.bf16.xpose.msra.mxu0 %v2932
        %2962 = vmatprep.subr.bf16.mxu0 0
        %2963 = vmatpush1.bf16.xpose.msra.mxu0 %v2931
        %2964 = vmatprep.subr.bf16.mxu0 0
        %2965 = vmatpush1.bf16.xpose.msra.mxu0 %v2930
        %2966 = vmatprep.subr.bf16.mxu0 0
        %2967 = vmatpush1.bf16.xpose.msra.mxu0 %v2929
        %2968 = vmatprep.subr.bf16.mxu0 0
        %2969 = vmatpush1.bf16.xpose.msra.mxu0 %v2928
        %2970 = vmatprep.subr.bf16.mxu0 0
        %2971 = vmatpush1.bf16.xpose.msra.mxu0 %v2927
        %2972 = vmatprep.subr.bf16.mxu0 0
        %2973 = vmatpush1.bf16.xpose.msra.mxu0 %v2926
        %2974 = vmatprep.subr.bf16.mxu0 0
        %2975 = vmatpush2.bf16.xpose.msra.mxu0 %v2941
        %2976 = vmatprep.subr.bf16.mxu0 0
        %2977 = vmatpush2.bf16.xpose.msra.mxu0 %v2940
        %2978 = vmatprep.subr.bf16.mxu0 0
        %2979 = vmatpush2.bf16.xpose.msra.mxu0 %v2939
        %2980 = vmatprep.subr.bf16.mxu0 0
        %2981 = vmatpush2.bf16.xpose.msra.mxu0 %v2938
        %2982 = vmatprep.subr.bf16.mxu0 0
        %2983 = vmatpush2.bf16.xpose.msra.mxu0 %v2937
        %2984 = vmatprep.subr.bf16.mxu0 0
        %2985 = vmatpush2.bf16.xpose.msra.mxu0 %v2936
        %2986 = vmatprep.subr.bf16.mxu0 0
        %2987 = vmatpush2.bf16.xpose.msra.mxu0 %v2935
        %2988 = vmatprep.subr.bf16.mxu0 0
        %2989 = vmatpush2.bf16.xpose.msra.mxu0 %v2934
        %2990 = vmatprep.mubr.bf16.mxu0 0
        %2991 = vmatmul.mubr.bf16.gmra.mxu0 %v2822
        %v2992 = vpop.f32.mrf.mxu0
        %v2993 = vadd.f32 0.0, %v2992
        %v2994 = vpop.f32.mrf.mxu0
        %v2995 = vadd.f32 0.0, %v2994
        %v2996 = vpop.f32.mrf.mxu0
        %v2997 = vadd.f32 0.0, %v2996
        %v2998 = vpop.f32.mrf.mxu0
        %v2999 = vadd.f32 0.0, %v2998
        %3000 = vmatprep.mubr.bf16.mxu0 0
        %3001 = vmatmul.mubr.bf16.gmra.mxu0 %v2823
        %v3002 = vpop.f32.mrf.mxu0
        %v3003 = vadd.f32 0.0, %v3002
        %v3004 = vpop.f32.mrf.mxu0
        %v3005 = vadd.f32 0.0, %v3004
        %v3006 = vpop.f32.mrf.mxu0
        %v3007 = vadd.f32 0.0, %v3006
        %v3008 = vpop.f32.mrf.mxu0
        %v3009 = vadd.f32 0.0, %v3008
        %3010 = vmatprep.mubr.bf16.mxu0 0
        %3011 = vmatmul.mubr.bf16.gmra.mxu0 %v2824
        %v3012 = vpop.f32.mrf.mxu0
        %v3013 = vadd.f32 0.0, %v3012
        %v3014 = vpop.f32.mrf.mxu0
        %v3015 = vadd.f32 0.0, %v3014
        %v3016 = vpop.f32.mrf.mxu0
        %v3017 = vadd.f32 0.0, %v3016
        %v3018 = vpop.f32.mrf.mxu0
        %v3019 = vadd.f32 0.0, %v3018
        %3020 = vmatprep.mubr.bf16.mxu0 0
        %3021 = vmatmul.mubr.bf16.gmra.mxu0 %v2825
        %v3022 = vpop.f32.mrf.mxu0
        %v3023 = vadd.f32 0.0, %v3022
        %v3024 = vpop.f32.mrf.mxu0
        %v3025 = vadd.f32 0.0, %v3024
        %v3026 = vpop.f32.mrf.mxu0
        %v3027 = vadd.f32 0.0, %v3026
        %v3028 = vpop.f32.mrf.mxu0
        %v3029 = vadd.f32 0.0, %v3028
        %3030 = vmatprep.mubr.bf16.mxu0 0
        %3031 = vmatmul.mubr.bf16.gmra.mxu0 %v2826
        %v3032 = vpop.f32.mrf.mxu0
        %v3033 = vadd.f32 0.0, %v3032
        %v3034 = vpop.f32.mrf.mxu0
        %v3035 = vadd.f32 0.0, %v3034
        %v3036 = vpop.f32.mrf.mxu0
        %v3037 = vadd.f32 0.0, %v3036
        %v3038 = vpop.f32.mrf.mxu0
        %v3039 = vadd.f32 0.0, %v3038
        %3040 = vmatprep.mubr.bf16.mxu0 0
        %3041 = vmatmul.mubr.bf16.gmra.mxu0 %v2827
        %v3042 = vpop.f32.mrf.mxu0
        %v3043 = vadd.f32 0.0, %v3042
        %v3044 = vpop.f32.mrf.mxu0
        %v3045 = vadd.f32 0.0, %v3044
        %v3046 = vpop.f32.mrf.mxu0
        %v3047 = vadd.f32 0.0, %v3046
        %v3048 = vpop.f32.mrf.mxu0
        %v3049 = vadd.f32 0.0, %v3048
        %3050 = vmatprep.mubr.bf16.mxu0 0
        %3051 = vmatmul.mubr.bf16.gmra.mxu0 %v2828
        %v3052 = vpop.f32.mrf.mxu0
        %v3053 = vadd.f32 0.0, %v3052
        %v3054 = vpop.f32.mrf.mxu0
        %v3055 = vadd.f32 0.0, %v3054
        %v3056 = vpop.f32.mrf.mxu0
        %v3057 = vadd.f32 0.0, %v3056
        %v3058 = vpop.f32.mrf.mxu0
        %v3059 = vadd.f32 0.0, %v3058
        %3060 = vmatprep.mubr.bf16.mxu0 0
        %3061 = vmatmul.mubr.bf16.gmra.mxu0 %v2829
        %v3062 = vpop.f32.mrf.mxu0
        %v3063 = vadd.f32 0.0, %v3062
        %v3064 = vpop.f32.mrf.mxu0
        %v3065 = vadd.f32 0.0, %v3064
        %v3066 = vpop.f32.mrf.mxu0
        %v3067 = vadd.f32 0.0, %v3066
        %v3068 = vpop.f32.mrf.mxu0
        %v3069 = vadd.f32 0.0, %v3068
        %3070 = vdwg.mxu0
        %v3071 = vmax.f32 %v2993, 0.0
        %v3072 = vmax.f32 %v2995, 0.0
        %v3073 = vmax.f32 %v2997, 0.0
        %v3074 = vmax.f32 %v2999, 0.0
        %v3075 = vmax.f32 %v3003, 0.0
        %v3076 = vmax.f32 %v3005, 0.0
        %v3077 = vmax.f32 %v3007, 0.0
        %v3078 = vmax.f32 %v3009, 0.0
        %v3079 = vmax.f32 %v3013, 0.0
        %v3080 = vmax.f32 %v3015, 0.0
        %v3081 = vmax.f32 %v3017, 0.0
        %v3082 = vmax.f32 %v3019, 0.0
        %v3083 = vmax.f32 %v3023, 0.0
        %v3084 = vmax.f32 %v3025, 0.0
        %v3085 = vmax.f32 %v3027, 0.0
        %v3086 = vmax.f32 %v3029, 0.0
        %v3087 = vmax.f32 %v3033, 0.0
        %v3088 = vmax.f32 %v3035, 0.0
        %v3089 = vmax.f32 %v3037, 0.0
        %v3090 = vmax.f32 %v3039, 0.0
        %v3091 = vmax.f32 %v3043, 0.0
        %v3092 = vmax.f32 %v3045, 0.0
        %v3093 = vmax.f32 %v3047, 0.0
        %v3094 = vmax.f32 %v3049, 0.0
        %v3095 = vmax.f32 %v3053, 0.0
        %v3096 = vmax.f32 %v3055, 0.0
        %v3097 = vmax.f32 %v3057, 0.0
        %v3098 = vmax.f32 %v3059, 0.0
        %v3099 = vmax.f32 %v3063, 0.0
        %v3100 = vmax.f32 %v3065, 0.0
        %v3101 = vmax.f32 %v3067, 0.0
        %v3102 = vmax.f32 %v3069, 0.0
        %v3103 = vmin.f32 %v3071, 6.0
        %v3104 = vmin.f32 %v3072, 6.0
        %v3105 = vmin.f32 %v3073, 6.0
        %v3106 = vmin.f32 %v3074, 6.0
        %v3107 = vmin.f32 %v3075, 6.0
        %v3108 = vmin.f32 %v3076, 6.0
        %v3109 = vmin.f32 %v3077, 6.0
        %v3110 = vmin.f32 %v3078, 6.0
        %v3111 = vmin.f32 %v3079, 6.0
        %v3112 = vmin.f32 %v3080, 6.0
        %v3113 = vmin.f32 %v3081, 6.0
        %v3114 = vmin.f32 %v3082, 6.0
        %v3115 = vmin.f32 %v3083, 6.0
        %v3116 = vmin.f32 %v3084, 6.0
        %v3117 = vmin.f32 %v3085, 6.0
        %v3118 = vmin.f32 %v3086, 6.0
        %v3119 = vmin.f32 %v3087, 6.0
        %v3120 = vmin.f32 %v3088, 6.0
        %v3121 = vmin.f32 %v3089, 6.0
        %v3122 = vmin.f32 %v3090, 6.0
        %v3123 = vmin.f32 %v3091, 6.0
        %v3124 = vmin.f32 %v3092, 6.0
        %v3125 = vmin.f32 %v3093, 6.0
        %v3126 = vmin.f32 %v3094, 6.0
        %v3127 = vmin.f32 %v3095, 6.0
        %v3128 = vmin.f32 %v3096, 6.0
        %v3129 = vmin.f32 %v3097, 6.0
        %v3130 = vmin.f32 %v3098, 6.0
        %v3131 = vmin.f32 %v3099, 6.0
        %v3132 = vmin.f32 %v3100, 6.0
        %v3133 = vmin.f32 %v3101, 6.0
        %v3134 = vmin.f32 %v3102, 6.0
        %v3135 = vmul.f32 %v3103, 0.088388346
        %v3136 = vmul.f32 %v3104, 0.088388346
        %v3137 = vmul.f32 %v3105, 0.088388346
        %v3138 = vmul.f32 %v3106, 0.088388346
        %v3139 = vmul.f32 %v3107, 0.088388346
        %v3140 = vmul.f32 %v3108, 0.088388346
        %v3141 = vmul.f32 %v3109, 0.088388346
        %v3142 = vmul.f32 %v3110, 0.088388346
        %v3143 = vmul.f32 %v3111, 0.088388346
        %v3144 = vmul.f32 %v3112, 0.088388346
        %v3145 = vmul.f32 %v3113, 0.088388346
        %v3146 = vmul.f32 %v3114, 0.088388346
        %v3147 = vmul.f32 %v3115, 0.088388346
        %v3148 = vmul.f32 %v3116, 0.088388346
        %v3149 = vmul.f32 %v3117, 0.088388346
        %v3150 = vmul.f32 %v3118, 0.088388346
        %v3151 = vmul.f32 %v3119, 0.088388346
        %v3152 = vmul.f32 %v3120, 0.088388346
        %v3153 = vmul.f32 %v3121, 0.088388346
        %v3154 = vmul.f32 %v3122, 0.088388346
        %v3155 = vmul.f32 %v3123, 0.088388346
        %v3156 = vmul.f32 %v3124, 0.088388346
        %v3157 = vmul.f32 %v3125, 0.088388346
        %v3158 = vmul.f32 %v3126, 0.088388346
        %v3159 = vmul.f32 %v3127, 0.088388346
        %v3160 = vmul.f32 %v3128, 0.088388346
        %v3161 = vmul.f32 %v3129, 0.088388346
        %v3162 = vmul.f32 %v3130, 0.088388346
        %v3163 = vmul.f32 %v3131, 0.088388346
        %v3164 = vmul.f32 %v3132, 0.088388346
        %v3165 = vmul.f32 %v3133, 0.088388346
        %v3166 = vmul.f32 %v3134, 0.088388346
        %3167 = vst [vmem:[%s671] sm:$0xff] %v3135
        %3168 = vst [vmem:[%s671 + $0x8] sm:$0xff] %v3136
        %3169 = vst [vmem:[%s671 + $0x10] sm:$0xff] %v3137
        %3170 = vst [vmem:[%s671 + $0x18] sm:$0xff] %v3138
        %3171 = vst [vmem:[%s671 + $0x20] sm:$0xff] %v3139
        %3172 = vst [vmem:[%s671 + $0x28] sm:$0xff] %v3140
        %3173 = vst [vmem:[%s671 + $0x30] sm:$0xff] %v3141
        %3174 = vst [vmem:[%s671 + $0x38] sm:$0xff] %v3142
        %3175 = vst [vmem:[%s671 + $0x40] sm:$0xff] %v3143
        %3176 = vst [vmem:[%s671 + $0x48] sm:$0xff] %v3144
        %3177 = vst [vmem:[%s671 + $0x50] sm:$0xff] %v3145
        %3178 = vst [vmem:[%s671 + $0x58] sm:$0xff] %v3146
        %3179 = vst [vmem:[%s671 + $0x60] sm:$0xff] %v3147
        %3180 = vst [vmem:[%s671 + $0x68] sm:$0xff] %v3148
        %3181 = vst [vmem:[%s671 + $0x70] sm:$0xff] %v3149
        %3182 = vst [vmem:[%s671 + $0x78] sm:$0xff] %v3150
        %3183 = vst [vmem:[%s671 + $0x80] sm:$0xff] %v3151
        %3184 = vst [vmem:[%s671 + $0x88] sm:$0xff] %v3152
        %3185 = vst [vmem:[%s671 + $0x90] sm:$0xff] %v3153
        %3186 = vst [vmem:[%s671 + $0x98] sm:$0xff] %v3154
        %3187 = vst [vmem:[%s671 + $0xa0] sm:$0xff] %v3155
        %3188 = vst [vmem:[%s671 + $0xa8] sm:$0xff] %v3156
        %3189 = vst [vmem:[%s671 + $0xb0] sm:$0xff] %v3157
        %3190 = vst [vmem:[%s671 + $0xb8] sm:$0xff] %v3158
        %3191 = vst [vmem:[%s671 + $0xc0] sm:$0xff] %v3159
        %3192 = vst [vmem:[%s671 + $0xc8] sm:$0xff] %v3160
        %3193 = vst [vmem:[%s671 + $0xd0] sm:$0xff] %v3161
        %3194 = vst [vmem:[%s671 + $0xd8] sm:$0xff] %v3162
        %3195 = vst [vmem:[%s671 + $0xe0] sm:$0xff] %v3163
        %3196 = vst [vmem:[%s671 + $0xe8] sm:$0xff] %v3164
        %3197 = vst [vmem:[%s671 + $0xf0] sm:$0xff] %v3165
        %3198 = vst [vmem:[%s671 + $0xf8] sm:$0xff] %v3166
        %v3199 = vmul.f32 %v3135, 1.442695
        %v3200 = vpow.pop %v3199
        %v3201 = vmul.f32 %v3136, 1.442695
        %v3202 = vpow.pop %v3201
        %v3203 = vmul.f32 %v3137, 1.442695
        %v3204 = vpow.pop %v3203
        %v3205 = vmul.f32 %v3138, 1.442695
        %v3206 = vpow.pop %v3205
        %v3207 = vmul.f32 %v3139, 1.442695
        %v3208 = vpow.pop %v3207
        %v3209 = vmul.f32 %v3140, 1.442695
        %v3210 = vpow.pop %v3209
        %v3211 = vmul.f32 %v3141, 1.442695
        %v3212 = vpow.pop %v3211
        %v3213 = vmul.f32 %v3142, 1.442695
        %v3214 = vpow.pop %v3213
        %v3215 = vmul.f32 %v3143, 1.442695
        %v3216 = vpow.pop %v3215
        %v3217 = vmul.f32 %v3144, 1.442695
        %v3218 = vpow.pop %v3217
        %v3219 = vmul.f32 %v3145, 1.442695
        %v3220 = vpow.pop %v3219
        %v3221 = vmul.f32 %v3146, 1.442695
        %v3222 = vpow.pop %v3221
        %v3223 = vmul.f32 %v3147, 1.442695
        %v3224 = vpow.pop %v3223
        %v3225 = vmul.f32 %v3148, 1.442695
        %v3226 = vpow.pop %v3225
        %v3227 = vmul.f32 %v3149, 1.442695
        %v3228 = vpow.pop %v3227
        %v3229 = vmul.f32 %v3150, 1.442695
        %v3230 = vpow.pop %v3229
        %v3231 = vmul.f32 %v3151, 1.442695
        %v3232 = vpow.pop %v3231
        %v3233 = vmul.f32 %v3152, 1.442695
        %v3234 = vpow.pop %v3233
        %v3235 = vmul.f32 %v3153, 1.442695
        %v3236 = vpow.pop %v3235
        %v3237 = vmul.f32 %v3154, 1.442695
        %v3238 = vpow.pop %v3237
        %v3239 = vmul.f32 %v3155, 1.442695
        %v3240 = vpow.pop %v3239
        %v3241 = vmul.f32 %v3156, 1.442695
        %v3242 = vpow.pop %v3241
        %v3243 = vmul.f32 %v3157, 1.442695
        %v3244 = vpow.pop %v3243
        %v3245 = vmul.f32 %v3158, 1.442695
        %v3246 = vpow.pop %v3245
        %v3247 = vmul.f32 %v3159, 1.442695
        %v3248 = vpow.pop %v3247
        %v3249 = vmul.f32 %v3160, 1.442695
        %v3250 = vpow.pop %v3249
        %v3251 = vmul.f32 %v3161, 1.442695
        %v3252 = vpow.pop %v3251
        %v3253 = vmul.f32 %v3162, 1.442695
        %v3254 = vpow.pop %v3253
        %v3255 = vmul.f32 %v3163, 1.442695
        %v3256 = vpow.pop %v3255
        %v3257 = vmul.f32 %v3164, 1.442695
        %v3258 = vpow.pop %v3257
        %v3259 = vmul.f32 %v3165, 1.442695
        %v3260 = vpow.pop %v3259
        %v3261 = vmul.f32 %v3166, 1.442695
        %v3262 = vpow.pop %v3261
        %v3263 = vadd.f32 %v3200, %v3202
        %3264 = vadd.xlane.f32.xlu0 %v3263
        %v3265 = vpop.xlane.xlu0 %3264
        %v3266 = vadd.f32 %v3204, %v3206
        %3267 = vadd.xlane.f32.xlu0 %v3266
        %v3268 = vpop.xlane.xlu0 %3267
        %v3269 = vadd.f32 %v3208, %v3210
        %3270 = vadd.xlane.f32.xlu0 %v3269
        %v3271 = vpop.xlane.xlu0 %3270
        %v3272 = vadd.f32 %v3212, %v3214
        %3273 = vadd.xlane.f32.xlu0 %v3272
        %v3274 = vpop.xlane.xlu0 %3273
        %v3275 = vadd.f32 %v3216, %v3218
        %3276 = vadd.xlane.f32.xlu0 %v3275
        %v3277 = vpop.xlane.xlu0 %3276
        %v3278 = vadd.f32 %v3220, %v3222
        %3279 = vadd.xlane.f32.xlu0 %v3278
        %v3280 = vpop.xlane.xlu0 %3279
        %v3281 = vadd.f32 %v3224, %v3226
        %3282 = vadd.xlane.f32.xlu0 %v3281
        %v3283 = vpop.xlane.xlu0 %3282
        %v3284 = vadd.f32 %v3228, %v3230
        %3285 = vadd.xlane.f32.xlu0 %v3284
        %v3286 = vpop.xlane.xlu0 %3285
        %v3287 = vadd.f32 %v3232, %v3234
        %3288 = vadd.xlane.f32.xlu0 %v3287
        %v3289 = vpop.xlane.xlu0 %3288
        %v3290 = vadd.f32 %v3236, %v3238
        %3291 = vadd.xlane.f32.xlu0 %v3290
        %v3292 = vpop.xlane.xlu0 %3291
        %v3293 = vadd.f32 %v3240, %v3242
        %3294 = vadd.xlane.f32.xlu0 %v3293
        %v3295 = vpop.xlane.xlu0 %3294
        %v3296 = vadd.f32 %v3244, %v3246
        %3297 = vadd.xlane.f32.xlu0 %v3296
        %v3298 = vpop.xlane.xlu0 %3297
        %v3299 = vadd.f32 %v3248, %v3250
        %3300 = vadd.xlane.f32.xlu0 %v3299
        %v3301 = vpop.xlane.xlu0 %3300
        %v3302 = vadd.f32 %v3252, %v3254
        %3303 = vadd.xlane.f32.xlu0 %v3302
        %v3304 = vpop.xlane.xlu0 %3303
        %v3305 = vadd.f32 %v3256, %v3258
        %3306 = vadd.xlane.f32.xlu0 %v3305
        %v3307 = vpop.xlane.xlu0 %3306
        %v3308 = vadd.f32 %v3260, %v3262
        %3309 = vadd.xlane.f32.xlu0 %v3308
        %v3310 = vpop.xlane.xlu0 %3309
        %v3311 = vrcp.pop %v3265
        %v3312 = vrcp.pop %v3268
        %v3313 = vrcp.pop %v3271
        %v3314 = vrcp.pop %v3274
        %v3315 = vrcp.pop %v3277
        %v3316 = vrcp.pop %v3280
        %v3317 = vrcp.pop %v3283
        %v3318 = vrcp.pop %v3286
        %v3319 = vrcp.pop %v3289
        %v3320 = vrcp.pop %v3292
        %v3321 = vrcp.pop %v3295
        %v3322 = vrcp.pop %v3298
        %v3323 = vrcp.pop %v3301
        %v3324 = vrcp.pop %v3304
        %v3325 = vrcp.pop %v3307
        %v3326 = vrcp.pop %v3310
        %v3327 = vmul.f32 %v3200, %v3311
        %v3328 = vmul.f32 %v3202, %v3311
        %v3329 = vmul.f32 %v3204, %v3312
        %v3330 = vmul.f32 %v3206, %v3312
        %v3331 = vmul.f32 %v3208, %v3313
        %v3332 = vmul.f32 %v3210, %v3313
        %v3333 = vmul.f32 %v3212, %v3314
        %v3334 = vmul.f32 %v3214, %v3314
        %v3335 = vmul.f32 %v3216, %v3315
        %v3336 = vmul.f32 %v3218, %v3315
        %v3337 = vmul.f32 %v3220, %v3316
        %v3338 = vmul.f32 %v3222, %v3316
        %v3339 = vmul.f32 %v3224, %v3317
        %v3340 = vmul.f32 %v3226, %v3317
        %v3341 = vmul.f32 %v3228, %v3318
        %v3342 = vmul.f32 %v3230, %v3318
        %v3343 = vmul.f32 %v3232, %v3319
        %v3344 = vmul.f32 %v3234, %v3319
        %v3345 = vmul.f32 %v3236, %v3320
        %v3346 = vmul.f32 %v3238, %v3320
        %v3347 = vmul.f32 %v3240, %v3321
        %v3348 = vmul.f32 %v3242, %v3321
        %v3349 = vmul.f32 %v3244, %v3322
        %v3350 = vmul.f32 %v3246, %v3322
        %v3351 = vmul.f32 %v3248, %v3323
        %v3352 = vmul.f32 %v3250, %v3323
        %v3353 = vmul.f32 %v3252, %v3324
        %v3354 = vmul.f32 %v3254, %v3324
        %v3355 = vmul.f32 %v3256, %v3325
        %v3356 = vmul.f32 %v3258, %v3325
        %v3357 = vmul.f32 %v3260, %v3326
        %v3358 = vmul.f32 %v3262, %v3326
        %v3359 = vpack.c.bf16 %v3329, %v3327
        %v3360 = vpack.c.bf16 %v3330, %v3328
        %v3361 = vpack.c.bf16 %v3333, %v3331
        %v3362 = vpack.c.bf16 %v3334, %v3332
        %v3363 = vpack.c.bf16 %v3337, %v3335
        %v3364 = vpack.c.bf16 %v3338, %v3336
        %v3365 = vpack.c.bf16 %v3341, %v3339
        %v3366 = vpack.c.bf16 %v3342, %v3340
        %v3367 = vpack.c.bf16 %v3345, %v3343
        %v3368 = vpack.c.bf16 %v3346, %v3344
        %v3369 = vpack.c.bf16 %v3349, %v3347
        %v3370 = vpack.c.bf16 %v3350, %v3348
        %v3371 = vpack.c.bf16 %v3353, %v3351
        %v3372 = vpack.c.bf16 %v3354, %v3352
        %v3373 = vpack.c.bf16 %v3357, %v3355
        %v3374 = vpack.c.bf16 %v3358, %v3356
        %v3375 = vld [vmem:[#allocation3] sm:$0xf]
        %v3376 = vld [vmem:[#allocation3 + $0x4] sm:$0xf]
        %v3377 = vld [vmem:[#allocation3 + $0x8] sm:$0xf]
        %v3378 = vld [vmem:[#allocation3 + $0xc] sm:$0xf]
        %v3379 = vld [vmem:[#allocation3 + $0x10] sm:$0xf]
        %v3380 = vld [vmem:[#allocation3 + $0x14] sm:$0xf]
        %v3381 = vld [vmem:[#allocation3 + $0x18] sm:$0xf]
        %v3382 = vld [vmem:[#allocation3 + $0x1c] sm:$0xf]
        %v3383 = vld [vmem:[#allocation3 + $0x20] sm:$0xf]
        %v3384 = vld [vmem:[#allocation3 + $0x24] sm:$0xf]
        %v3385 = vld [vmem:[#allocation3 + $0x28] sm:$0xf]
        %v3386 = vld [vmem:[#allocation3 + $0x2c] sm:$0xf]
        %v3387 = vld [vmem:[#allocation3 + $0x30] sm:$0xf]
        %v3388 = vld [vmem:[#allocation3 + $0x34] sm:$0xf]
        %v3389 = vld [vmem:[#allocation3 + $0x38] sm:$0xf]
        %v3390 = vld [vmem:[#allocation3 + $0x3c] sm:$0xf]
        %v3391 = vld [vmem:[#allocation3 + $0x40] sm:$0xf]
        %v3392 = vld [vmem:[#allocation3 + $0x44] sm:$0xf]
        %v3393 = vld [vmem:[#allocation3 + $0x48] sm:$0xf]
        %v3394 = vld [vmem:[#allocation3 + $0x4c] sm:$0xf]
        %v3395 = vld [vmem:[#allocation3 + $0x50] sm:$0xf]
        %v3396 = vld [vmem:[#allocation3 + $0x54] sm:$0xf]
        %v3397 = vld [vmem:[#allocation3 + $0x58] sm:$0xf]
        %v3398 = vld [vmem:[#allocation3 + $0x5c] sm:$0xf]
        %v3399 = vld [vmem:[#allocation3 + $0x60] sm:$0xf]
        %v3400 = vld [vmem:[#allocation3 + $0x64] sm:$0xf]
        %v3401 = vld [vmem:[#allocation3 + $0x68] sm:$0xf]
        %v3402 = vld [vmem:[#allocation3 + $0x6c] sm:$0xf]
        %v3403 = vld [vmem:[#allocation3 + $0x70] sm:$0xf]
        %v3404 = vld [vmem:[#allocation3 + $0x74] sm:$0xf]
        %v3405 = vld [vmem:[#allocation3 + $0x78] sm:$0xf]
        %v3406 = vld [vmem:[#allocation3 + $0x7c] sm:$0xf]
        %v3439 = vunpack.c.l.b16 %v3375
        %v3440 = vunpack.c.l.b16 %v3376
        %v3441 = vunpack.c.l.b16 %v3377
        %v3442 = vunpack.c.l.b16 %v3378
        %v3443 = vunpack.c.l.b16 %v3379
        %v3444 = vunpack.c.l.b16 %v3380
        %v3445 = vunpack.c.l.b16 %v3381
        %v3446 = vunpack.c.l.b16 %v3382
        %v3447 = vunpack.c.l.b16 %v3383
        %v3448 = vunpack.c.l.b16 %v3384
        %v3449 = vunpack.c.l.b16 %v3385
        %v3450 = vunpack.c.l.b16 %v3386
        %v3451 = vunpack.c.l.b16 %v3387
        %v3452 = vunpack.c.l.b16 %v3388
        %v3453 = vunpack.c.l.b16 %v3389
        %v3454 = vunpack.c.l.b16 %v3390
        %v3455 = vunpack.c.l.b16 %v3391
        %v3456 = vunpack.c.l.b16 %v3392
        %v3457 = vunpack.c.l.b16 %v3393
        %v3458 = vunpack.c.l.b16 %v3394
        %v3459 = vunpack.c.l.b16 %v3395
        %v3460 = vunpack.c.l.b16 %v3396
        %v3461 = vunpack.c.l.b16 %v3397
        %v3462 = vunpack.c.l.b16 %v3398
        %v3463 = vunpack.c.l.b16 %v3399
        %v3464 = vunpack.c.l.b16 %v3400
        %v3465 = vunpack.c.l.b16 %v3401
        %v3466 = vunpack.c.l.b16 %v3402
        %v3467 = vunpack.c.l.b16 %v3403
        %v3468 = vunpack.c.l.b16 %v3404
        %v3469 = vunpack.c.l.b16 %v3405
        %v3470 = vunpack.c.l.b16 %v3406
        %v3471 = vpack.c.b16 %v3440, %v3439
        %v3472 = vpack.c.b16 %v3442, %v3441
        %v3473 = vpack.c.b16 %v3444, %v3443
        %v3474 = vpack.c.b16 %v3446, %v3445
        %v3475 = vpack.c.b16 %v3448, %v3447
        %v3476 = vpack.c.b16 %v3450, %v3449
        %v3477 = vpack.c.b16 %v3452, %v3451
        %v3478 = vpack.c.b16 %v3454, %v3453
        %v3479 = vpack.c.b16 %v3456, %v3455
        %v3480 = vpack.c.b16 %v3458, %v3457
        %v3481 = vpack.c.b16 %v3460, %v3459
        %v3482 = vpack.c.b16 %v3462, %v3461
        %v3483 = vpack.c.b16 %v3464, %v3463
        %v3484 = vpack.c.b16 %v3466, %v3465
        %v3485 = vpack.c.b16 %v3468, %v3467
        %v3486 = vpack.c.b16 %v3470, %v3469
        %3503 = vmatprep.subr.bf16.mxu0 0
        %3504 = vmatpush1.bf16.msra.mxu0 %v3478
        %3505 = vmatprep.subr.bf16.mxu0 0
        %3506 = vmatpush1.bf16.msra.mxu0 %v3477
        %3507 = vmatprep.subr.bf16.mxu0 0
        %3508 = vmatpush1.bf16.msra.mxu0 %v3476
        %3509 = vmatprep.subr.bf16.mxu0 0
        %3510 = vmatpush1.bf16.msra.mxu0 %v3475
        %3511 = vmatprep.subr.bf16.mxu0 0
        %3512 = vmatpush1.bf16.msra.mxu0 %v3474
        %3513 = vmatprep.subr.bf16.mxu0 0
        %3514 = vmatpush1.bf16.msra.mxu0 %v3473
        %3515 = vmatprep.subr.bf16.mxu0 0
        %3516 = vmatpush1.bf16.msra.mxu0 %v3472
        %3517 = vmatprep.subr.bf16.mxu0 0
        %3518 = vmatpush1.bf16.msra.mxu0 %v3471
        %3519 = vmatprep.subr.bf16.mxu0 0
        %3520 = vmatpush2.bf16.msra.mxu0 %v3486
        %3521 = vmatprep.subr.bf16.mxu0 0
        %3522 = vmatpush2.bf16.msra.mxu0 %v3485
        %3523 = vmatprep.subr.bf16.mxu0 0
        %3524 = vmatpush2.bf16.msra.mxu0 %v3484
        %3525 = vmatprep.subr.bf16.mxu0 0
        %3526 = vmatpush2.bf16.msra.mxu0 %v3483
        %3527 = vmatprep.subr.bf16.mxu0 0
        %3528 = vmatpush2.bf16.msra.mxu0 %v3482
        %3529 = vmatprep.subr.bf16.mxu0 0
        %3530 = vmatpush2.bf16.msra.mxu0 %v3481
        %3531 = vmatprep.subr.bf16.mxu0 0
        %3532 = vmatpush2.bf16.msra.mxu0 %v3480
        %3533 = vmatprep.subr.bf16.mxu0 0
        %3534 = vmatpush2.bf16.msra.mxu0 %v3479
        %3535 = vmatprep.mubr.bf16.mxu0 %v3360
        %3536 = vmatmul.mubr.bf16.gmra.mxu0 %v3359
        %v3537 = vpop.f32.mrf.mxu0
        %v3538 = vadd.f32 0.0, %v3537
        %v3539 = vpop.f32.mrf.mxu0
        %v3540 = vpop.f32.mrf.mxu0
        %v3541 = vadd.f32 0.0, %v3540
        %v3542 = vpop.f32.mrf.mxu0
        %3543 = vmatprep.mubr.bf16.mxu0 %v3362
        %3544 = vmatmul.mubr.bf16.gmra.mxu0 %v3361
        %v3545 = vpop.f32.mrf.mxu0
        %v3546 = vadd.f32 0.0, %v3545
        %v3547 = vpop.f32.mrf.mxu0
        %v3548 = vpop.f32.mrf.mxu0
        %v3549 = vadd.f32 0.0, %v3548
        %v3550 = vpop.f32.mrf.mxu0
        %3551 = vmatprep.mubr.bf16.mxu0 %v3364
        %3552 = vmatmul.mubr.bf16.gmra.mxu0 %v3363
        %v3553 = vpop.f32.mrf.mxu0
        %v3554 = vadd.f32 0.0, %v3553
        %v3555 = vpop.f32.mrf.mxu0
        %v3556 = vpop.f32.mrf.mxu0
        %v3557 = vadd.f32 0.0, %v3556
        %v3558 = vpop.f32.mrf.mxu0
        %3559 = vmatprep.mubr.bf16.mxu0 %v3366
        %3560 = vmatmul.mubr.bf16.gmra.mxu0 %v3365
        %v3561 = vpop.f32.mrf.mxu0
        %v3562 = vadd.f32 0.0, %v3561
        %v3563 = vpop.f32.mrf.mxu0
        %v3564 = vpop.f32.mrf.mxu0
        %v3565 = vadd.f32 0.0, %v3564
        %v3566 = vpop.f32.mrf.mxu0
        %3567 = vmatprep.mubr.bf16.mxu0 %v3368
        %3568 = vmatmul.mubr.bf16.gmra.mxu0 %v3367
        %v3569 = vpop.f32.mrf.mxu0
        %v3570 = vadd.f32 0.0, %v3569
        %v3571 = vpop.f32.mrf.mxu0
        %v3572 = vpop.f32.mrf.mxu0
        %v3573 = vadd.f32 0.0, %v3572
        %v3574 = vpop.f32.mrf.mxu0
        %3575 = vmatprep.mubr.bf16.mxu0 %v3370
        %3576 = vmatmul.mubr.bf16.gmra.mxu0 %v3369
        %v3577 = vpop.f32.mrf.mxu0
        %v3578 = vadd.f32 0.0, %v3577
        %v3579 = vpop.f32.mrf.mxu0
        %v3580 = vpop.f32.mrf.mxu0
        %v3581 = vadd.f32 0.0, %v3580
        %v3582 = vpop.f32.mrf.mxu0
        %3583 = vmatprep.mubr.bf16.mxu0 %v3372
        %3584 = vmatmul.mubr.bf16.gmra.mxu0 %v3371
        %v3585 = vpop.f32.mrf.mxu0
        %v3586 = vadd.f32 0.0, %v3585
        %v3587 = vpop.f32.mrf.mxu0
        %v3588 = vpop.f32.mrf.mxu0
        %v3589 = vadd.f32 0.0, %v3588
        %v3590 = vpop.f32.mrf.mxu0
        %3591 = vmatprep.mubr.bf16.mxu0 %v3374
        %3592 = vmatmul.mubr.bf16.gmra.mxu0 %v3373
        %v3593 = vpop.f32.mrf.mxu0
        %v3594 = vadd.f32 0.0, %v3593
        %v3595 = vpop.f32.mrf.mxu0
        %v3596 = vpop.f32.mrf.mxu0
        %v3597 = vadd.f32 0.0, %v3596
        %v3598 = vpop.f32.mrf.mxu0
        %3599 = vdwg.mxu0
        %v3600 = vpack.c.bf16 %v3541, %v3538
        %v3601 = vpack.c.bf16 %v3549, %v3546
        %v3602 = vpack.c.bf16 %v3557, %v3554
        %v3603 = vpack.c.bf16 %v3565, %v3562
        %v3604 = vpack.c.bf16 %v3573, %v3570
        %v3605 = vpack.c.bf16 %v3581, %v3578
        %v3606 = vpack.c.bf16 %v3589, %v3586
        %v3607 = vpack.c.bf16 %v3597, %v3594
        %v3608 = vld [vmem:[#allocation15] sm:$0xf]
        %v3609 = vld [vmem:[#allocation15 + $0x4] sm:$0xf]
        %v3610 = vld [vmem:[#allocation15 + $0x8] sm:$0xf]
        %v3611 = vld [vmem:[#allocation15 + $0xc] sm:$0xf]
        %v3612 = vld [vmem:[#allocation15 + $0x10] sm:$0xf]
        %v3613 = vld [vmem:[#allocation15 + $0x14] sm:$0xf]
        %v3614 = vld [vmem:[#allocation15 + $0x18] sm:$0xf]
        %v3615 = vld [vmem:[#allocation15 + $0x1c] sm:$0xf]
        %v3616 = vld [vmem:[#allocation15 + $0x20] sm:$0xf]
        %v3617 = vld [vmem:[#allocation15 + $0x24] sm:$0xf]
        %v3618 = vld [vmem:[#allocation15 + $0x28] sm:$0xf]
        %v3619 = vld [vmem:[#allocation15 + $0x2c] sm:$0xf]
        %v3620 = vld [vmem:[#allocation15 + $0x30] sm:$0xf]
        %v3621 = vld [vmem:[#allocation15 + $0x34] sm:$0xf]
        %v3622 = vld [vmem:[#allocation15 + $0x38] sm:$0xf]
        %v3623 = vld [vmem:[#allocation15 + $0x3c] sm:$0xf]
        %v3624 = vld [vmem:[%s13] sm:$0x1]
        %v3626 = vlaneseq
        %v3627 = vshrl.u32 %v3626, 7
        %v3628 = vsub.s32 0, %v3627
        %v3629 = vrot.slane %v3624, %v3628
        %v3647 = vunpack.c.l.b16 %v3608
        %v3648 = vunpack.c.l.b16 %v3609
        %v3649 = vunpack.c.l.b16 %v3610
        %v3650 = vunpack.c.l.b16 %v3611
        %v3651 = vunpack.c.l.b16 %v3612
        %v3652 = vunpack.c.l.b16 %v3613
        %v3653 = vunpack.c.l.b16 %v3614
        %v3654 = vunpack.c.l.b16 %v3615
        %v3655 = vunpack.c.l.b16 %v3616
        %v3656 = vunpack.c.l.b16 %v3617
        %v3657 = vunpack.c.l.b16 %v3618
        %v3658 = vunpack.c.l.b16 %v3619
        %v3659 = vunpack.c.l.b16 %v3620
        %v3660 = vunpack.c.l.b16 %v3621
        %v3661 = vunpack.c.l.b16 %v3622
        %v3662 = vunpack.c.l.b16 %v3623
        %v3663 = vpack.c.b16 %v3648, %v3647
        %v3664 = vpack.c.b16 %v3650, %v3649
        %v3665 = vpack.c.b16 %v3652, %v3651
        %v3666 = vpack.c.b16 %v3654, %v3653
        %v3667 = vpack.c.b16 %v3656, %v3655
        %v3668 = vpack.c.b16 %v3658, %v3657
        %v3669 = vpack.c.b16 %v3660, %v3659
        %v3670 = vpack.c.b16 %v3662, %v3661
        %3679 = vmatprep.subr.bf16.mxu0 0
        %3680 = vmatpush1.bf16.msra.mxu0 %v3670
        %3681 = vmatprep.subr.bf16.mxu0 0
        %3682 = vmatpush1.bf16.msra.mxu0 %v3669
        %3683 = vmatprep.subr.bf16.mxu0 0
        %3684 = vmatpush1.bf16.msra.mxu0 %v3668
        %3685 = vmatprep.subr.bf16.mxu0 0
        %3686 = vmatpush1.bf16.msra.mxu0 %v3667
        %3687 = vmatprep.subr.bf16.mxu0 0
        %3688 = vmatpush1.bf16.msra.mxu0 %v3666
        %3689 = vmatprep.subr.bf16.mxu0 0
        %3690 = vmatpush1.bf16.msra.mxu0 %v3665
        %3691 = vmatprep.subr.bf16.mxu0 0
        %3692 = vmatpush1.bf16.msra.mxu0 %v3664
        %3693 = vmatprep.subr.bf16.mxu0 0
        %3694 = vmatpush1.bf16.msra.mxu0 %v3663
        %3695 = vmatprep.subr.bf16.mxu0 0
        %3696 = vmatpush2.bf16.msra.mxu0 0
        %3697 = vmatprep.subr.bf16.mxu0 0
        %3698 = vmatpush2.bf16.msra.mxu0 0
        %3699 = vmatprep.subr.bf16.mxu0 0
        %3700 = vmatpush2.bf16.msra.mxu0 0
        %3701 = vmatprep.subr.bf16.mxu0 0
        %3702 = vmatpush2.bf16.msra.mxu0 0
        %3703 = vmatprep.subr.bf16.mxu0 0
        %3704 = vmatpush2.bf16.msra.mxu0 0
        %3705 = vmatprep.subr.bf16.mxu0 0
        %3706 = vmatpush2.bf16.msra.mxu0 0
        %3707 = vmatprep.subr.bf16.mxu0 0
        %3708 = vmatpush2.bf16.msra.mxu0 0
        %3709 = vmatprep.subr.bf16.mxu0 0
        %3710 = vmatpush2.bf16.msra.mxu0 0
        %3711 = vmatprep.mubr.bf16.mxu0 0
        %3712 = vmatmul.mubr.bf16.gmra.mxu0 %v3600
        %v3713 = vpop.f32.mrf.mxu0
        %v3714 = vadd.f32 %v3629, %v3713
        %v3715 = vpop.f32.mrf.mxu0
        %v3716 = vpop.f32.mrf.mxu0
        %v3717 = vadd.f32 %v3629, %v3716
        %v3718 = vpop.f32.mrf.mxu0
        %3719 = vmatprep.mubr.bf16.mxu0 0
        %3720 = vmatmul.mubr.bf16.gmra.mxu0 %v3601
        %v3721 = vpop.f32.mrf.mxu0
        %v3722 = vadd.f32 %v3629, %v3721
        %v3723 = vpop.f32.mrf.mxu0
        %v3724 = vpop.f32.mrf.mxu0
        %v3725 = vadd.f32 %v3629, %v3724
        %v3726 = vpop.f32.mrf.mxu0
        %3727 = vmatprep.mubr.bf16.mxu0 0
        %3728 = vmatmul.mubr.bf16.gmra.mxu0 %v3602
        %v3729 = vpop.f32.mrf.mxu0
        %v3730 = vadd.f32 %v3629, %v3729
        %v3731 = vpop.f32.mrf.mxu0
        %v3732 = vpop.f32.mrf.mxu0
        %v3733 = vadd.f32 %v3629, %v3732
        %v3734 = vpop.f32.mrf.mxu0
        %3735 = vmatprep.mubr.bf16.mxu0 0
        %3736 = vmatmul.mubr.bf16.gmra.mxu0 %v3603
        %v3737 = vpop.f32.mrf.mxu0
        %v3738 = vadd.f32 %v3629, %v3737
        %v3739 = vpop.f32.mrf.mxu0
        %v3740 = vpop.f32.mrf.mxu0
        %v3741 = vadd.f32 %v3629, %v3740
        %v3742 = vpop.f32.mrf.mxu0
        %3743 = vmatprep.mubr.bf16.mxu0 0
        %3744 = vmatmul.mubr.bf16.gmra.mxu0 %v3604
        %v3745 = vpop.f32.mrf.mxu0
        %v3746 = vadd.f32 %v3629, %v3745
        %v3747 = vpop.f32.mrf.mxu0
        %v3748 = vpop.f32.mrf.mxu0
        %v3749 = vadd.f32 %v3629, %v3748
        %v3750 = vpop.f32.mrf.mxu0
        %3751 = vmatprep.mubr.bf16.mxu0 0
        %3752 = vmatmul.mubr.bf16.gmra.mxu0 %v3605
        %v3753 = vpop.f32.mrf.mxu0
        %v3754 = vadd.f32 %v3629, %v3753
        %v3755 = vpop.f32.mrf.mxu0
        %v3756 = vpop.f32.mrf.mxu0
        %v3757 = vadd.f32 %v3629, %v3756
        %v3758 = vpop.f32.mrf.mxu0
        %3759 = vmatprep.mubr.bf16.mxu0 0
        %3760 = vmatmul.mubr.bf16.gmra.mxu0 %v3606
        %v3761 = vpop.f32.mrf.mxu0
        %v3762 = vadd.f32 %v3629, %v3761
        %v3763 = vpop.f32.mrf.mxu0
        %v3764 = vpop.f32.mrf.mxu0
        %v3765 = vadd.f32 %v3629, %v3764
        %v3766 = vpop.f32.mrf.mxu0
        %3767 = vmatprep.mubr.bf16.mxu0 0
        %3768 = vmatmul.mubr.bf16.gmra.mxu0 %v3607
        %v3769 = vpop.f32.mrf.mxu0
        %v3770 = vadd.f32 %v3629, %v3769
        %v3771 = vpop.f32.mrf.mxu0
        %v3772 = vpop.f32.mrf.mxu0
        %v3773 = vadd.f32 %v3629, %v3772
        %v3774 = vpop.f32.mrf.mxu0
        %3775 = vdwg.mxu0
        %3776 = vst [vmem:[%s678] sm:$0xff] %v3714
        %3777 = vst [vmem:[%s678 + $0x8] sm:$0xff] %v3717
        %3778 = vst [vmem:[%s678 + $0x10] sm:$0xff] %v3722
        %3779 = vst [vmem:[%s678 + $0x18] sm:$0xff] %v3725
        %3780 = vst [vmem:[%s678 + $0x20] sm:$0xff] %v3730
        %3781 = vst [vmem:[%s678 + $0x28] sm:$0xff] %v3733
        %3782 = vst [vmem:[%s678 + $0x30] sm:$0xff] %v3738
        %3783 = vst [vmem:[%s678 + $0x38] sm:$0xff] %v3741
        %3784 = vst [vmem:[%s678 + $0x40] sm:$0xff] %v3746
        %3785 = vst [vmem:[%s678 + $0x48] sm:$0xff] %v3749
        %3786 = vst [vmem:[%s678 + $0x50] sm:$0xff] %v3754
        %3787 = vst [vmem:[%s678 + $0x58] sm:$0xff] %v3757
        %3788 = vst [vmem:[%s678 + $0x60] sm:$0xff] %v3762
        %3789 = vst [vmem:[%s678 + $0x68] sm:$0xff] %v3765
        %3790 = vst [vmem:[%s678 + $0x70] sm:$0xff] %v3770
        %3791 = vst [vmem:[%s678 + $0x78] sm:$0xff] %v3773
        %s3792 = sand.u32 %s374, 1
        %s3793 = scalar_lea.sflag [#allocation6], %s3792
        %s3794 = sand.u32 %s374, 1
        %s3795 = smul.addr %s3794, 256
        %s3796 = scalar_lea.vmem [#allocation16], %s3795
        %s3797 = sand.u32 %s402, 1
        %s3798 = scalar_lea.sflag [#allocation18], %s3797
        %s3799 = sand.u32 %s402, 1
        %s3800 = smul.addr %s3799, 128
        %s3801 = scalar_lea.vmem [#allocation17], %s3800
        // Predicated region
        $region109: #{tpu_custom_call.1} parent=75 // pred_check
          %p3802 = pneg %p384
        $region110: #{tpu_custom_call.1} parent=75 // pred_check_branch
          %3804 = sbr.rel (%p3802) target = $region112
        $region111: #{tpu_custom_call.1} parent=75 // pred_region
          %s3805 = smul.u32 16, %s46
          %s3807 = ssub.s32 4096, 4096
          %3808 = vsyncadd %s3793, %s3807
          %s3809 = smul.addr %s3805, 2
          %s3810 = smul.addr %s45, 64
          %s3811 = sadd.s32 %s3809, %s3810
          %s3812 = smul.addr %s3811, 128
          %s3813 = scalar_lea.hbm %s14, %s3812
          %s3814 = sshll.u32 %s3796, 4
          %s3815 = int_to_ptr.vmem [resolvable:$true] %s3814
          %3820 = dma.vmem_to_hbm [thread:$0]  %s3815, 4096, %s3813, %s3793, 256, 256, 16
        $region112: #{tpu_custom_call.1} parent=75 // pred_fallthru
          _
        // Predicated region
        $region113: #{tpu_custom_call.1} parent=75 // pred_check
          %p3821 = pneg %p412
        $region114: #{tpu_custom_call.1} parent=75 // pred_check_branch
          %3823 = sbr.rel (%p3821) target = $region116
        $region115: #{tpu_custom_call.1} parent=75 // pred_region
          %s3824 = smul.u32 16, %s46
          %s3826 = ssub.s32 2048, 2048
          %3827 = vsyncadd %s3798, %s3826
          %s3828 = smul.addr %s45, 32
          %s3829 = sadd.s32 %s3824, %s3828
          %s3830 = smul.addr %s3829, 128
          %s3831 = scalar_lea.hbm %s15, %s3830
          %s3832 = sshll.u32 %s3801, 4
          %s3833 = int_to_ptr.vmem [resolvable:$true] %s3832
          %3838 = dma.vmem_to_hbm [thread:$0]  %s3833, 2048, %s3831, %s3798, 128, 128, 8
        $region116: #{tpu_custom_call.1} parent=75 // pred_fallthru
          _
      $region76: #{tpu_custom_call.1} parent=5 // pred_fallthru
        _
      %p3839 = scmp.le.s32.totalorder 2, %s36
      // Predicated region
      $region117: #{tpu_custom_call.1} parent=5 // pred_check
        %p3840 = pneg %p3839
      $region118: #{tpu_custom_call.1} parent=5 // pred_check_branch
        %3842 = sbr.rel (%p3840) target = $region120
      $region119: #{tpu_custom_call.1} parent=5 // pred_region
        %s3843 = ssub.s32 %s36, 2
        // Predicated region
        $region121: #{tpu_custom_call.1} parent=119 // pred_check
          %p3844 = pneg %p390
        $region122: #{tpu_custom_call.1} parent=119 // pred_check_branch
          %3846 = sbr.rel (%p3844) target = $region124
        $region123: #{tpu_custom_call.1} parent=119 // pred_region
          %s3847 = sand.u32 %s375, 1
          %s3848 = scalar_lea.sflag [#allocation6], %s3847
          %s3849 = sand.u32 %s375, 1
          %s3850 = smul.addr %s3849, 256
          %s3851 = scalar_lea.vmem [#allocation16], %s3850
          %3852 = dma.done %s3848, 4096
        $region124: #{tpu_custom_call.1} parent=119 // pred_fallthru
          _
        // Predicated region
        $region125: #{tpu_custom_call.1} parent=119 // pred_check
          %p3853 = pneg %p418
        $region126: #{tpu_custom_call.1} parent=119 // pred_check_branch
          %3855 = sbr.rel (%p3853) target = $region128
        $region127: #{tpu_custom_call.1} parent=119 // pred_region
          %s3856 = sand.u32 %s403, 1
          %s3857 = scalar_lea.sflag [#allocation18], %s3856
          %s3858 = sand.u32 %s403, 1
          %s3859 = smul.addr %s3858, 128
          %s3860 = scalar_lea.vmem [#allocation17], %s3859
          %3861 = dma.done %s3857, 2048
        $region128: #{tpu_custom_call.1} parent=119 // pred_fallthru
          _
      $region120: #{tpu_custom_call.1} parent=5 // pred_fallthru
        _
    $region6: #{tpu_custom_call.1} parent=1 // loop_footer
      %s40 = sadd.s32 1, %s36
    $region7: #{tpu_custom_call.1} parent=1 // loop_footer_branch
      %35 = sbr.rel target = $region3
    $region8: #{tpu_custom_call.1} parent=1 // loop_exit
      _
    %3862 = vsyncpa [#allocation5], 1
    %s3863 = scalar_lea.sflag [#allocation5], 1
    %3864 = vsyncpa %s3863, 1
    %3865 = vsyncpa [#allocation8], 1
    %s3866 = scalar_lea.sflag [#allocation8], 1
    %3867 = vsyncpa %s3866, 1
    %3868 = vsyncpa [#allocation11], 1
    %3869 = vsyncpa [#allocation14], 1
    %3870 = vsyncpa [#allocation6], 1
    %s3871 = scalar_lea.sflag [#allocation6], 1
    %3872 = vsyncpa %s3871, 1
    %3873 = vsyncpa [#allocation18], 1
    %s3874 = scalar_lea.sflag [#allocation18], 1
    %3875 = vsyncpa %s3874, 1

</llo_original>
